<compile_context>
chip_gen: v5e
topology: v5e:2x2
jax: 0.10.0
libtpu: 0.0.40
codegen_flags: <defaults>
</compile_context>

<pallas_src>
import functools

import jax
import jax.numpy as jnp
from jax.experimental import pallas as pl
from jax.experimental.pallas import tpu as pltpu


# ------------------------------ fused kernel --------------------------------

def _fnet_fused_kernel(
    feat_ref, wio_ref, wir_ref,
    w_obj1_ref, b_obj1_ref, w_obj2_ref, b_obj2_ref,
    shift_ref, w_c1_ref, b_c1_ref, w_c2_ref, b_c2_ref, m_pool_ref,
    adj_or_ref, adj_ro_ref, w_r2o_ref, b_r2o_ref, w_o2r_ref, b_o2r_ref,
    sel_sub_ref, sel_obj_ref, sel_reg_ref,
    fw_sub_ref, fw_obj_ref, fw_reg_ref, fuse_b_ref,
    w_so_ref, b_so_ref, w_bb_ref, b_bb_ref, w_sp_ref, b_sp_ref,
    cls_obj_ref, bbox_ref, cls_pred_ref,
):
    f32 = jnp.float32

    def mxdot(a, b):
        # bf16 operands for the MXU, f32 accumulate (elementwise math stays f32).
        return jnp.dot(a.astype(jnp.bfloat16), b.astype(jnp.bfloat16),
                       preferred_element_type=f32)

    def softmax_rows(y):
        m = jnp.max(y, axis=-1, keepdims=True)
        e = jnp.exp(y - m)
        return e * pl.reciprocal(jnp.sum(e, axis=-1, keepdims=True), approx=True)

    feat = feat_ref[...]                                     # (HW, C)

    # ---- object path: ROI-align-as-matmul + fc_obj MLP ----------------------
    pp, _, dho = w_obj1_ref.shape
    n_obj = adj_or_ref.shape[0]
    pooled_obj = mxdot(wio_ref[...], feat)                   # (PP*No, C), pos-major
    h = jnp.zeros((n_obj, dho), f32)
    for pos in range(pp):                                    # fc_obj layer 1, per bin
        h = h + mxdot(pooled_obj[pos * n_obj:(pos + 1) * n_obj, :], w_obj1_ref[pos])
    h = jnp.maximum(h + b_obj1_ref[...], 0.0)                # GroupDropout = id (eval)
    obj_feat = mxdot(h, w_obj2_ref[...]) + b_obj2_ref[...]   # (No, dho)

    # bbox head uses the PRE-MPS object features (matches reference ordering).
    bbox_ref[...] = mxdot(jnp.maximum(obj_feat, 0.0), w_bb_ref[...]) + b_bb_ref[...]

    # ---- region path: ROI pooling + conv3x3 -> relu -> conv3x3 -> mean ------
    x = mxdot(wir_ref[...], feat)                            # (Nr*PP, C), roi-major
    n_taps = shift_ref.shape[0]
    dhr = w_c1_ref.shape[2]
    y1 = jnp.zeros((x.shape[0], dhr), f32)
    for t in range(n_taps):                                  # conv1 = 9 shifted dots
        y1 = y1 + mxdot(shift_ref[t], mxdot(x, w_c1_ref[t]))
    y1 = jnp.maximum(y1 + b_c1_ref[...], 0.0)
    y2 = jnp.zeros((x.shape[0], dhr), f32)
    for t in range(n_taps):                                  # conv2 (no relu after)
        y2 = y2 + mxdot(shift_ref[t], mxdot(y1, w_c2_ref[t]))
    y2 = y2 + b_c2_ref[...]
    reg_vec = mxdot(m_pool_ref[...], y2)                     # (Nr, dhr) spatial mean

    # ---- one factor_updating_structure (MPS) pass ----------------------------
    # TODO(synk): the original MPS uses attention-gated spatial messages; a
    # degree-normalized mean-pooled message-passing update is used here.
    msg_to_obj = mxdot(adj_or_ref[...], reg_vec)             # (No, dhr)
    obj_feat = obj_feat + jnp.maximum(
        mxdot(msg_to_obj, w_r2o_ref[...]) + b_r2o_ref[...], 0.0)
    msg_to_reg = mxdot(adj_ro_ref[...], obj_feat)            # (Nr, dho)
    reg_upd = jnp.maximum(mxdot(msg_to_reg, w_o2r_ref[...]) + b_o2r_ref[...], 0.0)
    # Spatial-broadcast of reg_upd followed by the spatial mean collapses
    # exactly to reg_vec + reg_upd, so the broadcast is never materialized.
    reg_vec2 = reg_vec + reg_upd

    # ---- phrase fusion (concat+linear expressed as split-weight dots) -------
    # TODO(synk): fusion_inference variant is config-selected in the reference;
    # a basic concat+linear fusion over (subject, object, region) is used.
    phrase = (mxdot(mxdot(sel_sub_ref[...], obj_feat), fw_sub_ref[...])
              + mxdot(mxdot(sel_obj_ref[...], obj_feat), fw_obj_ref[...])
              + mxdot(mxdot(sel_reg_ref[...], reg_vec2), fw_reg_ref[...])
              + fuse_b_ref[...])                             # (Np, dhp)

    # ---- heads: relu -> linear -> softmax, lane-dense 128-wide outputs ------
    obj_relu = jnp.maximum(obj_feat, 0.0)
    cls_obj_ref[...] = softmax_rows(mxdot(obj_relu, w_so_ref[...]) + b_so_ref[...])
    phr_relu = jnp.maximum(phrase, 0.0)
    cls_pred_ref[...] = softmax_rows(mxdot(phr_relu, w_sp_ref[...]) + b_sp_ref[...])


# ------------------------------- glue helpers --------------------------------

def _round_up(n, m):
    return ((n + m - 1) // m) * m


def _roi_interp_matrix(rois, hf, wf, pool, scale):
    # Bilinear interpolation matrix W with W[n, bin, h*Wf+w] such that
    # (W @ feat_flat) reproduces one bilinear sample per bin center.
    # TODO(synk): ROIAlign(sampling_ratio=0) uses an adaptive sampling grid per
    # bin; approximated here with one bilinear sample at each bin center.
    x1 = rois[:, 1] * scale
    y1 = rois[:, 2] * scale
    x2 = rois[:, 3] * scale
    y2 = rois[:, 4] * scale
    rw = jnp.maximum(x2 - x1, 1.0)
    rh = jnp.maximum(y2 - y1, 1.0)
    t = (jnp.arange(pool, dtype=jnp.float32) + 0.5) / pool
    cx = jnp.clip(x1[:, None] + t[None, :] * rw[:, None], 0.0, wf - 1.0)  # (N, P)
    cy = jnp.clip(y1[:, None] + t[None, :] * rh[:, None], 0.0, hf - 1.0)  # (N, P)
    x0 = jnp.floor(cx).astype(jnp.int32)
    y0 = jnp.floor(cy).astype(jnp.int32)
    x1i = jnp.minimum(x0 + 1, wf - 1)
    y1i = jnp.minimum(y0 + 1, hf - 1)
    lx = cx - x0
    ly = cy - y0
    wx = (jax.nn.one_hot(x0, wf, dtype=jnp.float32) * (1.0 - lx)[..., None]
          + jax.nn.one_hot(x1i, wf, dtype=jnp.float32) * lx[..., None])   # (N, P, Wf)
    wy = (jax.nn.one_hot(y0, hf, dtype=jnp.float32) * (1.0 - ly)[..., None]
          + jax.nn.one_hot(y1i, hf, dtype=jnp.float32) * ly[..., None])   # (N, P, Hf)
    w = wy[:, :, None, :, None] * wx[:, None, :, None, :]                 # (N,P,P,Hf,Wf)
    return w.reshape(rois.shape[0], pool * pool, hf * wf)


def _conv_shift_mats(n, pool):
    # S[t] maps flat (roi, i, j) rows to the tap-(dh,dw) shifted source rows of
    # a zero-padded 3x3 conv: (S[t] @ x) @ W[t] summed over t == conv3x3(x).
    pp = pool * pool
    eye_n = jnp.eye(n, dtype=jnp.float32)
    ii = jnp.arange(pool)
    mats = []
    for dh in range(3):
        ri = jax.nn.one_hot(ii + (dh - 1), pool, dtype=jnp.float32)  # OOB -> zero row
        for dw in range(3):
            rj = jax.nn.one_hot(ii + (dw - 1), pool, dtype=jnp.float32)
            spatial = jnp.einsum("ia,jb->ijab", ri, rj).reshape(pp, pp)
            mats.append(jnp.kron(eye_n, spatial))
    return jnp.stack(mats, axis=0)                                    # (9, n*pp, n*pp)


# ------------------------------- parameters ----------------------------------

def init_params(key, cfg):
    ks = jax.random.split(key, 10)
    P, C = cfg["pool_size"], cfg["c_feat"]
    dho, dhr, dhp = cfg["dim_ho"], cfg["dim_hr"], cfg["dim_hp"]
    nobj, npred = cfg["n_classes_obj"], cfg["n_classes_pred"]

    def nrm(k, shape, std):
        return std * jax.random.normal(k, shape, jnp.float32)

    k_in = C * P * P
    p = {
        # fc_obj (kaiming-style init in the reference)
        "fc_obj_w1": nrm(ks[0], (k_in, dho), (2.0 / k_in) ** 0.5),
        "fc_obj_b1": jnp.zeros((dho,), jnp.float32),
        "fc_obj_w2": nrm(ks[1], (dho, dho), (2.0 / dho) ** 0.5),
        "fc_obj_b2": jnp.zeros((dho,), jnp.float32),
        # fc_region: two 3x3 convs (tap-major / Cin-minor layout)
        "fc_reg_w1": nrm(ks[2], (9 * C, dhr), (2.0 / (9 * C)) ** 0.5),
        "fc_reg_b1": jnp.zeros((dhr,), jnp.float32),
        "fc_reg_w2": nrm(ks[3], (9 * dhr, dhr), (2.0 / (9 * dhr)) ** 0.5),
        "fc_reg_b2": jnp.zeros((dhr,), jnp.float32),
        # factor_updating_structure (normal init, std 0.01 in reference)
        "mps_w_r2o": nrm(ks[4], (dhr, dho), 0.01),
        "mps_b_r2o": jnp.zeros((dho,), jnp.float32),
        "mps_w_o2r": nrm(ks[5], (dho, dhr), 0.01),
        "mps_b_o2r": jnp.zeros((dhr,), jnp.float32),
        # phrase fusion (concat of subject/object/region features -> dim_hp)
        "fuse_w": nrm(ks[6], (2 * dho + dhr, dhp), 0.01),
        "fuse_b": jnp.zeros((dhp,), jnp.float32),
        # heads
        "score_obj_w": nrm(ks[7], (dho, nobj), 0.01),
        "score_obj_b": jnp.zeros((nobj,), jnp.float32),
        "bbox_obj_w": nrm(ks[8], (dho, nobj * 4), 0.005),
        "bbox_obj_b": jnp.zeros((nobj * 4,), jnp.float32),
        "score_pred_w": nrm(ks[9], (dhp, npred), 0.01),
        "score_pred_b": jnp.zeros((npred,), jnp.float32),
    }
    return p


# --------------------------------- forward -----------------------------------

def factorizable_network_forward_eval(params, features, object_rois, region_rois,
                                      mat_object, mat_region, mat_phrase, cfg):
    P, scale = cfg["pool_size"], cfg["spatial_scale"]
    C, dho, dhr, dhp = cfg["c_feat"], cfg["dim_ho"], cfg["dim_hr"], cfg["dim_hp"]
    nobj_cls, npred_cls = cfg["n_classes_obj"], cfg["n_classes_pred"]
    PP = P * P
    hf, wf, _ = features.shape
    HW = hf * wf
    n_obj = object_rois.shape[0]
    n_reg = region_rois.shape[0]
    n_phr = mat_phrase.shape[0]
    nrpp = n_reg * PP

    feat_flat = features.reshape(HW, C)

    # ROI-align as interpolation matmuls (matrix built in glue, applied in-kernel).
    w_obj_i = _roi_interp_matrix(object_rois, hf, wf, P, scale)        # (No, PP, HW)
    wio = jnp.transpose(w_obj_i, (1, 0, 2)).reshape(PP * n_obj, HW)    # pos-major
    w_reg_i = _roi_interp_matrix(region_rois, hf, wf, P, scale)        # (Nr, PP, HW)
    wir = w_reg_i.reshape(nrpp, HW)                                    # roi-major

    shift_mats = _conv_shift_mats(n_reg, P)                            # (9, Nr*PP, Nr*PP)
    m_pool = jnp.kron(jnp.eye(n_reg, dtype=jnp.float32),
                      jnp.full((1, PP), 1.0 / PP, jnp.float32))        # (Nr, Nr*PP)

    adj_or = mat_object.astype(jnp.float32)
    adj_or = adj_or / jnp.maximum(adj_or.sum(axis=1, keepdims=True), 1.0)
    adj_ro = mat_region.astype(jnp.float32)
    adj_ro = adj_ro / jnp.maximum(adj_ro.sum(axis=1, keepdims=True), 1.0)

    sel_sub = jax.nn.one_hot(mat_phrase[:, 0], n_obj, dtype=jnp.float32)
    sel_obj = jax.nn.one_hot(mat_phrase[:, 1], n_obj, dtype=jnp.float32)
    sel_reg = jax.nn.one_hot(mat_phrase[:, 2], n_reg, dtype=jnp.float32)

    fuse_w = params["fuse_w"]
    fw_sub, fw_obj, fw_reg = fuse_w[:dho], fuse_w[dho:2 * dho], fuse_w[2 * dho:]

    def pad_head(w, b, pad_bias):
        n = w.shape[1]
        padded = _round_up(n, 128)                    # lane-dense output stores
        wp = jnp.pad(w, ((0, 0), (0, padded - n)))
        bp = jnp.pad(b, (0, padded - n), constant_values=pad_bias).reshape(1, padded)
        return wp, bp, padded

    # -1e30 pad bias => exp underflows to 0, so softmax over real classes is exact.
    w_so, b_so, pad_so = pad_head(params["score_obj_w"], params["score_obj_b"], -1e30)
    w_bb, b_bb, pad_bb = pad_head(params["bbox_obj_w"], params["bbox_obj_b"], 0.0)
    w_sp, b_sp, pad_sp = pad_head(params["score_pred_w"], params["score_pred_b"], -1e30)

    inputs = [
        feat_flat, wio, wir,
        params["fc_obj_w1"].reshape(PP, C, dho), params["fc_obj_b1"].reshape(1, dho),
        params["fc_obj_w2"], params["fc_obj_b2"].reshape(1, dho),
        shift_mats,
        params["fc_reg_w1"].reshape(9, C, dhr), params["fc_reg_b1"].reshape(1, dhr),
        params["fc_reg_w2"].reshape(9, dhr, dhr), params["fc_reg_b2"].reshape(1, dhr),
        m_pool, adj_or, adj_ro,
        params["mps_w_r2o"], params["mps_b_r2o"].reshape(1, dho),
        params["mps_w_o2r"], params["mps_b_o2r"].reshape(1, dhr),
        sel_sub, sel_obj, sel_reg,
        fw_sub, fw_obj, fw_reg, params["fuse_b"].reshape(1, dhp),
        w_so, b_so, w_bb, b_bb, w_sp, b_sp,
    ]

    flops = 2 * (
        PP * n_obj * HW * C + nrpp * HW * C                       # ROI pooling matmuls
        + PP * n_obj * C * dho + n_obj * dho * dho                # fc_obj
        + 9 * (nrpp * C * dhr + nrpp * nrpp * dhr)                # conv1
        + 9 * (nrpp * dhr * dhr + nrpp * nrpp * dhr)              # conv2
        + n_reg * nrpp * dhr                                      # spatial mean
        + n_obj * n_reg * dhr + n_obj * dhr * dho                 # MPS r->o
        + n_reg * n_obj * dho + n_reg * dho * dhr                 # MPS o->r
        + 2 * n_phr * n_obj * dho + n_phr * n_reg * dhr           # phrase selects
        + 2 * n_phr * dho * dhp + n_phr * dhr * dhp               # phrase fusion
        + n_obj * dho * (pad_so + pad_bb) + n_phr * dhp * pad_sp  # heads
    )
    transcendentals = n_obj * pad_so + n_phr * pad_sp
    bytes_accessed = 4 * (sum(int(x.size) for x in inputs)
                          + n_obj * (pad_so + pad_bb) + n_phr * pad_sp)

    vmem = pl.BlockSpec(memory_space=pltpu.MemorySpace.VMEM)
    cls_obj_pad, bbox_pad, cls_pred_pad = pl.pallas_call(
        _fnet_fused_kernel,
        out_shape=(
            jax.ShapeDtypeStruct((n_obj, pad_so), jnp.float32),
            jax.ShapeDtypeStruct((n_obj, pad_bb), jnp.float32),
            jax.ShapeDtypeStruct((n_phr, pad_sp), jnp.float32),
        ),
        in_specs=[vmem] * len(inputs),
        out_specs=(vmem, vmem, vmem),
        cost_estimate=pl.CostEstimate(flops=int(flops),
                                      transcendentals=int(transcendentals),
                                      bytes_accessed=int(bytes_accessed)),
    )(*inputs)

    cls_prob_object = cls_obj_pad[:, :nobj_cls]
    bbox_object = bbox_pad[:, :4 * nobj_cls]
    cls_prob_predicate = cls_pred_pad[:, :npred_cls]

    reranked_score = None  # TODO(synk): Dumplicate_Removal (learnable NMS) module not provided.

    return ((cls_prob_object, bbox_object, object_rois, reranked_score),
            (cls_prob_predicate, mat_phrase, region_rois.shape[0]))


# ----------------------------------- main -------------------------------------

if __name__ == "__main__":
    cfg = dict(pool_size=4, c_feat=64, dim_ho=128, dim_hr=64, dim_hp=128,
               n_classes_obj=16, n_classes_pred=8, spatial_scale=1.0 / 16)

    key = jax.random.PRNGKey(0)
    kp, kf, kr1, kr2 = jax.random.split(key, 4)
    params = init_params(kp, cfg)

    # TODO(synk): RPN backbone / proposal generation and graph_construction_py /
    # proposal_target_layer_py are CPU-side numpy code not provided; the feature
    # map, ROIs and graph adjacency are synthesized deterministically instead.
    Hf = Wf = 16
    features = jax.random.normal(kf, (Hf, Wf, cfg["c_feat"]), jnp.float32)

    n_obj, n_reg, n_phr = 16, 8, 16
    img_size = Hf * 16.0  # spatial_scale = 1/16

    def make_rois(k, n):
        xy = jax.random.uniform(k, (n, 2), minval=0.0, maxval=img_size * 0.5)
        wh = jax.random.uniform(jax.random.fold_in(k, 1), (n, 2),
                                minval=32.0, maxval=img_size * 0.5)
        x2y2 = jnp.minimum(xy + wh, img_size - 1.0)
        return jnp.concatenate([jnp.zeros((n, 1), jnp.float32), xy, x2y2], axis=1)

    object_rois = make_rois(kr1, n_obj)
    region_rois = make_rois(kr2, n_reg)

    mat_object = (jnp.arange(n_obj)[:, None] % n_reg
                  == jnp.arange(n_reg)[None, :]).astype(jnp.int32)
    mat_object = mat_object | jnp.roll(mat_object, 1, axis=1)    # (No, Nr)
    mat_region = mat_object.T                                    # (Nr, No)
    mat_phrase = jnp.stack([jnp.arange(n_phr) % n_obj,
                            (jnp.arange(n_phr) + 3) % n_obj,
                            jnp.arange(n_phr) % n_reg], axis=1).astype(jnp.int32)

    fwd = jax.jit(functools.partial(factorizable_network_forward_eval, cfg=cfg))
    out = fwd(params, features, object_rois, region_rois,
              mat_object, mat_region, mat_phrase)
    out = jax.block_until_ready(out)

    (cls_prob_object, bbox_object, _, _), (cls_prob_predicate, _, n_region) = out
    assert cls_prob_object.shape == (n_obj, cfg["n_classes_obj"])
    assert bbox_object.shape == (n_obj, cfg["n_classes_obj"] * 4)
    assert cls_prob_predicate.shape == (n_phr, cfg["n_classes_pred"])
    assert int(n_region) == n_reg
    assert bool(jnp.all(jnp.isfinite(cls_prob_object)))
    assert bool(jnp.all(jnp.isfinite(cls_prob_predicate)))
    print("KERNEL_OK")
</pallas_src>

<mosaic_0001>
module attributes {stable_mosaic.version = 11 : i64} {
  func.func @_fnet_fused_kernel(%arg0: memref<256x64xf32, #tpu.memory_space<vmem>>, %arg1: memref<256x256xf32, #tpu.memory_space<vmem>>, %arg2: memref<128x256xf32, #tpu.memory_space<vmem>>, %arg3: memref<16x64x128xf32, #tpu.memory_space<vmem>>, %arg4: memref<1x128xf32, #tpu.memory_space<vmem>>, %arg5: memref<128x128xf32, #tpu.memory_space<vmem>>, %arg6: memref<1x128xf32, #tpu.memory_space<vmem>>, %arg7: memref<9x128x128xf32, #tpu.memory_space<vmem>>, %arg8: memref<9x64x64xf32, #tpu.memory_space<vmem>>, %arg9: memref<1x64xf32, #tpu.memory_space<vmem>>, %arg10: memref<9x64x64xf32, #tpu.memory_space<vmem>>, %arg11: memref<1x64xf32, #tpu.memory_space<vmem>>, %arg12: memref<8x128xf32, #tpu.memory_space<vmem>>, %arg13: memref<16x8xf32, #tpu.memory_space<vmem>>, %arg14: memref<8x16xf32, #tpu.memory_space<vmem>>, %arg15: memref<64x128xf32, #tpu.memory_space<vmem>>, %arg16: memref<1x128xf32, #tpu.memory_space<vmem>>, %arg17: memref<128x64xf32, #tpu.memory_space<vmem>>, %arg18: memref<1x64xf32, #tpu.memory_space<vmem>>, %arg19: memref<16x16xf32, #tpu.memory_space<vmem>>, %arg20: memref<16x16xf32, #tpu.memory_space<vmem>>, %arg21: memref<16x8xf32, #tpu.memory_space<vmem>>, %arg22: memref<128x128xf32, #tpu.memory_space<vmem>>, %arg23: memref<128x128xf32, #tpu.memory_space<vmem>>, %arg24: memref<64x128xf32, #tpu.memory_space<vmem>>, %arg25: memref<1x128xf32, #tpu.memory_space<vmem>>, %arg26: memref<128x128xf32, #tpu.memory_space<vmem>>, %arg27: memref<1x128xf32, #tpu.memory_space<vmem>>, %arg28: memref<128x128xf32, #tpu.memory_space<vmem>>, %arg29: memref<1x128xf32, #tpu.memory_space<vmem>>, %arg30: memref<128x128xf32, #tpu.memory_space<vmem>>, %arg31: memref<1x128xf32, #tpu.memory_space<vmem>>, %arg32: memref<16x128xf32, #tpu.memory_space<vmem>>, %arg33: memref<16x128xf32, #tpu.memory_space<vmem>>, %arg34: memref<16x128xf32, #tpu.memory_space<vmem>>) attributes {dimension_semantics = [], scalar_prefetch = 0 : i64, scratch_operands = 0 : i64, tpu.core_type = #tpu.core_type<tc>} {
    %c0 = arith.constant 0 : index
    %c0_0 = arith.constant 0 : index
    %0 = vector.load %arg0[%c0, %c0_0] : memref<256x64xf32, #tpu.memory_space<vmem>>, vector<256x64xf32>
    %c0_1 = arith.constant 0 : index
    %c0_2 = arith.constant 0 : index
    %1 = vector.load %arg1[%c0_1, %c0_2] : memref<256x256xf32, #tpu.memory_space<vmem>>, vector<256x256xf32>
    %2 = arith.truncf %1 : vector<256x256xf32> to vector<256x256xbf16>
    %3 = arith.truncf %0 : vector<256x64xf32> to vector<256x64xbf16>
    %cst = arith.constant dense<0.000000e+00> : vector<256x64xf32>
    %4 = tpu.matmul %2, %3, %cst {dimension_numbers = #tpu.dot_dimension_numbers<[1], [0], [0], [1], [0, 0, 1, 1], [], []>} : vector<256x256xbf16>, vector<256x64xbf16>, vector<256x64xf32> -> vector<256x64xf32>
    %cst_3 = arith.constant 0.000000e+00 : f32
    %5 = vector.broadcast %cst_3 : f32 to vector<16x128xf32>
    %6 = vector.extract_strided_slice %4 {offsets = [0, 0], sizes = [16, 64], strides = [1, 1]} : vector<256x64xf32> to vector<16x64xf32>
    %c0_4 = arith.constant 0 : index
    %c0_5 = arith.constant 0 : index
    %c0_6 = arith.constant 0 : index
    %7 = vector.load %arg3[%c0_4, %c0_5, %c0_6] : memref<16x64x128xf32, #tpu.memory_space<vmem>>, vector<1x64x128xf32>
    %8 = vector.shape_cast %7 : vector<1x64x128xf32> to vector<64x128xf32>
    %9 = arith.truncf %6 : vector<16x64xf32> to vector<16x64xbf16>
    %10 = arith.truncf %8 : vector<64x128xf32> to vector<64x128xbf16>
    %cst_7 = arith.constant dense<0.000000e+00> : vector<16x128xf32>
    %11 = tpu.matmul %9, %10, %cst_7 {dimension_numbers = #tpu.dot_dimension_numbers<[1], [0], [0], [1], [0, 0, 1, 1], [], []>} : vector<16x64xbf16>, vector<64x128xbf16>, vector<16x128xf32> -> vector<16x128xf32>
    %12 = arith.addf %5, %11 : vector<16x128xf32>
    %13 = vector.extract_strided_slice %4 {offsets = [16, 0], sizes = [16, 64], strides = [1, 1]} : vector<256x64xf32> to vector<16x64xf32>
    %c1 = arith.constant 1 : index
    %c0_8 = arith.constant 0 : index
    %c0_9 = arith.constant 0 : index
    %14 = vector.load %arg3[%c1, %c0_8, %c0_9] : memref<16x64x128xf32, #tpu.memory_space<vmem>>, vector<1x64x128xf32>
    %15 = vector.shape_cast %14 : vector<1x64x128xf32> to vector<64x128xf32>
    %16 = arith.truncf %13 : vector<16x64xf32> to vector<16x64xbf16>
    %17 = arith.truncf %15 : vector<64x128xf32> to vector<64x128xbf16>
    %cst_10 = arith.constant dense<0.000000e+00> : vector<16x128xf32>
    %18 = tpu.matmul %16, %17, %cst_10 {dimension_numbers = #tpu.dot_dimension_numbers<[1], [0], [0], [1], [0, 0, 1, 1], [], []>} : vector<16x64xbf16>, vector<64x128xbf16>, vector<16x128xf32> -> vector<16x128xf32>
    %19 = arith.addf %12, %18 : vector<16x128xf32>
    %20 = vector.extract_strided_slice %4 {offsets = [32, 0], sizes = [16, 64], strides = [1, 1]} : vector<256x64xf32> to vector<16x64xf32>
    %c2 = arith.constant 2 : index
    %c0_11 = arith.constant 0 : index
    %c0_12 = arith.constant 0 : index
    %21 = vector.load %arg3[%c2, %c0_11, %c0_12] : memref<16x64x128xf32, #tpu.memory_space<vmem>>, vector<1x64x128xf32>
    %22 = vector.shape_cast %21 : vector<1x64x128xf32> to vector<64x128xf32>
    %23 = arith.truncf %20 : vector<16x64xf32> to vector<16x64xbf16>
    %24 = arith.truncf %22 : vector<64x128xf32> to vector<64x128xbf16>
    %cst_13 = arith.constant dense<0.000000e+00> : vector<16x128xf32>
    %25 = tpu.matmul %23, %24, %cst_13 {dimension_numbers = #tpu.dot_dimension_numbers<[1], [0], [0], [1], [0, 0, 1, 1], [], []>} : vector<16x64xbf16>, vector<64x128xbf16>, vector<16x128xf32> -> vector<16x128xf32>
    %26 = arith.addf %19, %25 : vector<16x128xf32>
    %27 = vector.extract_strided_slice %4 {offsets = [48, 0], sizes = [16, 64], strides = [1, 1]} : vector<256x64xf32> to vector<16x64xf32>
    %c3 = arith.constant 3 : index
    %c0_14 = arith.constant 0 : index
    %c0_15 = arith.constant 0 : index
    %28 = vector.load %arg3[%c3, %c0_14, %c0_15] : memref<16x64x128xf32, #tpu.memory_space<vmem>>, vector<1x64x128xf32>
    %29 = vector.shape_cast %28 : vector<1x64x128xf32> to vector<64x128xf32>
    %30 = arith.truncf %27 : vector<16x64xf32> to vector<16x64xbf16>
    %31 = arith.truncf %29 : vector<64x128xf32> to vector<64x128xbf16>
    %cst_16 = arith.constant dense<0.000000e+00> : vector<16x128xf32>
    %32 = tpu.matmul %30, %31, %cst_16 {dimension_numbers = #tpu.dot_dimension_numbers<[1], [0], [0], [1], [0, 0, 1, 1], [], []>} : vector<16x64xbf16>, vector<64x128xbf16>, vector<16x128xf32> -> vector<16x128xf32>
    %33 = arith.addf %26, %32 : vector<16x128xf32>
    %34 = vector.extract_strided_slice %4 {offsets = [64, 0], sizes = [16, 64], strides = [1, 1]} : vector<256x64xf32> to vector<16x64xf32>
    %c4 = arith.constant 4 : index
    %c0_17 = arith.constant 0 : index
    %c0_18 = arith.constant 0 : index
    %35 = vector.load %arg3[%c4, %c0_17, %c0_18] : memref<16x64x128xf32, #tpu.memory_space<vmem>>, vector<1x64x128xf32>
    %36 = vector.shape_cast %35 : vector<1x64x128xf32> to vector<64x128xf32>
    %37 = arith.truncf %34 : vector<16x64xf32> to vector<16x64xbf16>
    %38 = arith.truncf %36 : vector<64x128xf32> to vector<64x128xbf16>
    %cst_19 = arith.constant dense<0.000000e+00> : vector<16x128xf32>
    %39 = tpu.matmul %37, %38, %cst_19 {dimension_numbers = #tpu.dot_dimension_numbers<[1], [0], [0], [1], [0, 0, 1, 1], [], []>} : vector<16x64xbf16>, vector<64x128xbf16>, vector<16x128xf32> -> vector<16x128xf32>
    %40 = arith.addf %33, %39 : vector<16x128xf32>
    %41 = vector.extract_strided_slice %4 {offsets = [80, 0], sizes = [16, 64], strides = [1, 1]} : vector<256x64xf32> to vector<16x64xf32>
    %c5 = arith.constant 5 : index
    %c0_20 = arith.constant 0 : index
    %c0_21 = arith.constant 0 : index
    %42 = vector.load %arg3[%c5, %c0_20, %c0_21] : memref<16x64x128xf32, #tpu.memory_space<vmem>>, vector<1x64x128xf32>
    %43 = vector.shape_cast %42 : vector<1x64x128xf32> to vector<64x128xf32>
    %44 = arith.truncf %41 : vector<16x64xf32> to vector<16x64xbf16>
    %45 = arith.truncf %43 : vector<64x128xf32> to vector<64x128xbf16>
    %cst_22 = arith.constant dense<0.000000e+00> : vector<16x128xf32>
    %46 = tpu.matmul %44, %45, %cst_22 {dimension_numbers = #tpu.dot_dimension_numbers<[1], [0], [0], [1], [0, 0, 1, 1], [], []>} : vector<16x64xbf16>, vector<64x128xbf16>, vector<16x128xf32> -> vector<16x128xf32>
    %47 = arith.addf %40, %46 : vector<16x128xf32>
    %48 = vector.extract_strided_slice %4 {offsets = [96, 0], sizes = [16, 64], strides = [1, 1]} : vector<256x64xf32> to vector<16x64xf32>
    %c6 = arith.constant 6 : index
    %c0_23 = arith.constant 0 : index
    %c0_24 = arith.constant 0 : index
    %49 = vector.load %arg3[%c6, %c0_23, %c0_24] : memref<16x64x128xf32, #tpu.memory_space<vmem>>, vector<1x64x128xf32>
    %50 = vector.shape_cast %49 : vector<1x64x128xf32> to vector<64x128xf32>
    %51 = arith.truncf %48 : vector<16x64xf32> to vector<16x64xbf16>
    %52 = arith.truncf %50 : vector<64x128xf32> to vector<64x128xbf16>
    %cst_25 = arith.constant dense<0.000000e+00> : vector<16x128xf32>
    %53 = tpu.matmul %51, %52, %cst_25 {dimension_numbers = #tpu.dot_dimension_numbers<[1], [0], [0], [1], [0, 0, 1, 1], [], []>} : vector<16x64xbf16>, vector<64x128xbf16>, vector<16x128xf32> -> vector<16x128xf32>
    %54 = arith.addf %47, %53 : vector<16x128xf32>
    %55 = vector.extract_strided_slice %4 {offsets = [112, 0], sizes = [16, 64], strides = [1, 1]} : vector<256x64xf32> to vector<16x64xf32>
    %c7 = arith.constant 7 : index
    %c0_26 = arith.constant 0 : index
    %c0_27 = arith.constant 0 : index
    %56 = vector.load %arg3[%c7, %c0_26, %c0_27] : memref<16x64x128xf32, #tpu.memory_space<vmem>>, vector<1x64x128xf32>
    %57 = vector.shape_cast %56 : vector<1x64x128xf32> to vector<64x128xf32>
    %58 = arith.truncf %55 : vector<16x64xf32> to vector<16x64xbf16>
    %59 = arith.truncf %57 : vector<64x128xf32> to vector<64x128xbf16>
    %cst_28 = arith.constant dense<0.000000e+00> : vector<16x128xf32>
    %60 = tpu.matmul %58, %59, %cst_28 {dimension_numbers = #tpu.dot_dimension_numbers<[1], [0], [0], [1], [0, 0, 1, 1], [], []>} : vector<16x64xbf16>, vector<64x128xbf16>, vector<16x128xf32> -> vector<16x128xf32>
    %61 = arith.addf %54, %60 : vector<16x128xf32>
    %62 = vector.extract_strided_slice %4 {offsets = [128, 0], sizes = [16, 64], strides = [1, 1]} : vector<256x64xf32> to vector<16x64xf32>
    %c8 = arith.constant 8 : index
    %c0_29 = arith.constant 0 : index
    %c0_30 = arith.constant 0 : index
    %63 = vector.load %arg3[%c8, %c0_29, %c0_30] : memref<16x64x128xf32, #tpu.memory_space<vmem>>, vector<1x64x128xf32>
    %64 = vector.shape_cast %63 : vector<1x64x128xf32> to vector<64x128xf32>
    %65 = arith.truncf %62 : vector<16x64xf32> to vector<16x64xbf16>
    %66 = arith.truncf %64 : vector<64x128xf32> to vector<64x128xbf16>
    %cst_31 = arith.constant dense<0.000000e+00> : vector<16x128xf32>
    %67 = tpu.matmul %65, %66, %cst_31 {dimension_numbers = #tpu.dot_dimension_numbers<[1], [0], [0], [1], [0, 0, 1, 1], [], []>} : vector<16x64xbf16>, vector<64x128xbf16>, vector<16x128xf32> -> vector<16x128xf32>
    %68 = arith.addf %61, %67 : vector<16x128xf32>
    %69 = vector.extract_strided_slice %4 {offsets = [144, 0], sizes = [16, 64], strides = [1, 1]} : vector<256x64xf32> to vector<16x64xf32>
    %c9 = arith.constant 9 : index
    %c0_32 = arith.constant 0 : index
    %c0_33 = arith.constant 0 : index
    %70 = vector.load %arg3[%c9, %c0_32, %c0_33] : memref<16x64x128xf32, #tpu.memory_space<vmem>>, vector<1x64x128xf32>
    %71 = vector.shape_cast %70 : vector<1x64x128xf32> to vector<64x128xf32>
    %72 = arith.truncf %69 : vector<16x64xf32> to vector<16x64xbf16>
    %73 = arith.truncf %71 : vector<64x128xf32> to vector<64x128xbf16>
    %cst_34 = arith.constant dense<0.000000e+00> : vector<16x128xf32>
    %74 = tpu.matmul %72, %73, %cst_34 {dimension_numbers = #tpu.dot_dimension_numbers<[1], [0], [0], [1], [0, 0, 1, 1], [], []>} : vector<16x64xbf16>, vector<64x128xbf16>, vector<16x128xf32> -> vector<16x128xf32>
    %75 = arith.addf %68, %74 : vector<16x128xf32>
    %76 = vector.extract_strided_slice %4 {offsets = [160, 0], sizes = [16, 64], strides = [1, 1]} : vector<256x64xf32> to vector<16x64xf32>
    %c10 = arith.constant 10 : index
    %c0_35 = arith.constant 0 : index
    %c0_36 = arith.constant 0 : index
    %77 = vector.load %arg3[%c10, %c0_35, %c0_36] : memref<16x64x128xf32, #tpu.memory_space<vmem>>, vector<1x64x128xf32>
    %78 = vector.shape_cast %77 : vector<1x64x128xf32> to vector<64x128xf32>
    %79 = arith.truncf %76 : vector<16x64xf32> to vector<16x64xbf16>
    %80 = arith.truncf %78 : vector<64x128xf32> to vector<64x128xbf16>
    %cst_37 = arith.constant dense<0.000000e+00> : vector<16x128xf32>
    %81 = tpu.matmul %79, %80, %cst_37 {dimension_numbers = #tpu.dot_dimension_numbers<[1], [0], [0], [1], [0, 0, 1, 1], [], []>} : vector<16x64xbf16>, vector<64x128xbf16>, vector<16x128xf32> -> vector<16x128xf32>
    %82 = arith.addf %75, %81 : vector<16x128xf32>
    %83 = vector.extract_strided_slice %4 {offsets = [176, 0], sizes = [16, 64], strides = [1, 1]} : vector<256x64xf32> to vector<16x64xf32>
    %c11 = arith.constant 11 : index
    %c0_38 = arith.constant 0 : index
    %c0_39 = arith.constant 0 : index
    %84 = vector.load %arg3[%c11, %c0_38, %c0_39] : memref<16x64x128xf32, #tpu.memory_space<vmem>>, vector<1x64x128xf32>
    %85 = vector.shape_cast %84 : vector<1x64x128xf32> to vector<64x128xf32>
    %86 = arith.truncf %83 : vector<16x64xf32> to vector<16x64xbf16>
    %87 = arith.truncf %85 : vector<64x128xf32> to vector<64x128xbf16>
    %cst_40 = arith.constant dense<0.000000e+00> : vector<16x128xf32>
    %88 = tpu.matmul %86, %87, %cst_40 {dimension_numbers = #tpu.dot_dimension_numbers<[1], [0], [0], [1], [0, 0, 1, 1], [], []>} : vector<16x64xbf16>, vector<64x128xbf16>, vector<16x128xf32> -> vector<16x128xf32>
    %89 = arith.addf %82, %88 : vector<16x128xf32>
    %90 = vector.extract_strided_slice %4 {offsets = [192, 0], sizes = [16, 64], strides = [1, 1]} : vector<256x64xf32> to vector<16x64xf32>
    %c12 = arith.constant 12 : index
    %c0_41 = arith.constant 0 : index
    %c0_42 = arith.constant 0 : index
    %91 = vector.load %arg3[%c12, %c0_41, %c0_42] : memref<16x64x128xf32, #tpu.memory_space<vmem>>, vector<1x64x128xf32>
    %92 = vector.shape_cast %91 : vector<1x64x128xf32> to vector<64x128xf32>
    %93 = arith.truncf %90 : vector<16x64xf32> to vector<16x64xbf16>
    %94 = arith.truncf %92 : vector<64x128xf32> to vector<64x128xbf16>
    %cst_43 = arith.constant dense<0.000000e+00> : vector<16x128xf32>
    %95 = tpu.matmul %93, %94, %cst_43 {dimension_numbers = #tpu.dot_dimension_numbers<[1], [0], [0], [1], [0, 0, 1, 1], [], []>} : vector<16x64xbf16>, vector<64x128xbf16>, vector<16x128xf32> -> vector<16x128xf32>
    %96 = arith.addf %89, %95 : vector<16x128xf32>
    %97 = vector.extract_strided_slice %4 {offsets = [208, 0], sizes = [16, 64], strides = [1, 1]} : vector<256x64xf32> to vector<16x64xf32>
    %c13 = arith.constant 13 : index
    %c0_44 = arith.constant 0 : index
    %c0_45 = arith.constant 0 : index
    %98 = vector.load %arg3[%c13, %c0_44, %c0_45] : memref<16x64x128xf32, #tpu.memory_space<vmem>>, vector<1x64x128xf32>
    %99 = vector.shape_cast %98 : vector<1x64x128xf32> to vector<64x128xf32>
    %100 = arith.truncf %97 : vector<16x64xf32> to vector<16x64xbf16>
    %101 = arith.truncf %99 : vector<64x128xf32> to vector<64x128xbf16>
    %cst_46 = arith.constant dense<0.000000e+00> : vector<16x128xf32>
    %102 = tpu.matmul %100, %101, %cst_46 {dimension_numbers = #tpu.dot_dimension_numbers<[1], [0], [0], [1], [0, 0, 1, 1], [], []>} : vector<16x64xbf16>, vector<64x128xbf16>, vector<16x128xf32> -> vector<16x128xf32>
    %103 = arith.addf %96, %102 : vector<16x128xf32>
    %104 = vector.extract_strided_slice %4 {offsets = [224, 0], sizes = [16, 64], strides = [1, 1]} : vector<256x64xf32> to vector<16x64xf32>
    %c14 = arith.constant 14 : index
    %c0_47 = arith.constant 0 : index
    %c0_48 = arith.constant 0 : index
    %105 = vector.load %arg3[%c14, %c0_47, %c0_48] : memref<16x64x128xf32, #tpu.memory_space<vmem>>, vector<1x64x128xf32>
    %106 = vector.shape_cast %105 : vector<1x64x128xf32> to vector<64x128xf32>
    %107 = arith.truncf %104 : vector<16x64xf32> to vector<16x64xbf16>
    %108 = arith.truncf %106 : vector<64x128xf32> to vector<64x128xbf16>
    %cst_49 = arith.constant dense<0.000000e+00> : vector<16x128xf32>
    %109 = tpu.matmul %107, %108, %cst_49 {dimension_numbers = #tpu.dot_dimension_numbers<[1], [0], [0], [1], [0, 0, 1, 1], [], []>} : vector<16x64xbf16>, vector<64x128xbf16>, vector<16x128xf32> -> vector<16x128xf32>
    %110 = arith.addf %103, %109 : vector<16x128xf32>
    %111 = vector.extract_strided_slice %4 {offsets = [240, 0], sizes = [16, 64], strides = [1, 1]} : vector<256x64xf32> to vector<16x64xf32>
    %c15 = arith.constant 15 : index
    %c0_50 = arith.constant 0 : index
    %c0_51 = arith.constant 0 : index
    %112 = vector.load %arg3[%c15, %c0_50, %c0_51] : memref<16x64x128xf32, #tpu.memory_space<vmem>>, vector<1x64x128xf32>
    %113 = vector.shape_cast %112 : vector<1x64x128xf32> to vector<64x128xf32>
    %114 = arith.truncf %111 : vector<16x64xf32> to vector<16x64xbf16>
    %115 = arith.truncf %113 : vector<64x128xf32> to vector<64x128xbf16>
    %cst_52 = arith.constant dense<0.000000e+00> : vector<16x128xf32>
    %116 = tpu.matmul %114, %115, %cst_52 {dimension_numbers = #tpu.dot_dimension_numbers<[1], [0], [0], [1], [0, 0, 1, 1], [], []>} : vector<16x64xbf16>, vector<64x128xbf16>, vector<16x128xf32> -> vector<16x128xf32>
    %117 = arith.addf %110, %116 : vector<16x128xf32>
    %c0_53 = arith.constant 0 : index
    %c0_54 = arith.constant 0 : index
    %118 = vector.load %arg4[%c0_53, %c0_54] : memref<1x128xf32, #tpu.memory_space<vmem>>, vector<1x128xf32>
    %119 = vector.broadcast %118 : vector<1x128xf32> to vector<16x128xf32>
    %120 = arith.addf %117, %119 : vector<16x128xf32>
    %cst_55 = arith.constant 0.000000e+00 : f32
    %121 = vector.broadcast %cst_55 : f32 to vector<16x128xf32>
    %122 = arith.maximumf %120, %121 : vector<16x128xf32>
    %c0_56 = arith.constant 0 : index
    %c0_57 = arith.constant 0 : index
    %123 = vector.load %arg5[%c0_56, %c0_57] : memref<128x128xf32, #tpu.memory_space<vmem>>, vector<128x128xf32>
    %124 = arith.truncf %122 : vector<16x128xf32> to vector<16x128xbf16>
    %125 = arith.truncf %123 : vector<128x128xf32> to vector<128x128xbf16>
    %cst_58 = arith.constant dense<0.000000e+00> : vector<16x128xf32>
    %126 = tpu.matmul %124, %125, %cst_58 {dimension_numbers = #tpu.dot_dimension_numbers<[1], [0], [0], [1], [0, 0, 1, 1], [], []>} : vector<16x128xbf16>, vector<128x128xbf16>, vector<16x128xf32> -> vector<16x128xf32>
    %c0_59 = arith.constant 0 : index
    %c0_60 = arith.constant 0 : index
    %127 = vector.load %arg6[%c0_59, %c0_60] : memref<1x128xf32, #tpu.memory_space<vmem>>, vector<1x128xf32>
    %128 = vector.broadcast %127 : vector<1x128xf32> to vector<16x128xf32>
    %129 = arith.addf %126, %128 : vector<16x128xf32>
    %cst_61 = arith.constant 0.000000e+00 : f32
    %130 = vector.broadcast %cst_61 : f32 to vector<16x128xf32>
    %131 = arith.maximumf %129, %130 : vector<16x128xf32>
    %c0_62 = arith.constant 0 : index
    %c0_63 = arith.constant 0 : index
    %132 = vector.load %arg28[%c0_62, %c0_63] : memref<128x128xf32, #tpu.memory_space<vmem>>, vector<128x128xf32>
    %133 = arith.truncf %131 : vector<16x128xf32> to vector<16x128xbf16>
    %134 = arith.truncf %132 : vector<128x128xf32> to vector<128x128xbf16>
    %cst_64 = arith.constant dense<0.000000e+00> : vector<16x128xf32>
    %135 = tpu.matmul %133, %134, %cst_64 {dimension_numbers = #tpu.dot_dimension_numbers<[1], [0], [0], [1], [0, 0, 1, 1], [], []>} : vector<16x128xbf16>, vector<128x128xbf16>, vector<16x128xf32> -> vector<16x128xf32>
    %c0_65 = arith.constant 0 : index
    %c0_66 = arith.constant 0 : index
    %136 = vector.load %arg29[%c0_65, %c0_66] : memref<1x128xf32, #tpu.memory_space<vmem>>, vector<1x128xf32>
    %137 = vector.broadcast %136 : vector<1x128xf32> to vector<16x128xf32>
    %138 = arith.addf %135, %137 : vector<16x128xf32>
    %c0_67 = arith.constant 0 : index
    %c0_68 = arith.constant 0 : index
    %139 = vector.load %arg33[%c0_67, %c0_68] : memref<16x128xf32, #tpu.memory_space<vmem>>, vector<16x128xf32>
    tpu.vector_store %arg33[%c0_67, %c0_68], %138 {strides = array<i32>} : memref<16x128xf32, #tpu.memory_space<vmem>>, vector<16x128xf32>,
    %c0_69 = arith.constant 0 : index
    %c0_70 = arith.constant 0 : index
    %140 = vector.load %arg2[%c0_69, %c0_70] : memref<128x256xf32, #tpu.memory_space<vmem>>, vector<128x256xf32>
    %141 = arith.truncf %140 : vector<128x256xf32> to vector<128x256xbf16>
    %142 = arith.truncf %0 : vector<256x64xf32> to vector<256x64xbf16>
    %cst_71 = arith.constant dense<0.000000e+00> : vector<128x64xf32>
    %143 = tpu.matmul %141, %142, %cst_71 {dimension_numbers = #tpu.dot_dimension_numbers<[1], [0], [0], [1], [0, 0, 1, 1], [], []>} : vector<128x256xbf16>, vector<256x64xbf16>, vector<128x64xf32> -> vector<128x64xf32>
    %cst_72 = arith.constant 0.000000e+00 : f32
    %144 = vector.broadcast %cst_72 : f32 to vector<128x64xf32>
    %c0_73 = arith.constant 0 : index
    %c0_74 = arith.constant 0 : index
    %c0_75 = arith.constant 0 : index
    %145 = vector.load %arg7[%c0_73, %c0_74, %c0_75] : memref<9x128x128xf32, #tpu.memory_space<vmem>>, vector<1x128x128xf32>
    %146 = vector.shape_cast %145 : vector<1x128x128xf32> to vector<128x128xf32>
    %c0_76 = arith.constant 0 : index
    %c0_77 = arith.constant 0 : index
    %c0_78 = arith.constant 0 : index
    %147 = vector.load %arg8[%c0_76, %c0_77, %c0_78] : memref<9x64x64xf32, #tpu.memory_space<vmem>>, vector<1x64x64xf32>
    %148 = vector.shape_cast %147 : vector<1x64x64xf32> to vector<64x64xf32>
    %149 = arith.truncf %143 : vector<128x64xf32> to vector<128x64xbf16>
    %150 = arith.truncf %148 : vector<64x64xf32> to vector<64x64xbf16>
    %cst_79 = arith.constant dense<0.000000e+00> : vector<128x64xf32>
    %151 = tpu.matmul %149, %150, %cst_79 {dimension_numbers = #tpu.dot_dimension_numbers<[1], [0], [0], [1], [0, 0, 1, 1], [], []>} : vector<128x64xbf16>, vector<64x64xbf16>, vector<128x64xf32> -> vector<128x64xf32>
    %152 = arith.truncf %146 : vector<128x128xf32> to vector<128x128xbf16>
    %153 = arith.truncf %151 : vector<128x64xf32> to vector<128x64xbf16>
    %cst_80 = arith.constant dense<0.000000e+00> : vector<128x64xf32>
    %154 = tpu.matmul %152, %153, %cst_80 {dimension_numbers = #tpu.dot_dimension_numbers<[1], [0], [0], [1], [0, 0, 1, 1], [], []>} : vector<128x128xbf16>, vector<128x64xbf16>, vector<128x64xf32> -> vector<128x64xf32>
    %155 = arith.addf %144, %154 : vector<128x64xf32>
    %c1_81 = arith.constant 1 : index
    %c0_82 = arith.constant 0 : index
    %c0_83 = arith.constant 0 : index
    %156 = vector.load %arg7[%c1_81, %c0_82, %c0_83] : memref<9x128x128xf32, #tpu.memory_space<vmem>>, vector<1x128x128xf32>
    %157 = vector.shape_cast %156 : vector<1x128x128xf32> to vector<128x128xf32>
    %c1_84 = arith.constant 1 : index
    %c0_85 = arith.constant 0 : index
    %c0_86 = arith.constant 0 : index
    %158 = vector.load %arg8[%c1_84, %c0_85, %c0_86] : memref<9x64x64xf32, #tpu.memory_space<vmem>>, vector<1x64x64xf32>
    %159 = vector.shape_cast %158 : vector<1x64x64xf32> to vector<64x64xf32>
    %160 = arith.truncf %143 : vector<128x64xf32> to vector<128x64xbf16>
    %161 = arith.truncf %159 : vector<64x64xf32> to vector<64x64xbf16>
    %cst_87 = arith.constant dense<0.000000e+00> : vector<128x64xf32>
    %162 = tpu.matmul %160, %161, %cst_87 {dimension_numbers = #tpu.dot_dimension_numbers<[1], [0], [0], [1], [0, 0, 1, 1], [], []>} : vector<128x64xbf16>, vector<64x64xbf16>, vector<128x64xf32> -> vector<128x64xf32>
    %163 = arith.truncf %157 : vector<128x128xf32> to vector<128x128xbf16>
    %164 = arith.truncf %162 : vector<128x64xf32> to vector<128x64xbf16>
    %cst_88 = arith.constant dense<0.000000e+00> : vector<128x64xf32>
    %165 = tpu.matmul %163, %164, %cst_88 {dimension_numbers = #tpu.dot_dimension_numbers<[1], [0], [0], [1], [0, 0, 1, 1], [], []>} : vector<128x128xbf16>, vector<128x64xbf16>, vector<128x64xf32> -> vector<128x64xf32>
    %166 = arith.addf %155, %165 : vector<128x64xf32>
    %c2_89 = arith.constant 2 : index
    %c0_90 = arith.constant 0 : index
    %c0_91 = arith.constant 0 : index
    %167 = vector.load %arg7[%c2_89, %c0_90, %c0_91] : memref<9x128x128xf32, #tpu.memory_space<vmem>>, vector<1x128x128xf32>
    %168 = vector.shape_cast %167 : vector<1x128x128xf32> to vector<128x128xf32>
    %c2_92 = arith.constant 2 : index
    %c0_93 = arith.constant 0 : index
    %c0_94 = arith.constant 0 : index
    %169 = vector.load %arg8[%c2_92, %c0_93, %c0_94] : memref<9x64x64xf32, #tpu.memory_space<vmem>>, vector<1x64x64xf32>
    %170 = vector.shape_cast %169 : vector<1x64x64xf32> to vector<64x64xf32>
    %171 = arith.truncf %143 : vector<128x64xf32> to vector<128x64xbf16>
    %172 = arith.truncf %170 : vector<64x64xf32> to vector<64x64xbf16>
    %cst_95 = arith.constant dense<0.000000e+00> : vector<128x64xf32>
    %173 = tpu.matmul %171, %172, %cst_95 {dimension_numbers = #tpu.dot_dimension_numbers<[1], [0], [0], [1], [0, 0, 1, 1], [], []>} : vector<128x64xbf16>, vector<64x64xbf16>, vector<128x64xf32> -> vector<128x64xf32>
    %174 = arith.truncf %168 : vector<128x128xf32> to vector<128x128xbf16>
    %175 = arith.truncf %173 : vector<128x64xf32> to vector<128x64xbf16>
    %cst_96 = arith.constant dense<0.000000e+00> : vector<128x64xf32>
    %176 = tpu.matmul %174, %175, %cst_96 {dimension_numbers = #tpu.dot_dimension_numbers<[1], [0], [0], [1], [0, 0, 1, 1], [], []>} : vector<128x128xbf16>, vector<128x64xbf16>, vector<128x64xf32> -> vector<128x64xf32>
    %177 = arith.addf %166, %176 : vector<128x64xf32>
    %c3_97 = arith.constant 3 : index
    %c0_98 = arith.constant 0 : index
    %c0_99 = arith.constant 0 : index
    %178 = vector.load %arg7[%c3_97, %c0_98, %c0_99] : memref<9x128x128xf32, #tpu.memory_space<vmem>>, vector<1x128x128xf32>
    %179 = vector.shape_cast %178 : vector<1x128x128xf32> to vector<128x128xf32>
    %c3_100 = arith.constant 3 : index
    %c0_101 = arith.constant 0 : index
    %c0_102 = arith.constant 0 : index
    %180 = vector.load %arg8[%c3_100, %c0_101, %c0_102] : memref<9x64x64xf32, #tpu.memory_space<vmem>>, vector<1x64x64xf32>
    %181 = vector.shape_cast %180 : vector<1x64x64xf32> to vector<64x64xf32>
    %182 = arith.truncf %143 : vector<128x64xf32> to vector<128x64xbf16>
    %183 = arith.truncf %181 : vector<64x64xf32> to vector<64x64xbf16>
    %cst_103 = arith.constant dense<0.000000e+00> : vector<128x64xf32>
    %184 = tpu.matmul %182, %183, %cst_103 {dimension_numbers = #tpu.dot_dimension_numbers<[1], [0], [0], [1], [0, 0, 1, 1], [], []>} : vector<128x64xbf16>, vector<64x64xbf16>, vector<128x64xf32> -> vector<128x64xf32>
    %185 = arith.truncf %179 : vector<128x128xf32> to vector<128x128xbf16>
    %186 = arith.truncf %184 : vector<128x64xf32> to vector<128x64xbf16>
    %cst_104 = arith.constant dense<0.000000e+00> : vector<128x64xf32>
    %187 = tpu.matmul %185, %186, %cst_104 {dimension_numbers = #tpu.dot_dimension_numbers<[1], [0], [0], [1], [0, 0, 1, 1], [], []>} : vector<128x128xbf16>, vector<128x64xbf16>, vector<128x64xf32> -> vector<128x64xf32>
    %188 = arith.addf %177, %187 : vector<128x64xf32>
    %c4_105 = arith.constant 4 : index
    %c0_106 = arith.constant 0 : index
    %c0_107 = arith.constant 0 : index
    %189 = vector.load %arg7[%c4_105, %c0_106, %c0_107] : memref<9x128x128xf32, #tpu.memory_space<vmem>>, vector<1x128x128xf32>
    %190 = vector.shape_cast %189 : vector<1x128x128xf32> to vector<128x128xf32>
    %c4_108 = arith.constant 4 : index
    %c0_109 = arith.constant 0 : index
    %c0_110 = arith.constant 0 : index
    %191 = vector.load %arg8[%c4_108, %c0_109, %c0_110] : memref<9x64x64xf32, #tpu.memory_space<vmem>>, vector<1x64x64xf32>
    %192 = vector.shape_cast %191 : vector<1x64x64xf32> to vector<64x64xf32>
    %193 = arith.truncf %143 : vector<128x64xf32> to vector<128x64xbf16>
    %194 = arith.truncf %192 : vector<64x64xf32> to vector<64x64xbf16>
    %cst_111 = arith.constant dense<0.000000e+00> : vector<128x64xf32>
    %195 = tpu.matmul %193, %194, %cst_111 {dimension_numbers = #tpu.dot_dimension_numbers<[1], [0], [0], [1], [0, 0, 1, 1], [], []>} : vector<128x64xbf16>, vector<64x64xbf16>, vector<128x64xf32> -> vector<128x64xf32>
    %196 = arith.truncf %190 : vector<128x128xf32> to vector<128x128xbf16>
    %197 = arith.truncf %195 : vector<128x64xf32> to vector<128x64xbf16>
    %cst_112 = arith.constant dense<0.000000e+00> : vector<128x64xf32>
    %198 = tpu.matmul %196, %197, %cst_112 {dimension_numbers = #tpu.dot_dimension_numbers<[1], [0], [0], [1], [0, 0, 1, 1], [], []>} : vector<128x128xbf16>, vector<128x64xbf16>, vector<128x64xf32> -> vector<128x64xf32>
    %199 = arith.addf %188, %198 : vector<128x64xf32>
    %c5_113 = arith.constant 5 : index
    %c0_114 = arith.constant 0 : index
    %c0_115 = arith.constant 0 : index
    %200 = vector.load %arg7[%c5_113, %c0_114, %c0_115] : memref<9x128x128xf32, #tpu.memory_space<vmem>>, vector<1x128x128xf32>
    %201 = vector.shape_cast %200 : vector<1x128x128xf32> to vector<128x128xf32>
    %c5_116 = arith.constant 5 : index
    %c0_117 = arith.constant 0 : index
    %c0_118 = arith.constant 0 : index
    %202 = vector.load %arg8[%c5_116, %c0_117, %c0_118] : memref<9x64x64xf32, #tpu.memory_space<vmem>>, vector<1x64x64xf32>
    %203 = vector.shape_cast %202 : vector<1x64x64xf32> to vector<64x64xf32>
    %204 = arith.truncf %143 : vector<128x64xf32> to vector<128x64xbf16>
    %205 = arith.truncf %203 : vector<64x64xf32> to vector<64x64xbf16>
    %cst_119 = arith.constant dense<0.000000e+00> : vector<128x64xf32>
    %206 = tpu.matmul %204, %205, %cst_119 {dimension_numbers = #tpu.dot_dimension_numbers<[1], [0], [0], [1], [0, 0, 1, 1], [], []>} : vector<128x64xbf16>, vector<64x64xbf16>, vector<128x64xf32> -> vector<128x64xf32>
    %207 = arith.truncf %201 : vector<128x128xf32> to vector<128x128xbf16>
    %208 = arith.truncf %206 : vector<128x64xf32> to vector<128x64xbf16>
    %cst_120 = arith.constant dense<0.000000e+00> : vector<128x64xf32>
    %209 = tpu.matmul %207, %208, %cst_120 {dimension_numbers = #tpu.dot_dimension_numbers<[1], [0], [0], [1], [0, 0, 1, 1], [], []>} : vector<128x128xbf16>, vector<128x64xbf16>, vector<128x64xf32> -> vector<128x64xf32>
    %210 = arith.addf %199, %209 : vector<128x64xf32>
    %c6_121 = arith.constant 6 : index
    %c0_122 = arith.constant 0 : index
    %c0_123 = arith.constant 0 : index
    %211 = vector.load %arg7[%c6_121, %c0_122, %c0_123] : memref<9x128x128xf32, #tpu.memory_space<vmem>>, vector<1x128x128xf32>
    %212 = vector.shape_cast %211 : vector<1x128x128xf32> to vector<128x128xf32>
    %c6_124 = arith.constant 6 : index
    %c0_125 = arith.constant 0 : index
    %c0_126 = arith.constant 0 : index
    %213 = vector.load %arg8[%c6_124, %c0_125, %c0_126] : memref<9x64x64xf32, #tpu.memory_space<vmem>>, vector<1x64x64xf32>
    %214 = vector.shape_cast %213 : vector<1x64x64xf32> to vector<64x64xf32>
    %215 = arith.truncf %143 : vector<128x64xf32> to vector<128x64xbf16>
    %216 = arith.truncf %214 : vector<64x64xf32> to vector<64x64xbf16>
    %cst_127 = arith.constant dense<0.000000e+00> : vector<128x64xf32>
    %217 = tpu.matmul %215, %216, %cst_127 {dimension_numbers = #tpu.dot_dimension_numbers<[1], [0], [0], [1], [0, 0, 1, 1], [], []>} : vector<128x64xbf16>, vector<64x64xbf16>, vector<128x64xf32> -> vector<128x64xf32>
    %218 = arith.truncf %212 : vector<128x128xf32> to vector<128x128xbf16>
    %219 = arith.truncf %217 : vector<128x64xf32> to vector<128x64xbf16>
    %cst_128 = arith.constant dense<0.000000e+00> : vector<128x64xf32>
    %220 = tpu.matmul %218, %219, %cst_128 {dimension_numbers = #tpu.dot_dimension_numbers<[1], [0], [0], [1], [0, 0, 1, 1], [], []>} : vector<128x128xbf16>, vector<128x64xbf16>, vector<128x64xf32> -> vector<128x64xf32>
    %221 = arith.addf %210, %220 : vector<128x64xf32>
    %c7_129 = arith.constant 7 : index
    %c0_130 = arith.constant 0 : index
    %c0_131 = arith.constant 0 : index
    %222 = vector.load %arg7[%c7_129, %c0_130, %c0_131] : memref<9x128x128xf32, #tpu.memory_space<vmem>>, vector<1x128x128xf32>
    %223 = vector.shape_cast %222 : vector<1x128x128xf32> to vector<128x128xf32>
    %c7_132 = arith.constant 7 : index
    %c0_133 = arith.constant 0 : index
    %c0_134 = arith.constant 0 : index
    %224 = vector.load %arg8[%c7_132, %c0_133, %c0_134] : memref<9x64x64xf32, #tpu.memory_space<vmem>>, vector<1x64x64xf32>
    %225 = vector.shape_cast %224 : vector<1x64x64xf32> to vector<64x64xf32>
    %226 = arith.truncf %143 : vector<128x64xf32> to vector<128x64xbf16>
    %227 = arith.truncf %225 : vector<64x64xf32> to vector<64x64xbf16>
    %cst_135 = arith.constant dense<0.000000e+00> : vector<128x64xf32>
    %228 = tpu.matmul %226, %227, %cst_135 {dimension_numbers = #tpu.dot_dimension_numbers<[1], [0], [0], [1], [0, 0, 1, 1], [], []>} : vector<128x64xbf16>, vector<64x64xbf16>, vector<128x64xf32> -> vector<128x64xf32>
    %229 = arith.truncf %223 : vector<128x128xf32> to vector<128x128xbf16>
    %230 = arith.truncf %228 : vector<128x64xf32> to vector<128x64xbf16>
    %cst_136 = arith.constant dense<0.000000e+00> : vector<128x64xf32>
    %231 = tpu.matmul %229, %230, %cst_136 {dimension_numbers = #tpu.dot_dimension_numbers<[1], [0], [0], [1], [0, 0, 1, 1], [], []>} : vector<128x128xbf16>, vector<128x64xbf16>, vector<128x64xf32> -> vector<128x64xf32>
    %232 = arith.addf %221, %231 : vector<128x64xf32>
    %c8_137 = arith.constant 8 : index
    %c0_138 = arith.constant 0 : index
    %c0_139 = arith.constant 0 : index
    %233 = vector.load %arg7[%c8_137, %c0_138, %c0_139] : memref<9x128x128xf32, #tpu.memory_space<vmem>>, vector<1x128x128xf32>
    %234 = vector.shape_cast %233 : vector<1x128x128xf32> to vector<128x128xf32>
    %c8_140 = arith.constant 8 : index
    %c0_141 = arith.constant 0 : index
    %c0_142 = arith.constant 0 : index
    %235 = vector.load %arg8[%c8_140, %c0_141, %c0_142] : memref<9x64x64xf32, #tpu.memory_space<vmem>>, vector<1x64x64xf32>
    %236 = vector.shape_cast %235 : vector<1x64x64xf32> to vector<64x64xf32>
    %237 = arith.truncf %143 : vector<128x64xf32> to vector<128x64xbf16>
    %238 = arith.truncf %236 : vector<64x64xf32> to vector<64x64xbf16>
    %cst_143 = arith.constant dense<0.000000e+00> : vector<128x64xf32>
    %239 = tpu.matmul %237, %238, %cst_143 {dimension_numbers = #tpu.dot_dimension_numbers<[1], [0], [0], [1], [0, 0, 1, 1], [], []>} : vector<128x64xbf16>, vector<64x64xbf16>, vector<128x64xf32> -> vector<128x64xf32>
    %240 = arith.truncf %234 : vector<128x128xf32> to vector<128x128xbf16>
    %241 = arith.truncf %239 : vector<128x64xf32> to vector<128x64xbf16>
    %cst_144 = arith.constant dense<0.000000e+00> : vector<128x64xf32>
    %242 = tpu.matmul %240, %241, %cst_144 {dimension_numbers = #tpu.dot_dimension_numbers<[1], [0], [0], [1], [0, 0, 1, 1], [], []>} : vector<128x128xbf16>, vector<128x64xbf16>, vector<128x64xf32> -> vector<128x64xf32>
    %243 = arith.addf %232, %242 : vector<128x64xf32>
    %c0_145 = arith.constant 0 : index
    %c0_146 = arith.constant 0 : index
    %244 = vector.load %arg9[%c0_145, %c0_146] : memref<1x64xf32, #tpu.memory_space<vmem>>, vector<1x64xf32>
    %245 = vector.broadcast %244 : vector<1x64xf32> to vector<128x64xf32>
    %246 = arith.addf %243, %245 : vector<128x64xf32>
    %cst_147 = arith.constant 0.000000e+00 : f32
    %247 = vector.broadcast %cst_147 : f32 to vector<128x64xf32>
    %248 = arith.maximumf %246, %247 : vector<128x64xf32>
    %cst_148 = arith.constant 0.000000e+00 : f32
    %249 = vector.broadcast %cst_148 : f32 to vector<128x64xf32>
    %c0_149 = arith.constant 0 : index
    %c0_150 = arith.constant 0 : index
    %c0_151 = arith.constant 0 : index
    %250 = vector.load %arg7[%c0_149, %c0_150, %c0_151] : memref<9x128x128xf32, #tpu.memory_space<vmem>>, vector<1x128x128xf32>
    %251 = vector.shape_cast %250 : vector<1x128x128xf32> to vector<128x128xf32>
    %c0_152 = arith.constant 0 : index
    %c0_153 = arith.constant 0 : index
    %c0_154 = arith.constant 0 : index
    %252 = vector.load %arg10[%c0_152, %c0_153, %c0_154] : memref<9x64x64xf32, #tpu.memory_space<vmem>>, vector<1x64x64xf32>
    %253 = vector.shape_cast %252 : vector<1x64x64xf32> to vector<64x64xf32>
    %254 = arith.truncf %248 : vector<128x64xf32> to vector<128x64xbf16>
    %255 = arith.truncf %253 : vector<64x64xf32> to vector<64x64xbf16>
    %cst_155 = arith.constant dense<0.000000e+00> : vector<128x64xf32>
    %256 = tpu.matmul %254, %255, %cst_155 {dimension_numbers = #tpu.dot_dimension_numbers<[1], [0], [0], [1], [0, 0, 1, 1], [], []>} : vector<128x64xbf16>, vector<64x64xbf16>, vector<128x64xf32> -> vector<128x64xf32>
    %257 = arith.truncf %251 : vector<128x128xf32> to vector<128x128xbf16>
    %258 = arith.truncf %256 : vector<128x64xf32> to vector<128x64xbf16>
    %cst_156 = arith.constant dense<0.000000e+00> : vector<128x64xf32>
    %259 = tpu.matmul %257, %258, %cst_156 {dimension_numbers = #tpu.dot_dimension_numbers<[1], [0], [0], [1], [0, 0, 1, 1], [], []>} : vector<128x128xbf16>, vector<128x64xbf16>, vector<128x64xf32> -> vector<128x64xf32>
    %260 = arith.addf %249, %259 : vector<128x64xf32>
    %c1_157 = arith.constant 1 : index
    %c0_158 = arith.constant 0 : index
    %c0_159 = arith.constant 0 : index
    %261 = vector.load %arg7[%c1_157, %c0_158, %c0_159] : memref<9x128x128xf32, #tpu.memory_space<vmem>>, vector<1x128x128xf32>
    %262 = vector.shape_cast %261 : vector<1x128x128xf32> to vector<128x128xf32>
    %c1_160 = arith.constant 1 : index
    %c0_161 = arith.constant 0 : index
    %c0_162 = arith.constant 0 : index
    %263 = vector.load %arg10[%c1_160, %c0_161, %c0_162] : memref<9x64x64xf32, #tpu.memory_space<vmem>>, vector<1x64x64xf32>
    %264 = vector.shape_cast %263 : vector<1x64x64xf32> to vector<64x64xf32>
    %265 = arith.truncf %248 : vector<128x64xf32> to vector<128x64xbf16>
    %266 = arith.truncf %264 : vector<64x64xf32> to vector<64x64xbf16>
    %cst_163 = arith.constant dense<0.000000e+00> : vector<128x64xf32>
    %267 = tpu.matmul %265, %266, %cst_163 {dimension_numbers = #tpu.dot_dimension_numbers<[1], [0], [0], [1], [0, 0, 1, 1], [], []>} : vector<128x64xbf16>, vector<64x64xbf16>, vector<128x64xf32> -> vector<128x64xf32>
    %268 = arith.truncf %262 : vector<128x128xf32> to vector<128x128xbf16>
    %269 = arith.truncf %267 : vector<128x64xf32> to vector<128x64xbf16>
    %cst_164 = arith.constant dense<0.000000e+00> : vector<128x64xf32>
    %270 = tpu.matmul %268, %269, %cst_164 {dimension_numbers = #tpu.dot_dimension_numbers<[1], [0], [0], [1], [0, 0, 1, 1], [], []>} : vector<128x128xbf16>, vector<128x64xbf16>, vector<128x64xf32> -> vector<128x64xf32>
    %271 = arith.addf %260, %270 : vector<128x64xf32>
    %c2_165 = arith.constant 2 : index
    %c0_166 = arith.constant 0 : index
    %c0_167 = arith.constant 0 : index
    %272 = vector.load %arg7[%c2_165, %c0_166, %c0_167] : memref<9x128x128xf32, #tpu.memory_space<vmem>>, vector<1x128x128xf32>
    %273 = vector.shape_cast %272 : vector<1x128x128xf32> to vector<128x128xf32>
    %c2_168 = arith.constant 2 : index
    %c0_169 = arith.constant 0 : index
    %c0_170 = arith.constant 0 : index
    %274 = vector.load %arg10[%c2_168, %c0_169, %c0_170] : memref<9x64x64xf32, #tpu.memory_space<vmem>>, vector<1x64x64xf32>
    %275 = vector.shape_cast %274 : vector<1x64x64xf32> to vector<64x64xf32>
    %276 = arith.truncf %248 : vector<128x64xf32> to vector<128x64xbf16>
    %277 = arith.truncf %275 : vector<64x64xf32> to vector<64x64xbf16>
    %cst_171 = arith.constant dense<0.000000e+00> : vector<128x64xf32>
    %278 = tpu.matmul %276, %277, %cst_171 {dimension_numbers = #tpu.dot_dimension_numbers<[1], [0], [0], [1], [0, 0, 1, 1], [], []>} : vector<128x64xbf16>, vector<64x64xbf16>, vector<128x64xf32> -> vector<128x64xf32>
    %279 = arith.truncf %273 : vector<128x128xf32> to vector<128x128xbf16>
    %280 = arith.truncf %278 : vector<128x64xf32> to vector<128x64xbf16>
    %cst_172 = arith.constant dense<0.000000e+00> : vector<128x64xf32>
    %281 = tpu.matmul %279, %280, %cst_172 {dimension_numbers = #tpu.dot_dimension_numbers<[1], [0], [0], [1], [0, 0, 1, 1], [], []>} : vector<128x128xbf16>, vector<128x64xbf16>, vector<128x64xf32> -> vector<128x64xf32>
    %282 = arith.addf %271, %281 : vector<128x64xf32>
    %c3_173 = arith.constant 3 : index
    %c0_174 = arith.constant 0 : index
    %c0_175 = arith.constant 0 : index
    %283 = vector.load %arg7[%c3_173, %c0_174, %c0_175] : memref<9x128x128xf32, #tpu.memory_space<vmem>>, vector<1x128x128xf32>
    %284 = vector.shape_cast %283 : vector<1x128x128xf32> to vector<128x128xf32>
    %c3_176 = arith.constant 3 : index
    %c0_177 = arith.constant 0 : index
    %c0_178 = arith.constant 0 : index
    %285 = vector.load %arg10[%c3_176, %c0_177, %c0_178] : memref<9x64x64xf32, #tpu.memory_space<vmem>>, vector<1x64x64xf32>
    %286 = vector.shape_cast %285 : vector<1x64x64xf32> to vector<64x64xf32>
    %287 = arith.truncf %248 : vector<128x64xf32> to vector<128x64xbf16>
    %288 = arith.truncf %286 : vector<64x64xf32> to vector<64x64xbf16>
    %cst_179 = arith.constant dense<0.000000e+00> : vector<128x64xf32>
    %289 = tpu.matmul %287, %288, %cst_179 {dimension_numbers = #tpu.dot_dimension_numbers<[1], [0], [0], [1], [0, 0, 1, 1], [], []>} : vector<128x64xbf16>, vector<64x64xbf16>, vector<128x64xf32> -> vector<128x64xf32>
    %290 = arith.truncf %284 : vector<128x128xf32> to vector<128x128xbf16>
    %291 = arith.truncf %289 : vector<128x64xf32> to vector<128x64xbf16>
    %cst_180 = arith.constant dense<0.000000e+00> : vector<128x64xf32>
    %292 = tpu.matmul %290, %291, %cst_180 {dimension_numbers = #tpu.dot_dimension_numbers<[1], [0], [0], [1], [0, 0, 1, 1], [], []>} : vector<128x128xbf16>, vector<128x64xbf16>, vector<128x64xf32> -> vector<128x64xf32>
    %293 = arith.addf %282, %292 : vector<128x64xf32>
    %c4_181 = arith.constant 4 : index
    %c0_182 = arith.constant 0 : index
    %c0_183 = arith.constant 0 : index
    %294 = vector.load %arg7[%c4_181, %c0_182, %c0_183] : memref<9x128x128xf32, #tpu.memory_space<vmem>>, vector<1x128x128xf32>
    %295 = vector.shape_cast %294 : vector<1x128x128xf32> to vector<128x128xf32>
    %c4_184 = arith.constant 4 : index
    %c0_185 = arith.constant 0 : index
    %c0_186 = arith.constant 0 : index
    %296 = vector.load %arg10[%c4_184, %c0_185, %c0_186] : memref<9x64x64xf32, #tpu.memory_space<vmem>>, vector<1x64x64xf32>
    %297 = vector.shape_cast %296 : vector<1x64x64xf32> to vector<64x64xf32>
    %298 = arith.truncf %248 : vector<128x64xf32> to vector<128x64xbf16>
    %299 = arith.truncf %297 : vector<64x64xf32> to vector<64x64xbf16>
    %cst_187 = arith.constant dense<0.000000e+00> : vector<128x64xf32>
    %300 = tpu.matmul %298, %299, %cst_187 {dimension_numbers = #tpu.dot_dimension_numbers<[1], [0], [0], [1], [0, 0, 1, 1], [], []>} : vector<128x64xbf16>, vector<64x64xbf16>, vector<128x64xf32> -> vector<128x64xf32>
    %301 = arith.truncf %295 : vector<128x128xf32> to vector<128x128xbf16>
    %302 = arith.truncf %300 : vector<128x64xf32> to vector<128x64xbf16>
    %cst_188 = arith.constant dense<0.000000e+00> : vector<128x64xf32>
    %303 = tpu.matmul %301, %302, %cst_188 {dimension_numbers = #tpu.dot_dimension_numbers<[1], [0], [0], [1], [0, 0, 1, 1], [], []>} : vector<128x128xbf16>, vector<128x64xbf16>, vector<128x64xf32> -> vector<128x64xf32>
    %304 = arith.addf %293, %303 : vector<128x64xf32>
    %c5_189 = arith.constant 5 : index
    %c0_190 = arith.constant 0 : index
    %c0_191 = arith.constant 0 : index
    %305 = vector.load %arg7[%c5_189, %c0_190, %c0_191] : memref<9x128x128xf32, #tpu.memory_space<vmem>>, vector<1x128x128xf32>
    %306 = vector.shape_cast %305 : vector<1x128x128xf32> to vector<128x128xf32>
    %c5_192 = arith.constant 5 : index
    %c0_193 = arith.constant 0 : index
    %c0_194 = arith.constant 0 : index
    %307 = vector.load %arg10[%c5_192, %c0_193, %c0_194] : memref<9x64x64xf32, #tpu.memory_space<vmem>>, vector<1x64x64xf32>
    %308 = vector.shape_cast %307 : vector<1x64x64xf32> to vector<64x64xf32>
    %309 = arith.truncf %248 : vector<128x64xf32> to vector<128x64xbf16>
    %310 = arith.truncf %308 : vector<64x64xf32> to vector<64x64xbf16>
    %cst_195 = arith.constant dense<0.000000e+00> : vector<128x64xf32>
    %311 = tpu.matmul %309, %310, %cst_195 {dimension_numbers = #tpu.dot_dimension_numbers<[1], [0], [0], [1], [0, 0, 1, 1], [], []>} : vector<128x64xbf16>, vector<64x64xbf16>, vector<128x64xf32> -> vector<128x64xf32>
    %312 = arith.truncf %306 : vector<128x128xf32> to vector<128x128xbf16>
    %313 = arith.truncf %311 : vector<128x64xf32> to vector<128x64xbf16>
    %cst_196 = arith.constant dense<0.000000e+00> : vector<128x64xf32>
    %314 = tpu.matmul %312, %313, %cst_196 {dimension_numbers = #tpu.dot_dimension_numbers<[1], [0], [0], [1], [0, 0, 1, 1], [], []>} : vector<128x128xbf16>, vector<128x64xbf16>, vector<128x64xf32> -> vector<128x64xf32>
    %315 = arith.addf %304, %314 : vector<128x64xf32>
    %c6_197 = arith.constant 6 : index
    %c0_198 = arith.constant 0 : index
    %c0_199 = arith.constant 0 : index
    %316 = vector.load %arg7[%c6_197, %c0_198, %c0_199] : memref<9x128x128xf32, #tpu.memory_space<vmem>>, vector<1x128x128xf32>
    %317 = vector.shape_cast %316 : vector<1x128x128xf32> to vector<128x128xf32>
    %c6_200 = arith.constant 6 : index
    %c0_201 = arith.constant 0 : index
    %c0_202 = arith.constant 0 : index
    %318 = vector.load %arg10[%c6_200, %c0_201, %c0_202] : memref<9x64x64xf32, #tpu.memory_space<vmem>>, vector<1x64x64xf32>
    %319 = vector.shape_cast %318 : vector<1x64x64xf32> to vector<64x64xf32>
    %320 = arith.truncf %248 : vector<128x64xf32> to vector<128x64xbf16>
    %321 = arith.truncf %319 : vector<64x64xf32> to vector<64x64xbf16>
    %cst_203 = arith.constant dense<0.000000e+00> : vector<128x64xf32>
    %322 = tpu.matmul %320, %321, %cst_203 {dimension_numbers = #tpu.dot_dimension_numbers<[1], [0], [0], [1], [0, 0, 1, 1], [], []>} : vector<128x64xbf16>, vector<64x64xbf16>, vector<128x64xf32> -> vector<128x64xf32>
    %323 = arith.truncf %317 : vector<128x128xf32> to vector<128x128xbf16>
    %324 = arith.truncf %322 : vector<128x64xf32> to vector<128x64xbf16>
    %cst_204 = arith.constant dense<0.000000e+00> : vector<128x64xf32>
    %325 = tpu.matmul %323, %324, %cst_204 {dimension_numbers = #tpu.dot_dimension_numbers<[1], [0], [0], [1], [0, 0, 1, 1], [], []>} : vector<128x128xbf16>, vector<128x64xbf16>, vector<128x64xf32> -> vector<128x64xf32>
    %326 = arith.addf %315, %325 : vector<128x64xf32>
    %c7_205 = arith.constant 7 : index
    %c0_206 = arith.constant 0 : index
    %c0_207 = arith.constant 0 : index
    %327 = vector.load %arg7[%c7_205, %c0_206, %c0_207] : memref<9x128x128xf32, #tpu.memory_space<vmem>>, vector<1x128x128xf32>
    %328 = vector.shape_cast %327 : vector<1x128x128xf32> to vector<128x128xf32>
    %c7_208 = arith.constant 7 : index
    %c0_209 = arith.constant 0 : index
    %c0_210 = arith.constant 0 : index
    %329 = vector.load %arg10[%c7_208, %c0_209, %c0_210] : memref<9x64x64xf32, #tpu.memory_space<vmem>>, vector<1x64x64xf32>
    %330 = vector.shape_cast %329 : vector<1x64x64xf32> to vector<64x64xf32>
    %331 = arith.truncf %248 : vector<128x64xf32> to vector<128x64xbf16>
    %332 = arith.truncf %330 : vector<64x64xf32> to vector<64x64xbf16>
    %cst_211 = arith.constant dense<0.000000e+00> : vector<128x64xf32>
    %333 = tpu.matmul %331, %332, %cst_211 {dimension_numbers = #tpu.dot_dimension_numbers<[1], [0], [0], [1], [0, 0, 1, 1], [], []>} : vector<128x64xbf16>, vector<64x64xbf16>, vector<128x64xf32> -> vector<128x64xf32>
    %334 = arith.truncf %328 : vector<128x128xf32> to vector<128x128xbf16>
    %335 = arith.truncf %333 : vector<128x64xf32> to vector<128x64xbf16>
    %cst_212 = arith.constant dense<0.000000e+00> : vector<128x64xf32>
    %336 = tpu.matmul %334, %335, %cst_212 {dimension_numbers = #tpu.dot_dimension_numbers<[1], [0], [0], [1], [0, 0, 1, 1], [], []>} : vector<128x128xbf16>, vector<128x64xbf16>, vector<128x64xf32> -> vector<128x64xf32>
    %337 = arith.addf %326, %336 : vector<128x64xf32>
    %c8_213 = arith.constant 8 : index
    %c0_214 = arith.constant 0 : index
    %c0_215 = arith.constant 0 : index
    %338 = vector.load %arg7[%c8_213, %c0_214, %c0_215] : memref<9x128x128xf32, #tpu.memory_space<vmem>>, vector<1x128x128xf32>
    %339 = vector.shape_cast %338 : vector<1x128x128xf32> to vector<128x128xf32>
    %c8_216 = arith.constant 8 : index
    %c0_217 = arith.constant 0 : index
    %c0_218 = arith.constant 0 : index
    %340 = vector.load %arg10[%c8_216, %c0_217, %c0_218] : memref<9x64x64xf32, #tpu.memory_space<vmem>>, vector<1x64x64xf32>
    %341 = vector.shape_cast %340 : vector<1x64x64xf32> to vector<64x64xf32>
    %342 = arith.truncf %248 : vector<128x64xf32> to vector<128x64xbf16>
    %343 = arith.truncf %341 : vector<64x64xf32> to vector<64x64xbf16>
    %cst_219 = arith.constant dense<0.000000e+00> : vector<128x64xf32>
    %344 = tpu.matmul %342, %343, %cst_219 {dimension_numbers = #tpu.dot_dimension_numbers<[1], [0], [0], [1], [0, 0, 1, 1], [], []>} : vector<128x64xbf16>, vector<64x64xbf16>, vector<128x64xf32> -> vector<128x64xf32>
    %345 = arith.truncf %339 : vector<128x128xf32> to vector<128x128xbf16>
    %346 = arith.truncf %344 : vector<128x64xf32> to vector<128x64xbf16>
    %cst_220 = arith.constant dense<0.000000e+00> : vector<128x64xf32>
    %347 = tpu.matmul %345, %346, %cst_220 {dimension_numbers = #tpu.dot_dimension_numbers<[1], [0], [0], [1], [0, 0, 1, 1], [], []>} : vector<128x128xbf16>, vector<128x64xbf16>, vector<128x64xf32> -> vector<128x64xf32>
    %348 = arith.addf %337, %347 : vector<128x64xf32>
    %c0_221 = arith.constant 0 : index
    %c0_222 = arith.constant 0 : index
    %349 = vector.load %arg11[%c0_221, %c0_222] : memref<1x64xf32, #tpu.memory_space<vmem>>, vector<1x64xf32>
    %350 = vector.broadcast %349 : vector<1x64xf32> to vector<128x64xf32>
    %351 = arith.addf %348, %350 : vector<128x64xf32>
    %c0_223 = arith.constant 0 : index
    %c0_224 = arith.constant 0 : index
    %352 = vector.load %arg12[%c0_223, %c0_224] : memref<8x128xf32, #tpu.memory_space<vmem>>, vector<8x128xf32>
    %353 = arith.truncf %352 : vector<8x128xf32> to vector<8x128xbf16>
    %354 = arith.truncf %351 : vector<128x64xf32> to vector<128x64xbf16>
    %cst_225 = arith.constant dense<0.000000e+00> : vector<8x64xf32>
    %355 = tpu.matmul %353, %354, %cst_225 {dimension_numbers = #tpu.dot_dimension_numbers<[1], [0], [0], [1], [0, 0, 1, 1], [], []>} : vector<8x128xbf16>, vector<128x64xbf16>, vector<8x64xf32> -> vector<8x64xf32>
    %c0_226 = arith.constant 0 : index
    %c0_227 = arith.constant 0 : index
    %356 = vector.load %arg13[%c0_226, %c0_227] : memref<16x8xf32, #tpu.memory_space<vmem>>, vector<16x8xf32>
    %357 = arith.truncf %356 : vector<16x8xf32> to vector<16x8xbf16>
    %358 = arith.truncf %355 : vector<8x64xf32> to vector<8x64xbf16>
    %cst_228 = arith.constant dense<0.000000e+00> : vector<16x64xf32>
    %359 = tpu.matmul %357, %358, %cst_228 {dimension_numbers = #tpu.dot_dimension_numbers<[1], [0], [0], [1], [0, 0, 1, 1], [], []>} : vector<16x8xbf16>, vector<8x64xbf16>, vector<16x64xf32> -> vector<16x64xf32>
    %c0_229 = arith.constant 0 : index
    %c0_230 = arith.constant 0 : index
    %360 = vector.load %arg15[%c0_229, %c0_230] : memref<64x128xf32, #tpu.memory_space<vmem>>, vector<64x128xf32>
    %361 = arith.truncf %359 : vector<16x64xf32> to vector<16x64xbf16>
    %362 = arith.truncf %360 : vector<64x128xf32> to vector<64x128xbf16>
    %cst_231 = arith.constant dense<0.000000e+00> : vector<16x128xf32>
    %363 = tpu.matmul %361, %362, %cst_231 {dimension_numbers = #tpu.dot_dimension_numbers<[1], [0], [0], [1], [0, 0, 1, 1], [], []>} : vector<16x64xbf16>, vector<64x128xbf16>, vector<16x128xf32> -> vector<16x128xf32>
    %c0_232 = arith.constant 0 : index
    %c0_233 = arith.constant 0 : index
    %364 = vector.load %arg16[%c0_232, %c0_233] : memref<1x128xf32, #tpu.memory_space<vmem>>, vector<1x128xf32>
    %365 = vector.broadcast %364 : vector<1x128xf32> to vector<16x128xf32>
    %366 = arith.addf %363, %365 : vector<16x128xf32>
    %cst_234 = arith.constant 0.000000e+00 : f32
    %367 = vector.broadcast %cst_234 : f32 to vector<16x128xf32>
    %368 = arith.maximumf %366, %367 : vector<16x128xf32>
    %369 = arith.addf %129, %368 : vector<16x128xf32>
    %c0_235 = arith.constant 0 : index
    %c0_236 = arith.constant 0 : index
    %370 = vector.load %arg14[%c0_235, %c0_236] : memref<8x16xf32, #tpu.memory_space<vmem>>, vector<8x16xf32>
    %371 = arith.truncf %370 : vector<8x16xf32> to vector<8x16xbf16>
    %372 = arith.truncf %369 : vector<16x128xf32> to vector<16x128xbf16>
    %cst_237 = arith.constant dense<0.000000e+00> : vector<8x128xf32>
    %373 = tpu.matmul %371, %372, %cst_237 {dimension_numbers = #tpu.dot_dimension_numbers<[1], [0], [0], [1], [0, 0, 1, 1], [], []>} : vector<8x16xbf16>, vector<16x128xbf16>, vector<8x128xf32> -> vector<8x128xf32>
    %c0_238 = arith.constant 0 : index
    %c0_239 = arith.constant 0 : index
    %374 = vector.load %arg17[%c0_238, %c0_239] : memref<128x64xf32, #tpu.memory_space<vmem>>, vector<128x64xf32>
    %375 = arith.truncf %373 : vector<8x128xf32> to vector<8x128xbf16>
    %376 = arith.truncf %374 : vector<128x64xf32> to vector<128x64xbf16>
    %cst_240 = arith.constant dense<0.000000e+00> : vector<8x64xf32>
    %377 = tpu.matmul %375, %376, %cst_240 {dimension_numbers = #tpu.dot_dimension_numbers<[1], [0], [0], [1], [0, 0, 1, 1], [], []>} : vector<8x128xbf16>, vector<128x64xbf16>, vector<8x64xf32> -> vector<8x64xf32>
    %c0_241 = arith.constant 0 : index
    %c0_242 = arith.constant 0 : index
    %378 = vector.load %arg18[%c0_241, %c0_242] : memref<1x64xf32, #tpu.memory_space<vmem>>, vector<1x64xf32>
    %379 = vector.broadcast %378 : vector<1x64xf32> to vector<8x64xf32>
    %380 = arith.addf %377, %379 : vector<8x64xf32>
    %cst_243 = arith.constant 0.000000e+00 : f32
    %381 = vector.broadcast %cst_243 : f32 to vector<8x64xf32>
    %382 = arith.maximumf %380, %381 : vector<8x64xf32>
    %383 = arith.addf %355, %382 : vector<8x64xf32>
    %c0_244 = arith.constant 0 : index
    %c0_245 = arith.constant 0 : index
    %384 = vector.load %arg19[%c0_244, %c0_245] : memref<16x16xf32, #tpu.memory_space<vmem>>, vector<16x16xf32>
    %385 = arith.truncf %384 : vector<16x16xf32> to vector<16x16xbf16>
    %386 = arith.truncf %369 : vector<16x128xf32> to vector<16x128xbf16>
    %cst_246 = arith.constant dense<0.000000e+00> : vector<16x128xf32>
    %387 = tpu.matmul %385, %386, %cst_246 {dimension_numbers = #tpu.dot_dimension_numbers<[1], [0], [0], [1], [0, 0, 1, 1], [], []>} : vector<16x16xbf16>, vector<16x128xbf16>, vector<16x128xf32> -> vector<16x128xf32>
    %c0_247 = arith.constant 0 : index
    %c0_248 = arith.constant 0 : index
    %388 = vector.load %arg22[%c0_247, %c0_248] : memref<128x128xf32, #tpu.memory_space<vmem>>, vector<128x128xf32>
    %389 = arith.truncf %387 : vector<16x128xf32> to vector<16x128xbf16>
    %390 = arith.truncf %388 : vector<128x128xf32> to vector<128x128xbf16>
    %cst_249 = arith.constant dense<0.000000e+00> : vector<16x128xf32>
    %391 = tpu.matmul %389, %390, %cst_249 {dimension_numbers = #tpu.dot_dimension_numbers<[1], [0], [0], [1], [0, 0, 1, 1], [], []>} : vector<16x128xbf16>, vector<128x128xbf16>, vector<16x128xf32> -> vector<16x128xf32>
    %c0_250 = arith.constant 0 : index
    %c0_251 = arith.constant 0 : index
    %392 = vector.load %arg20[%c0_250, %c0_251] : memref<16x16xf32, #tpu.memory_space<vmem>>, vector<16x16xf32>
    %393 = arith.truncf %392 : vector<16x16xf32> to vector<16x16xbf16>
    %394 = arith.truncf %369 : vector<16x128xf32> to vector<16x128xbf16>
    %cst_252 = arith.constant dense<0.000000e+00> : vector<16x128xf32>
    %395 = tpu.matmul %393, %394, %cst_252 {dimension_numbers = #tpu.dot_dimension_numbers<[1], [0], [0], [1], [0, 0, 1, 1], [], []>} : vector<16x16xbf16>, vector<16x128xbf16>, vector<16x128xf32> -> vector<16x128xf32>
    %c0_253 = arith.constant 0 : index
    %c0_254 = arith.constant 0 : index
    %396 = vector.load %arg23[%c0_253, %c0_254] : memref<128x128xf32, #tpu.memory_space<vmem>>, vector<128x128xf32>
    %397 = arith.truncf %395 : vector<16x128xf32> to vector<16x128xbf16>
    %398 = arith.truncf %396 : vector<128x128xf32> to vector<128x128xbf16>
    %cst_255 = arith.constant dense<0.000000e+00> : vector<16x128xf32>
    %399 = tpu.matmul %397, %398, %cst_255 {dimension_numbers = #tpu.dot_dimension_numbers<[1], [0], [0], [1], [0, 0, 1, 1], [], []>} : vector<16x128xbf16>, vector<128x128xbf16>, vector<16x128xf32> -> vector<16x128xf32>
    %400 = arith.addf %391, %399 : vector<16x128xf32>
    %c0_256 = arith.constant 0 : index
    %c0_257 = arith.constant 0 : index
    %401 = vector.load %arg21[%c0_256, %c0_257] : memref<16x8xf32, #tpu.memory_space<vmem>>, vector<16x8xf32>
    %402 = arith.truncf %401 : vector<16x8xf32> to vector<16x8xbf16>
    %403 = arith.truncf %383 : vector<8x64xf32> to vector<8x64xbf16>
    %cst_258 = arith.constant dense<0.000000e+00> : vector<16x64xf32>
    %404 = tpu.matmul %402, %403, %cst_258 {dimension_numbers = #tpu.dot_dimension_numbers<[1], [0], [0], [1], [0, 0, 1, 1], [], []>} : vector<16x8xbf16>, vector<8x64xbf16>, vector<16x64xf32> -> vector<16x64xf32>
    %c0_259 = arith.constant 0 : index
    %c0_260 = arith.constant 0 : index
    %405 = vector.load %arg24[%c0_259, %c0_260] : memref<64x128xf32, #tpu.memory_space<vmem>>, vector<64x128xf32>
    %406 = arith.truncf %404 : vector<16x64xf32> to vector<16x64xbf16>
    %407 = arith.truncf %405 : vector<64x128xf32> to vector<64x128xbf16>
    %cst_261 = arith.constant dense<0.000000e+00> : vector<16x128xf32>
    %408 = tpu.matmul %406, %407, %cst_261 {dimension_numbers = #tpu.dot_dimension_numbers<[1], [0], [0], [1], [0, 0, 1, 1], [], []>} : vector<16x64xbf16>, vector<64x128xbf16>, vector<16x128xf32> -> vector<16x128xf32>
    %409 = arith.addf %400, %408 : vector<16x128xf32>
    %c0_262 = arith.constant 0 : index
    %c0_263 = arith.constant 0 : index
    %410 = vector.load %arg25[%c0_262, %c0_263] : memref<1x128xf32, #tpu.memory_space<vmem>>, vector<1x128xf32>
    %411 = vector.broadcast %410 : vector<1x128xf32> to vector<16x128xf32>
    %412 = arith.addf %409, %411 : vector<16x128xf32>
    %cst_264 = arith.constant 0.000000e+00 : f32
    %413 = vector.broadcast %cst_264 : f32 to vector<16x128xf32>
    %414 = arith.maximumf %369, %413 : vector<16x128xf32>
    %c0_265 = arith.constant 0 : index
    %c0_266 = arith.constant 0 : index
    %415 = vector.load %arg26[%c0_265, %c0_266] : memref<128x128xf32, #tpu.memory_space<vmem>>, vector<128x128xf32>
    %416 = arith.truncf %414 : vector<16x128xf32> to vector<16x128xbf16>
    %417 = arith.truncf %415 : vector<128x128xf32> to vector<128x128xbf16>
    %cst_267 = arith.constant dense<0.000000e+00> : vector<16x128xf32>
    %418 = tpu.matmul %416, %417, %cst_267 {dimension_numbers = #tpu.dot_dimension_numbers<[1], [0], [0], [1], [0, 0, 1, 1], [], []>} : vector<16x128xbf16>, vector<128x128xbf16>, vector<16x128xf32> -> vector<16x128xf32>
    %c0_268 = arith.constant 0 : index
    %c0_269 = arith.constant 0 : index
    %419 = vector.load %arg27[%c0_268, %c0_269] : memref<1x128xf32, #tpu.memory_space<vmem>>, vector<1x128xf32>
    %420 = vector.broadcast %419 : vector<1x128xf32> to vector<16x128xf32>
    %421 = arith.addf %418, %420 : vector<16x128xf32>
    %cst_270 = arith.constant dense<0xFF800000> : vector<16xf32>
    %422 = vector.multi_reduction <maximumf>, %421, %cst_270 [1] : vector<16x128xf32> to vector<16xf32>
    %423 = vector.shape_cast %422 : vector<16xf32> to vector<16x1xf32>
    %424 = vector.broadcast %423 : vector<16x1xf32> to vector<16x128xf32>
    %425 = arith.subf %421, %424 : vector<16x128xf32>
    %426 = math.exp %425 : vector<16x128xf32>
    %cst_271 = arith.constant dense<0.000000e+00> : vector<16xf32>
    %427 = vector.multi_reduction <add>, %426, %cst_271 [1] : vector<16x128xf32> to vector<16xf32>
    %428 = vector.shape_cast %427 : vector<16xf32> to vector<16x1xf32>
    %429 = tpu.reciprocal %428 {approx = true} : vector<16x1xf32> -> vector<16x1xf32>
    %430 = vector.broadcast %429 : vector<16x1xf32> to vector<16x128xf32>
    %431 = arith.mulf %426, %430 : vector<16x128xf32>
    %c0_272 = arith.constant 0 : index
    %c0_273 = arith.constant 0 : index
    %432 = vector.load %arg32[%c0_272, %c0_273] : memref<16x128xf32, #tpu.memory_space<vmem>>, vector<16x128xf32>
    tpu.vector_store %arg32[%c0_272, %c0_273], %431 {strides = array<i32>} : memref<16x128xf32, #tpu.memory_space<vmem>>, vector<16x128xf32>,
    %cst_274 = arith.constant 0.000000e+00 : f32
    %433 = vector.broadcast %cst_274 : f32 to vector<16x128xf32>
    %434 = arith.maximumf %412, %433 : vector<16x128xf32>
    %c0_275 = arith.constant 0 : index
    %c0_276 = arith.constant 0 : index
    %435 = vector.load %arg30[%c0_275, %c0_276] : memref<128x128xf32, #tpu.memory_space<vmem>>, vector<128x128xf32>
    %436 = arith.truncf %434 : vector<16x128xf32> to vector<16x128xbf16>
    %437 = arith.truncf %435 : vector<128x128xf32> to vector<128x128xbf16>
    %cst_277 = arith.constant dense<0.000000e+00> : vector<16x128xf32>
    %438 = tpu.matmul %436, %437, %cst_277 {dimension_numbers = #tpu.dot_dimension_numbers<[1], [0], [0], [1], [0, 0, 1, 1], [], []>} : vector<16x128xbf16>, vector<128x128xbf16>, vector<16x128xf32> -> vector<16x128xf32>
    %c0_278 = arith.constant 0 : index
    %c0_279 = arith.constant 0 : index
    %439 = vector.load %arg31[%c0_278, %c0_279] : memref<1x128xf32, #tpu.memory_space<vmem>>, vector<1x128xf32>
    %440 = vector.broadcast %439 : vector<1x128xf32> to vector<16x128xf32>
    %441 = arith.addf %438, %440 : vector<16x128xf32>
    %cst_280 = arith.constant dense<0xFF800000> : vector<16xf32>
    %442 = vector.multi_reduction <maximumf>, %441, %cst_280 [1] : vector<16x128xf32> to vector<16xf32>
    %443 = vector.shape_cast %442 : vector<16xf32> to vector<16x1xf32>
    %444 = vector.broadcast %443 : vector<16x1xf32> to vector<16x128xf32>
    %445 = arith.subf %441, %444 : vector<16x128xf32>
    %446 = math.exp %445 : vector<16x128xf32>
    %cst_281 = arith.constant dense<0.000000e+00> : vector<16xf32>
    %447 = vector.multi_reduction <add>, %446, %cst_281 [1] : vector<16x128xf32> to vector<16xf32>
    %448 = vector.shape_cast %447 : vector<16xf32> to vector<16x1xf32>
    %449 = tpu.reciprocal %448 {approx = true} : vector<16x1xf32> -> vector<16x1xf32>
    %450 = vector.broadcast %449 : vector<16x1xf32> to vector<16x128xf32>
    %451 = arith.mulf %446, %450 : vector<16x128xf32>
    %c0_282 = arith.constant 0 : index
    %c0_283 = arith.constant 0 : index
    %452 = vector.load %arg34[%c0_282, %c0_283] : memref<16x128xf32, #tpu.memory_space<vmem>>, vector<16x128xf32>
    tpu.vector_store %arg34[%c0_282, %c0_283], %451 {strides = array<i32>} : memref<16x128xf32, #tpu.memory_space<vmem>>, vector<16x128xf32>,
    return
  }
}

</mosaic_0001>

<llo_original>
// kernel: mul.11
$region0: #{mul.11}
  %s0 = inlined_call_operand.vmem [shape: f32[4,4,4,4], index: 0, kind: input, shape index: {}]
  %s1 = inlined_call_operand.vmem [shape: f32[16,16], index: 1, kind: output, shape index: {}]
  $region1: #{mul.11} parent=0
    #allocation0 [shape = 'u8[65536]{0}', space=vmem, size = 0x10000, scoped, tag = 'scoped mem for input reshape']
    %s3 = ssub.s32 16, 1
    %s4 = scalar_lea.vmem %s0, 60
    %v5 = vld [vmem:[%s4] sm:%s3]
    %s6 = scalar_lea.vmem [#allocation0], 120
    %7 = vst [vmem:[%s6] sm:%s3] %v5
    %s8 = scalar_lea.vmem %s0, 56
    %v9 = vld [vmem:[%s8] sm:%s3]
    %s10 = scalar_lea.vmem [#allocation0], 112
    %11 = vst [vmem:[%s10] sm:%s3] %v9
    %s12 = scalar_lea.vmem %s0, 52
    %v13 = vld [vmem:[%s12] sm:%s3]
    %s14 = scalar_lea.vmem [#allocation0], 104
    %15 = vst [vmem:[%s14] sm:%s3] %v13
    %s16 = scalar_lea.vmem %s0, 48
    %v17 = vld [vmem:[%s16] sm:%s3]
    %s18 = scalar_lea.vmem [#allocation0], 96
    %19 = vst [vmem:[%s18] sm:%s3] %v17
    %s20 = scalar_lea.vmem %s0, 44
    %v21 = vld [vmem:[%s20] sm:%s3]
    %s22 = scalar_lea.vmem [#allocation0], 88
    %23 = vst [vmem:[%s22] sm:%s3] %v21
    %s24 = scalar_lea.vmem %s0, 40
    %v25 = vld [vmem:[%s24] sm:%s3]
    %s26 = scalar_lea.vmem [#allocation0], 80
    %27 = vst [vmem:[%s26] sm:%s3] %v25
    %s28 = scalar_lea.vmem %s0, 36
    %v29 = vld [vmem:[%s28] sm:%s3]
    %s30 = scalar_lea.vmem [#allocation0], 72
    %31 = vst [vmem:[%s30] sm:%s3] %v29
    %s32 = scalar_lea.vmem %s0, 32
    %v33 = vld [vmem:[%s32] sm:%s3]
    %s34 = scalar_lea.vmem [#allocation0], 64
    %35 = vst [vmem:[%s34] sm:%s3] %v33
    %s36 = scalar_lea.vmem %s0, 28
    %v37 = vld [vmem:[%s36] sm:%s3]
    %s38 = scalar_lea.vmem [#allocation0], 56
    %39 = vst [vmem:[%s38] sm:%s3] %v37
    %s40 = scalar_lea.vmem %s0, 24
    %v41 = vld [vmem:[%s40] sm:%s3]
    %s42 = scalar_lea.vmem [#allocation0], 48
    %43 = vst [vmem:[%s42] sm:%s3] %v41
    %s44 = scalar_lea.vmem %s0, 20
    %v45 = vld [vmem:[%s44] sm:%s3]
    %s46 = scalar_lea.vmem [#allocation0], 40
    %47 = vst [vmem:[%s46] sm:%s3] %v45
    %s48 = scalar_lea.vmem %s0, 16
    %v49 = vld [vmem:[%s48] sm:%s3]
    %s50 = scalar_lea.vmem [#allocation0], 32
    %51 = vst [vmem:[%s50] sm:%s3] %v49
    %s52 = scalar_lea.vmem %s0, 12
    %v53 = vld [vmem:[%s52] sm:%s3]
    %s54 = scalar_lea.vmem [#allocation0], 24
    %55 = vst [vmem:[%s54] sm:%s3] %v53
    %s56 = scalar_lea.vmem %s0, 8
    %v57 = vld [vmem:[%s56] sm:%s3]
    %s58 = scalar_lea.vmem [#allocation0], 16
    %59 = vst [vmem:[%s58] sm:%s3] %v57
    %s60 = scalar_lea.vmem %s0, 4
    %v61 = vld [vmem:[%s60] sm:%s3]
    %s62 = scalar_lea.vmem [#allocation0], 8
    %63 = vst [vmem:[%s62] sm:%s3] %v61
    %v64 = vld [vmem:[%s0] sm:%s3]
    %65 = vst [vmem:[#allocation0] sm:%s3] %v64
    %v66 = vld [vmem:[#allocation0] ss:$8 sm:$0xf]
    %v67 = vld [vmem:[#allocation0] ss:$8 sm:$0xf0]
    %vm68 = vcmask 1047556
    %v69 = vsel %vm68, %v67, %v66
    %vm70 = vcmask 31744
    %71 = vst.msk [vmem:[%s1] sm:$0xff] %vm70, %v69
    %s72 = scalar_lea.vmem [#allocation0], 64
    %v73 = vld [vmem:[%s72] ss:$8 sm:$0xf]
    %s74 = scalar_lea.vmem [#allocation0], 64
    %v75 = vld [vmem:[%s74] ss:$8 sm:$0xf0]
    %vm76 = vcmask 1047556
    %v77 = vsel %vm76, %v75, %v73
    %vm78 = vcmask 31744
    %s79 = scalar_lea.vmem %s1, 8
    %80 = vst.msk [vmem:[%s79] sm:$0xff] %vm78, %v77
    %s81 = scalar_lea.vmem [#allocation0], 3
    %v82 = vld [vmem:[%s81] ss:$8 sm:$0xf]
    %s83 = scalar_lea.vmem [#allocation0], 3
    %v84 = vld [vmem:[%s83] ss:$8 sm:$0xf0]
    %vm85 = vcmask 1047556
    %v86 = vsel %vm85, %v84, %v82
    %87 = vrot.lane.b32.xlu0 %v86, 12
    %v88 = vpop.permute.xlu0 %87
    %vm89 = vcmask 130144
    %90 = vst.msk [vmem:[%s1] sm:$0xff] %vm89, %v88
    %s91 = scalar_lea.vmem [#allocation0], 67
    %v92 = vld [vmem:[%s91] ss:$8 sm:$0xf]
    %s93 = scalar_lea.vmem [#allocation0], 67
    %v94 = vld [vmem:[%s93] ss:$8 sm:$0xf0]
    %vm95 = vcmask 1047556
    %v96 = vsel %vm95, %v94, %v92
    %97 = vrot.lane.b32.xlu0 %v96, 12
    %v98 = vpop.permute.xlu0 %97
    %vm99 = vcmask 130144
    %s100 = scalar_lea.vmem %s1, 8
    %101 = vst.msk [vmem:[%s100] sm:$0xff] %vm99, %v98
    %s102 = scalar_lea.vmem [#allocation0], 2
    %v103 = vld [vmem:[%s102] ss:$8 sm:$0xf]
    %s104 = scalar_lea.vmem [#allocation0], 2
    %v105 = vld [vmem:[%s104] ss:$8 sm:$0xf0]
    %vm106 = vcmask 1047556
    %v107 = vsel %vm106, %v105, %v103
    %108 = vrot.lane.b32.xlu0 %v107, 8
    %v109 = vpop.permute.xlu0 %108
    %vm110 = vcmask 97344
    %111 = vst.msk [vmem:[%s1] sm:$0xff] %vm110, %v109
    %s112 = scalar_lea.vmem [#allocation0], 66
    %v113 = vld [vmem:[%s112] ss:$8 sm:$0xf]
    %s114 = scalar_lea.vmem [#allocation0], 66
    %v115 = vld [vmem:[%s114] ss:$8 sm:$0xf0]
    %vm116 = vcmask 1047556
    %v117 = vsel %vm116, %v115, %v113
    %118 = vrot.lane.b32.xlu0 %v117, 8
    %v119 = vpop.permute.xlu0 %118
    %vm120 = vcmask 97344
    %s121 = scalar_lea.vmem %s1, 8
    %122 = vst.msk [vmem:[%s121] sm:$0xff] %vm120, %v119
    %s123 = scalar_lea.vmem [#allocation0], 1
    %v124 = vld [vmem:[%s123] ss:$8 sm:$0xf]
    %s125 = scalar_lea.vmem [#allocation0], 1
    %v126 = vld [vmem:[%s125] ss:$8 sm:$0xf0]
    %vm127 = vcmask 1047556
    %v128 = vsel %vm127, %v126, %v124
    %129 = vrot.lane.b32.xlu0 %v128, 4
    %v130 = vpop.permute.xlu0 %129
    %vm131 = vcmask 64544
    %132 = vst.msk [vmem:[%s1] sm:$0xff] %vm131, %v130
    %s133 = scalar_lea.vmem [#allocation0], 65
    %v134 = vld [vmem:[%s133] ss:$8 sm:$0xf]
    %s135 = scalar_lea.vmem [#allocation0], 65
    %v136 = vld [vmem:[%s135] ss:$8 sm:$0xf0]
    %vm137 = vcmask 1047556
    %v138 = vsel %vm137, %v136, %v134
    %139 = vrot.lane.b32.xlu0 %v138, 4
    %v140 = vpop.permute.xlu0 %139
    %vm141 = vcmask 64544
    %s142 = scalar_lea.vmem %s1, 8
    %143 = vst.msk [vmem:[%s142] sm:$0xff] %vm141, %v140

// kernel: factorizable_network_forward_eval.1
$region0: #{factorizable_network_forward_eval.1}
  #allocation0 [shape = 'u32[]', space=smem, size = 0x4, offset = 0x4, fixed_abs, tag = 'smem constant byte address 0x4 - core index']
  #allocation1 [shape = 'u32[72,128]{1,0:T(1,128)}', space=vmem, size = 0x9000, scoped, tag = 'internal scratch']
  %s0 = inlined_call_operand.smem [shape: u32[35], index: -1, kind: input, shape index: {}]
  %s1 = sld [smem:[%s0]]
  %s2 = scalar_lea.smem %s0, 1
  %s3 = sld [smem:[%s2]]
  %s4 = scalar_lea.smem %s0, 2
  %s5 = sld [smem:[%s4]]
  %s6 = scalar_lea.smem %s0, 3
  %s7 = sld [smem:[%s6]]
  %s8 = scalar_lea.smem %s0, 4
  %s9 = sld [smem:[%s8]]
  %s10 = scalar_lea.smem %s0, 5
  %s11 = sld [smem:[%s10]]
  %s12 = scalar_lea.smem %s0, 6
  %s13 = sld [smem:[%s12]]
  %s14 = scalar_lea.smem %s0, 7
  %s15 = sld [smem:[%s14]]
  %s16 = scalar_lea.smem %s0, 8
  %s17 = sld [smem:[%s16]]
  %s18 = scalar_lea.smem %s0, 9
  %s19 = sld [smem:[%s18]]
  %s20 = scalar_lea.smem %s0, 10
  %s21 = sld [smem:[%s20]]
  %s22 = scalar_lea.smem %s0, 11
  %s23 = sld [smem:[%s22]]
  %s24 = scalar_lea.smem %s0, 12
  %s25 = sld [smem:[%s24]]
  %s26 = scalar_lea.smem %s0, 13
  %s27 = sld [smem:[%s26]]
  %s28 = scalar_lea.smem %s0, 14
  %s29 = sld [smem:[%s28]]
  %s30 = scalar_lea.smem %s0, 15
  %s31 = sld [smem:[%s30]]
  %s32 = scalar_lea.smem %s0, 16
  %s33 = sld [smem:[%s32]]
  %s34 = scalar_lea.smem %s0, 17
  %s35 = sld [smem:[%s34]]
  %s36 = scalar_lea.smem %s0, 18
  %s37 = sld [smem:[%s36]]
  %s38 = scalar_lea.smem %s0, 19
  %s39 = sld [smem:[%s38]]
  %s40 = scalar_lea.smem %s0, 20
  %s41 = sld [smem:[%s40]]
  %s42 = scalar_lea.smem %s0, 21
  %s43 = sld [smem:[%s42]]
  %s44 = scalar_lea.smem %s0, 22
  %s45 = sld [smem:[%s44]]
  %s46 = scalar_lea.smem %s0, 23
  %s47 = sld [smem:[%s46]]
  %s48 = scalar_lea.smem %s0, 24
  %s49 = sld [smem:[%s48]]
  %s50 = scalar_lea.smem %s0, 25
  %s51 = sld [smem:[%s50]]
  %s52 = scalar_lea.smem %s0, 26
  %s53 = sld [smem:[%s52]]
  %s54 = scalar_lea.smem %s0, 27
  %s55 = sld [smem:[%s54]]
  %s56 = scalar_lea.smem %s0, 28
  %s57 = sld [smem:[%s56]]
  %s58 = scalar_lea.smem %s0, 29
  %s59 = sld [smem:[%s58]]
  %s60 = scalar_lea.smem %s0, 30
  %s61 = sld [smem:[%s60]]
  %s62 = scalar_lea.smem %s0, 31
  %s63 = sld [smem:[%s62]]
  %s64 = scalar_lea.smem %s0, 32
  %s65 = sld [smem:[%s64]]
  %s66 = scalar_lea.smem %s0, 33
  %s67 = sld [smem:[%s66]]
  %s68 = scalar_lea.smem %s0, 34
  %s69 = sld [smem:[%s68]]
  %70 = xla_tuple %s65, %s67, %s69
  %s71 = sld [smem:[#allocation0]]
  $region154: #{factorizable_network_forward_eval.1} parent=0
    _
  %s73 = ssub.s32 1, %s71
  %s74 = scalar_select 0, %s73, %s71
  $region1: #{factorizable_network_forward_eval.1} parent=0
    #allocation2 [shape = 'u8[8192]{0}', space=vmem, size = 0x2000, scoped, tag = 'output window, operand 0, single buffered']
    #allocation3 [shape = 's32[1]{0}', space=sflag, size = 0x4, scoped, tag = 'scoped memory for factorizable_network_forward_eval.1']
    #allocation4 [shape = 'u8[8192]{0}', space=vmem, size = 0x2000, scoped, tag = 'output window, operand 1, single buffered']
    #allocation5 [shape = 's32[1]{0}', space=sflag, size = 0x4, scoped, tag = 'scoped memory for factorizable_network_forward_eval.1']
    %75 = vsyncpa [#allocation3], 0
    %76 = vsyncpa [#allocation5], 0
    // Predicated region
    $region2: #{factorizable_network_forward_eval.1} parent=1 // pred_check
      _
    $region3: #{factorizable_network_forward_eval.1} parent=1 // pred_check_branch
      %78 = sbr.rel (0) target = $region5
    $region4: #{factorizable_network_forward_eval.1} parent=1 // pred_region
      _
    $region5: #{factorizable_network_forward_eval.1} parent=1 // pred_fallthru
      _
    // Predicated region
    $region6: #{factorizable_network_forward_eval.1} parent=1 // pred_check
      _
    $region7: #{factorizable_network_forward_eval.1} parent=1 // pred_check_branch
      %80 = sbr.rel (0) target = $region9
    $region8: #{factorizable_network_forward_eval.1} parent=1 // pred_region
      _
    $region9: #{factorizable_network_forward_eval.1} parent=1 // pred_fallthru
      _
    // Predicated region
    $region10: #{factorizable_network_forward_eval.1} parent=1 // pred_check
      _
    $region11: #{factorizable_network_forward_eval.1} parent=1 // pred_check_branch
      %82 = sbr.rel (0) target = $region13
    $region12: #{factorizable_network_forward_eval.1} parent=1 // pred_region
      _
    $region13: #{factorizable_network_forward_eval.1} parent=1 // pred_fallthru
      _
    // Predicated region
    $region14: #{factorizable_network_forward_eval.1} parent=1 // pred_check
      _
    $region15: #{factorizable_network_forward_eval.1} parent=1 // pred_check_branch
      %84 = sbr.rel (0) target = $region17
    $region16: #{factorizable_network_forward_eval.1} parent=1 // pred_region
      _
    $region17: #{factorizable_network_forward_eval.1} parent=1 // pred_fallthru
      _
    // Predicated region
    $region18: #{factorizable_network_forward_eval.1} parent=1 // pred_check
      _
    $region19: #{factorizable_network_forward_eval.1} parent=1 // pred_check_branch
      %86 = sbr.rel (0) target = $region21
    $region20: #{factorizable_network_forward_eval.1} parent=1 // pred_region
      _
    $region21: #{factorizable_network_forward_eval.1} parent=1 // pred_fallthru
      _
    // Predicated region
    $region22: #{factorizable_network_forward_eval.1} parent=1 // pred_check
      _
    $region23: #{factorizable_network_forward_eval.1} parent=1 // pred_check_branch
      %88 = sbr.rel (0) target = $region25
    $region24: #{factorizable_network_forward_eval.1} parent=1 // pred_region
      _
    $region25: #{factorizable_network_forward_eval.1} parent=1 // pred_fallthru
      _
    // Predicated region
    $region26: #{factorizable_network_forward_eval.1} parent=1 // pred_check
      _
    $region27: #{factorizable_network_forward_eval.1} parent=1 // pred_check_branch
      %90 = sbr.rel (0) target = $region29
    $region28: #{factorizable_network_forward_eval.1} parent=1 // pred_region
      _
    $region29: #{factorizable_network_forward_eval.1} parent=1 // pred_fallthru
      _
    // Predicated region
    $region30: #{factorizable_network_forward_eval.1} parent=1 // pred_check
      _
    $region31: #{factorizable_network_forward_eval.1} parent=1 // pred_check_branch
      %92 = sbr.rel (0) target = $region33
    $region32: #{factorizable_network_forward_eval.1} parent=1 // pred_region
      _
    $region33: #{factorizable_network_forward_eval.1} parent=1 // pred_fallthru
      _
    // Predicated region
    $region34: #{factorizable_network_forward_eval.1} parent=1 // pred_check
      _
    $region35: #{factorizable_network_forward_eval.1} parent=1 // pred_check_branch
      %94 = sbr.rel (0) target = $region37
    $region36: #{factorizable_network_forward_eval.1} parent=1 // pred_region
      _
    $region37: #{factorizable_network_forward_eval.1} parent=1 // pred_fallthru
      _
    // Predicated region
    $region38: #{factorizable_network_forward_eval.1} parent=1 // pred_check
      _
    $region39: #{factorizable_network_forward_eval.1} parent=1 // pred_check_branch
      %96 = sbr.rel (0) target = $region41
    $region40: #{factorizable_network_forward_eval.1} parent=1 // pred_region
      _
    $region41: #{factorizable_network_forward_eval.1} parent=1 // pred_fallthru
      _
    // Predicated region
    $region42: #{factorizable_network_forward_eval.1} parent=1 // pred_check
      _
    $region43: #{factorizable_network_forward_eval.1} parent=1 // pred_check_branch
      %98 = sbr.rel (0) target = $region45
    $region44: #{factorizable_network_forward_eval.1} parent=1 // pred_region
      _
    $region45: #{factorizable_network_forward_eval.1} parent=1 // pred_fallthru
      _
    // Predicated region
    $region46: #{factorizable_network_forward_eval.1} parent=1 // pred_check
      _
    $region47: #{factorizable_network_forward_eval.1} parent=1 // pred_check_branch
      %100 = sbr.rel (0) target = $region49
    $region48: #{factorizable_network_forward_eval.1} parent=1 // pred_region
      _
    $region49: #{factorizable_network_forward_eval.1} parent=1 // pred_fallthru
      _
    // Predicated region
    $region50: #{factorizable_network_forward_eval.1} parent=1 // pred_check
      _
    $region51: #{factorizable_network_forward_eval.1} parent=1 // pred_check_branch
      %102 = sbr.rel (0) target = $region53
    $region52: #{factorizable_network_forward_eval.1} parent=1 // pred_region
      _
    $region53: #{factorizable_network_forward_eval.1} parent=1 // pred_fallthru
      _
    // Predicated region
    $region54: #{factorizable_network_forward_eval.1} parent=1 // pred_check
      _
    $region55: #{factorizable_network_forward_eval.1} parent=1 // pred_check_branch
      %104 = sbr.rel (0) target = $region57
    $region56: #{factorizable_network_forward_eval.1} parent=1 // pred_region
      _
    $region57: #{factorizable_network_forward_eval.1} parent=1 // pred_fallthru
      _
    // Predicated region
    $region58: #{factorizable_network_forward_eval.1} parent=1 // pred_check
      _
    $region59: #{factorizable_network_forward_eval.1} parent=1 // pred_check_branch
      %106 = sbr.rel (0) target = $region61
    $region60: #{factorizable_network_forward_eval.1} parent=1 // pred_region
      _
    $region61: #{factorizable_network_forward_eval.1} parent=1 // pred_fallthru
      _
    // Predicated region
    $region62: #{factorizable_network_forward_eval.1} parent=1 // pred_check
      _
    $region63: #{factorizable_network_forward_eval.1} parent=1 // pred_check_branch
      %108 = sbr.rel (0) target = $region65
    $region64: #{factorizable_network_forward_eval.1} parent=1 // pred_region
      _
    $region65: #{factorizable_network_forward_eval.1} parent=1 // pred_fallthru
      _
    // Predicated region
    $region66: #{factorizable_network_forward_eval.1} parent=1 // pred_check
      _
    $region67: #{factorizable_network_forward_eval.1} parent=1 // pred_check_branch
      %110 = sbr.rel (0) target = $region69
    $region68: #{factorizable_network_forward_eval.1} parent=1 // pred_region
      _
    $region69: #{factorizable_network_forward_eval.1} parent=1 // pred_fallthru
      _
    // Predicated region
    $region70: #{factorizable_network_forward_eval.1} parent=1 // pred_check
      _
    $region71: #{factorizable_network_forward_eval.1} parent=1 // pred_check_branch
      %112 = sbr.rel (0) target = $region73
    $region72: #{factorizable_network_forward_eval.1} parent=1 // pred_region
      _
    $region73: #{factorizable_network_forward_eval.1} parent=1 // pred_fallthru
      _
    // Predicated region
    $region74: #{factorizable_network_forward_eval.1} parent=1 // pred_check
      _
    $region75: #{factorizable_network_forward_eval.1} parent=1 // pred_check_branch
      %114 = sbr.rel (0) target = $region77
    $region76: #{factorizable_network_forward_eval.1} parent=1 // pred_region
      _
    $region77: #{factorizable_network_forward_eval.1} parent=1 // pred_fallthru
      _
    // Predicated region
    $region78: #{factorizable_network_forward_eval.1} parent=1 // pred_check
      _
    $region79: #{factorizable_network_forward_eval.1} parent=1 // pred_check_branch
      %116 = sbr.rel (0) target = $region81
    $region80: #{factorizable_network_forward_eval.1} parent=1 // pred_region
      _
    $region81: #{factorizable_network_forward_eval.1} parent=1 // pred_fallthru
      _
    // Predicated region
    $region82: #{factorizable_network_forward_eval.1} parent=1 // pred_check
      _
    $region83: #{factorizable_network_forward_eval.1} parent=1 // pred_check_branch
      %118 = sbr.rel (0) target = $region85
    $region84: #{factorizable_network_forward_eval.1} parent=1 // pred_region
      _
    $region85: #{factorizable_network_forward_eval.1} parent=1 // pred_fallthru
      _
    // Predicated region
    $region86: #{factorizable_network_forward_eval.1} parent=1 // pred_check
      _
    $region87: #{factorizable_network_forward_eval.1} parent=1 // pred_check_branch
      %120 = sbr.rel (0) target = $region89
    $region88: #{factorizable_network_forward_eval.1} parent=1 // pred_region
      _
    $region89: #{factorizable_network_forward_eval.1} parent=1 // pred_fallthru
      _
    // Predicated region
    $region90: #{factorizable_network_forward_eval.1} parent=1 // pred_check
      _
    $region91: #{factorizable_network_forward_eval.1} parent=1 // pred_check_branch
      %122 = sbr.rel (0) target = $region93
    $region92: #{factorizable_network_forward_eval.1} parent=1 // pred_region
      _
    $region93: #{factorizable_network_forward_eval.1} parent=1 // pred_fallthru
      _
    // Predicated region
    $region94: #{factorizable_network_forward_eval.1} parent=1 // pred_check
      _
    $region95: #{factorizable_network_forward_eval.1} parent=1 // pred_check_branch
      %124 = sbr.rel (0) target = $region97
    $region96: #{factorizable_network_forward_eval.1} parent=1 // pred_region
      _
    $region97: #{factorizable_network_forward_eval.1} parent=1 // pred_fallthru
      _
    // Predicated region
    $region98: #{factorizable_network_forward_eval.1} parent=1 // pred_check
      _
    $region99: #{factorizable_network_forward_eval.1} parent=1 // pred_check_branch
      %126 = sbr.rel (0) target = $region101
    $region100: #{factorizable_network_forward_eval.1} parent=1 // pred_region
      _
    $region101: #{factorizable_network_forward_eval.1} parent=1 // pred_fallthru
      _
    // Predicated region
    $region102: #{factorizable_network_forward_eval.1} parent=1 // pred_check
      _
    $region103: #{factorizable_network_forward_eval.1} parent=1 // pred_check_branch
      %128 = sbr.rel (0) target = $region105
    $region104: #{factorizable_network_forward_eval.1} parent=1 // pred_region
      _
    $region105: #{factorizable_network_forward_eval.1} parent=1 // pred_fallthru
      _
    // Predicated region
    $region106: #{factorizable_network_forward_eval.1} parent=1 // pred_check
      _
    $region107: #{factorizable_network_forward_eval.1} parent=1 // pred_check_branch
      %130 = sbr.rel (0) target = $region109
    $region108: #{factorizable_network_forward_eval.1} parent=1 // pred_region
      _
    $region109: #{factorizable_network_forward_eval.1} parent=1 // pred_fallthru
      _
    // Predicated region
    $region110: #{factorizable_network_forward_eval.1} parent=1 // pred_check
      _
    $region111: #{factorizable_network_forward_eval.1} parent=1 // pred_check_branch
      %132 = sbr.rel (0) target = $region113
    $region112: #{factorizable_network_forward_eval.1} parent=1 // pred_region
      _
    $region113: #{factorizable_network_forward_eval.1} parent=1 // pred_fallthru
      _
    // Predicated region
    $region114: #{factorizable_network_forward_eval.1} parent=1 // pred_check
      _
    $region115: #{factorizable_network_forward_eval.1} parent=1 // pred_check_branch
      %134 = sbr.rel (0) target = $region117
    $region116: #{factorizable_network_forward_eval.1} parent=1 // pred_region
      _
    $region117: #{factorizable_network_forward_eval.1} parent=1 // pred_fallthru
      _
    // Predicated region
    $region118: #{factorizable_network_forward_eval.1} parent=1 // pred_check
      _
    $region119: #{factorizable_network_forward_eval.1} parent=1 // pred_check_branch
      %136 = sbr.rel (0) target = $region121
    $region120: #{factorizable_network_forward_eval.1} parent=1 // pred_region
      _
    $region121: #{factorizable_network_forward_eval.1} parent=1 // pred_fallthru
      _
    // Predicated region
    $region122: #{factorizable_network_forward_eval.1} parent=1 // pred_check
      _
    $region123: #{factorizable_network_forward_eval.1} parent=1 // pred_check_branch
      %138 = sbr.rel (0) target = $region125
    $region124: #{factorizable_network_forward_eval.1} parent=1 // pred_region
      _
    $region125: #{factorizable_network_forward_eval.1} parent=1 // pred_fallthru
      _
    // Predicated region
    $region126: #{factorizable_network_forward_eval.1} parent=1 // pred_check
      _
    $region127: #{factorizable_network_forward_eval.1} parent=1 // pred_check_branch
      %140 = sbr.rel (0) target = $region129
    $region128: #{factorizable_network_forward_eval.1} parent=1 // pred_region
      _
    $region129: #{factorizable_network_forward_eval.1} parent=1 // pred_fallthru
      _
    %v142 = vld [vmem:[%s1] sm:$0xff]
    %v143 = vld [vmem:[%s1 + $0x8] sm:$0xff]
    %v144 = vld [vmem:[%s1 + $0x10] sm:$0xff]
    %v145 = vld [vmem:[%s1 + $0x18] sm:$0xff]
    %v146 = vld [vmem:[%s1 + $0x20] sm:$0xff]
    %v147 = vld [vmem:[%s1 + $0x28] sm:$0xff]
    %v148 = vld [vmem:[%s1 + $0x30] sm:$0xff]
    %v149 = vld [vmem:[%s1 + $0x38] sm:$0xff]
    %v150 = vld [vmem:[%s1 + $0x40] sm:$0xff]
    %v151 = vld [vmem:[%s1 + $0x48] sm:$0xff]
    %v152 = vld [vmem:[%s1 + $0x50] sm:$0xff]
    %v153 = vld [vmem:[%s1 + $0x58] sm:$0xff]
    %v154 = vld [vmem:[%s1 + $0x60] sm:$0xff]
    %v155 = vld [vmem:[%s1 + $0x68] sm:$0xff]
    %v156 = vld [vmem:[%s1 + $0x70] sm:$0xff]
    %v157 = vld [vmem:[%s1 + $0x78] sm:$0xff]
    %v158 = vld [vmem:[%s1 + $0x80] sm:$0xff]
    %v159 = vld [vmem:[%s1 + $0x88] sm:$0xff]
    %v160 = vld [vmem:[%s1 + $0x90] sm:$0xff]
    %v161 = vld [vmem:[%s1 + $0x98] sm:$0xff]
    %v162 = vld [vmem:[%s1 + $0xa0] sm:$0xff]
    %v163 = vld [vmem:[%s1 + $0xa8] sm:$0xff]
    %v164 = vld [vmem:[%s1 + $0xb0] sm:$0xff]
    %v165 = vld [vmem:[%s1 + $0xb8] sm:$0xff]
    %v166 = vld [vmem:[%s1 + $0xc0] sm:$0xff]
    %v167 = vld [vmem:[%s1 + $0xc8] sm:$0xff]
    %v168 = vld [vmem:[%s1 + $0xd0] sm:$0xff]
    %v169 = vld [vmem:[%s1 + $0xd8] sm:$0xff]
    %v170 = vld [vmem:[%s1 + $0xe0] sm:$0xff]
    %v171 = vld [vmem:[%s1 + $0xe8] sm:$0xff]
    %v172 = vld [vmem:[%s1 + $0xf0] sm:$0xff]
    %v173 = vld [vmem:[%s1 + $0xf8] sm:$0xff]
    %v174 = vld [vmem:[%s3] sm:$0xff]
    %v175 = vld [vmem:[%s3 + $0x8] sm:$0xff]
    %v176 = vld [vmem:[%s3 + $0x10] sm:$0xff]
    %v177 = vld [vmem:[%s3 + $0x18] sm:$0xff]
    %v178 = vld [vmem:[%s3 + $0x20] sm:$0xff]
    %v179 = vld [vmem:[%s3 + $0x28] sm:$0xff]
    %v180 = vld [vmem:[%s3 + $0x30] sm:$0xff]
    %v181 = vld [vmem:[%s3 + $0x38] sm:$0xff]
    %v182 = vld [vmem:[%s3 + $0x40] sm:$0xff]
    %v183 = vld [vmem:[%s3 + $0x48] sm:$0xff]
    %v184 = vld [vmem:[%s3 + $0x50] sm:$0xff]
    %v185 = vld [vmem:[%s3 + $0x58] sm:$0xff]
    %v186 = vld [vmem:[%s3 + $0x60] sm:$0xff]
    %v187 = vld [vmem:[%s3 + $0x68] sm:$0xff]
    %v188 = vld [vmem:[%s3 + $0x70] sm:$0xff]
    %v189 = vld [vmem:[%s3 + $0x78] sm:$0xff]
    %v190 = vld [vmem:[%s3 + $0x80] sm:$0xff]
    %v191 = vld [vmem:[%s3 + $0x88] sm:$0xff]
    %v192 = vld [vmem:[%s3 + $0x90] sm:$0xff]
    %v193 = vld [vmem:[%s3 + $0x98] sm:$0xff]
    %v194 = vld [vmem:[%s3 + $0xa0] sm:$0xff]
    %v195 = vld [vmem:[%s3 + $0xa8] sm:$0xff]
    %v196 = vld [vmem:[%s3 + $0xb0] sm:$0xff]
    %v197 = vld [vmem:[%s3 + $0xb8] sm:$0xff]
    %v198 = vld [vmem:[%s3 + $0xc0] sm:$0xff]
    %v199 = vld [vmem:[%s3 + $0xc8] sm:$0xff]
    %v200 = vld [vmem:[%s3 + $0xd0] sm:$0xff]
    %v201 = vld [vmem:[%s3 + $0xd8] sm:$0xff]
    %v202 = vld [vmem:[%s3 + $0xe0] sm:$0xff]
    %v203 = vld [vmem:[%s3 + $0xe8] sm:$0xff]
    %v204 = vld [vmem:[%s3 + $0xf0] sm:$0xff]
    %v205 = vld [vmem:[%s3 + $0xf8] sm:$0xff]
    %v206 = vld [vmem:[%s3 + $0x100] sm:$0xff]
    %v207 = vld [vmem:[%s3 + $0x108] sm:$0xff]
    %v208 = vld [vmem:[%s3 + $0x110] sm:$0xff]
    %v209 = vld [vmem:[%s3 + $0x118] sm:$0xff]
    %v210 = vld [vmem:[%s3 + $0x120] sm:$0xff]
    %v211 = vld [vmem:[%s3 + $0x128] sm:$0xff]
    %v212 = vld [vmem:[%s3 + $0x130] sm:$0xff]
    %v213 = vld [vmem:[%s3 + $0x138] sm:$0xff]
    %v214 = vld [vmem:[%s3 + $0x140] sm:$0xff]
    %v215 = vld [vmem:[%s3 + $0x148] sm:$0xff]
    %v216 = vld [vmem:[%s3 + $0x150] sm:$0xff]
    %v217 = vld [vmem:[%s3 + $0x158] sm:$0xff]
    %v218 = vld [vmem:[%s3 + $0x160] sm:$0xff]
    %v219 = vld [vmem:[%s3 + $0x168] sm:$0xff]
    %v220 = vld [vmem:[%s3 + $0x170] sm:$0xff]
    %v221 = vld [vmem:[%s3 + $0x178] sm:$0xff]
    %v222 = vld [vmem:[%s3 + $0x180] sm:$0xff]
    %v223 = vld [vmem:[%s3 + $0x188] sm:$0xff]
    %v224 = vld [vmem:[%s3 + $0x190] sm:$0xff]
    %v225 = vld [vmem:[%s3 + $0x198] sm:$0xff]
    %v226 = vld [vmem:[%s3 + $0x1a0] sm:$0xff]
    %v227 = vld [vmem:[%s3 + $0x1a8] sm:$0xff]
    %v228 = vld [vmem:[%s3 + $0x1b0] sm:$0xff]
    %v229 = vld [vmem:[%s3 + $0x1b8] sm:$0xff]
    %v230 = vld [vmem:[%s3 + $0x1c0] sm:$0xff]
    %v231 = vld [vmem:[%s3 + $0x1c8] sm:$0xff]
    %v232 = vld [vmem:[%s3 + $0x1d0] sm:$0xff]
    %v233 = vld [vmem:[%s3 + $0x1d8] sm:$0xff]
    %v234 = vld [vmem:[%s3 + $0x1e0] sm:$0xff]
    %v235 = vld [vmem:[%s3 + $0x1e8] sm:$0xff]
    %v236 = vld [vmem:[%s3 + $0x1f0] sm:$0xff]
    %v237 = vld [vmem:[%s3 + $0x1f8] sm:$0xff]
    %v238 = vpack.c.bf16 %v176, %v174
    %v239 = vpack.c.bf16 %v177, %v175
    %v240 = vpack.c.bf16 %v180, %v178
    %v241 = vpack.c.bf16 %v181, %v179
    %v242 = vpack.c.bf16 %v184, %v182
    %v243 = vpack.c.bf16 %v185, %v183
    %v244 = vpack.c.bf16 %v188, %v186
    %v245 = vpack.c.bf16 %v189, %v187
    %v246 = vpack.c.bf16 %v192, %v190
    %v247 = vpack.c.bf16 %v193, %v191
    %v248 = vpack.c.bf16 %v196, %v194
    %v249 = vpack.c.bf16 %v197, %v195
    %v250 = vpack.c.bf16 %v200, %v198
    %v251 = vpack.c.bf16 %v201, %v199
    %v252 = vpack.c.bf16 %v204, %v202
    %v253 = vpack.c.bf16 %v205, %v203
    %v254 = vpack.c.bf16 %v208, %v206
    %v255 = vpack.c.bf16 %v209, %v207
    %v256 = vpack.c.bf16 %v212, %v210
    %v257 = vpack.c.bf16 %v213, %v211
    %v258 = vpack.c.bf16 %v216, %v214
    %v259 = vpack.c.bf16 %v217, %v215
    %v260 = vpack.c.bf16 %v220, %v218
    %v261 = vpack.c.bf16 %v221, %v219
    %v262 = vpack.c.bf16 %v224, %v222
    %v263 = vpack.c.bf16 %v225, %v223
    %v264 = vpack.c.bf16 %v228, %v226
    %v265 = vpack.c.bf16 %v229, %v227
    %v266 = vpack.c.bf16 %v232, %v230
    %v267 = vpack.c.bf16 %v233, %v231
    %v268 = vpack.c.bf16 %v236, %v234
    %v269 = vpack.c.bf16 %v237, %v235
    %v270 = vpack.c.bf16 %v143, %v142
    %v271 = vpack.c.bf16 %v145, %v144
    %v272 = vpack.c.bf16 %v147, %v146
    %v273 = vpack.c.bf16 %v149, %v148
    %v274 = vpack.c.bf16 %v151, %v150
    %v275 = vpack.c.bf16 %v153, %v152
    %v276 = vpack.c.bf16 %v155, %v154
    %v277 = vpack.c.bf16 %v157, %v156
    %v278 = vpack.c.bf16 %v159, %v158
    %v279 = vpack.c.bf16 %v161, %v160
    %v280 = vpack.c.bf16 %v163, %v162
    %v281 = vpack.c.bf16 %v165, %v164
    %v282 = vpack.c.bf16 %v167, %v166
    %v283 = vpack.c.bf16 %v169, %v168
    %v284 = vpack.c.bf16 %v171, %v170
    %v285 = vpack.c.bf16 %v173, %v172
    %286 = vmatpush.bf16.msra.mxu0 %v277
    %287 = vmatpush.bf16.msra.mxu0 %v276
    %288 = vmatpush.bf16.msra.mxu0 %v275
    %289 = vmatpush.bf16.msra.mxu0 %v274
    %290 = vmatpush.bf16.msra.mxu0 %v273
    %291 = vmatpush.bf16.msra.mxu0 %v272
    %292 = vmatpush.bf16.msra.mxu0 %v271
    %293 = vmatpush.bf16.msra.mxu0 %v270
    %294 = vmatmul.bf16.gmra.mxu0 %v238
    %v295 = vpop.f32.mrf.mxu0
    %v296 = vadd.f32 0.0, %v295
    %v297 = vpop.f32.mrf.mxu0
    %v298 = vadd.f32 0.0, %v297
    %299 = vmatmul.bf16.gmra.mxu0 %v240
    %v300 = vpop.f32.mrf.mxu0
    %v301 = vadd.f32 0.0, %v300
    %v302 = vpop.f32.mrf.mxu0
    %v303 = vadd.f32 0.0, %v302
    %304 = vmatmul.bf16.gmra.mxu0 %v242
    %v305 = vpop.f32.mrf.mxu0
    %v306 = vadd.f32 0.0, %v305
    %v307 = vpop.f32.mrf.mxu0
    %v308 = vadd.f32 0.0, %v307
    %309 = vmatmul.bf16.gmra.mxu0 %v244
    %v310 = vpop.f32.mrf.mxu0
    %v311 = vadd.f32 0.0, %v310
    %v312 = vpop.f32.mrf.mxu0
    %v313 = vadd.f32 0.0, %v312
    %314 = vmatmul.bf16.gmra.mxu0 %v246
    %v315 = vpop.f32.mrf.mxu0
    %v316 = vadd.f32 0.0, %v315
    %v317 = vpop.f32.mrf.mxu0
    %v318 = vadd.f32 0.0, %v317
    %319 = vmatmul.bf16.gmra.mxu0 %v248
    %v320 = vpop.f32.mrf.mxu0
    %v321 = vadd.f32 0.0, %v320
    %v322 = vpop.f32.mrf.mxu0
    %v323 = vadd.f32 0.0, %v322
    %324 = vmatmul.bf16.gmra.mxu0 %v250
    %v325 = vpop.f32.mrf.mxu0
    %v326 = vadd.f32 0.0, %v325
    %v327 = vpop.f32.mrf.mxu0
    %v328 = vadd.f32 0.0, %v327
    %329 = vmatmul.bf16.gmra.mxu0 %v252
    %v330 = vpop.f32.mrf.mxu0
    %v331 = vadd.f32 0.0, %v330
    %v332 = vpop.f32.mrf.mxu0
    %v333 = vadd.f32 0.0, %v332
    %334 = vmatmul.bf16.gmra.mxu0 %v254
    %v335 = vpop.f32.mrf.mxu0
    %v336 = vadd.f32 0.0, %v335
    %v337 = vpop.f32.mrf.mxu0
    %v338 = vadd.f32 0.0, %v337
    %339 = vmatmul.bf16.gmra.mxu0 %v256
    %v340 = vpop.f32.mrf.mxu0
    %v341 = vadd.f32 0.0, %v340
    %v342 = vpop.f32.mrf.mxu0
    %v343 = vadd.f32 0.0, %v342
    %344 = vmatmul.bf16.gmra.mxu0 %v258
    %v345 = vpop.f32.mrf.mxu0
    %v346 = vadd.f32 0.0, %v345
    %v347 = vpop.f32.mrf.mxu0
    %v348 = vadd.f32 0.0, %v347
    %349 = vmatmul.bf16.gmra.mxu0 %v260
    %v350 = vpop.f32.mrf.mxu0
    %v351 = vadd.f32 0.0, %v350
    %v352 = vpop.f32.mrf.mxu0
    %v353 = vadd.f32 0.0, %v352
    %354 = vmatmul.bf16.gmra.mxu0 %v262
    %v355 = vpop.f32.mrf.mxu0
    %v356 = vadd.f32 0.0, %v355
    %v357 = vpop.f32.mrf.mxu0
    %v358 = vadd.f32 0.0, %v357
    %359 = vmatmul.bf16.gmra.mxu0 %v264
    %v360 = vpop.f32.mrf.mxu0
    %v361 = vadd.f32 0.0, %v360
    %v362 = vpop.f32.mrf.mxu0
    %v363 = vadd.f32 0.0, %v362
    %364 = vmatmul.bf16.gmra.mxu0 %v266
    %v365 = vpop.f32.mrf.mxu0
    %v366 = vadd.f32 0.0, %v365
    %v367 = vpop.f32.mrf.mxu0
    %v368 = vadd.f32 0.0, %v367
    %369 = vmatmul.bf16.gmra.mxu0 %v268
    %v370 = vpop.f32.mrf.mxu0
    %v371 = vadd.f32 0.0, %v370
    %v372 = vpop.f32.mrf.mxu0
    %v373 = vadd.f32 0.0, %v372
    %374 = vdwg.mxu0
    %375 = vmatpush.bf16.msra.mxu0 %v285
    %376 = vmatpush.bf16.msra.mxu0 %v284
    %377 = vmatpush.bf16.msra.mxu0 %v283
    %378 = vmatpush.bf16.msra.mxu0 %v282
    %379 = vmatpush.bf16.msra.mxu0 %v281
    %380 = vmatpush.bf16.msra.mxu0 %v280
    %381 = vmatpush.bf16.msra.mxu0 %v279
    %382 = vmatpush.bf16.msra.mxu0 %v278
    %383 = vmatmul.bf16.gmra.mxu0 %v239
    %v384 = vpop.f32.mrf.mxu0
    %v385 = vadd.f32 %v296, %v384
    %v386 = vpop.f32.mrf.mxu0
    %v387 = vadd.f32 %v298, %v386
    %388 = vmatmul.bf16.gmra.mxu0 %v241
    %v389 = vpop.f32.mrf.mxu0
    %v390 = vadd.f32 %v301, %v389
    %v391 = vpop.f32.mrf.mxu0
    %v392 = vadd.f32 %v303, %v391
    %393 = vmatmul.bf16.gmra.mxu0 %v243
    %v394 = vpop.f32.mrf.mxu0
    %v395 = vadd.f32 %v306, %v394
    %v396 = vpop.f32.mrf.mxu0
    %v397 = vadd.f32 %v308, %v396
    %398 = vmatmul.bf16.gmra.mxu0 %v245
    %v399 = vpop.f32.mrf.mxu0
    %v400 = vadd.f32 %v311, %v399
    %v401 = vpop.f32.mrf.mxu0
    %v402 = vadd.f32 %v313, %v401
    %403 = vmatmul.bf16.gmra.mxu0 %v247
    %v404 = vpop.f32.mrf.mxu0
    %v405 = vadd.f32 %v316, %v404
    %v406 = vpop.f32.mrf.mxu0
    %v407 = vadd.f32 %v318, %v406
    %408 = vmatmul.bf16.gmra.mxu0 %v249
    %v409 = vpop.f32.mrf.mxu0
    %v410 = vadd.f32 %v321, %v409
    %v411 = vpop.f32.mrf.mxu0
    %v412 = vadd.f32 %v323, %v411
    %413 = vmatmul.bf16.gmra.mxu0 %v251
    %v414 = vpop.f32.mrf.mxu0
    %v415 = vadd.f32 %v326, %v414
    %v416 = vpop.f32.mrf.mxu0
    %v417 = vadd.f32 %v328, %v416
    %418 = vmatmul.bf16.gmra.mxu0 %v253
    %v419 = vpop.f32.mrf.mxu0
    %v420 = vadd.f32 %v331, %v419
    %v421 = vpop.f32.mrf.mxu0
    %v422 = vadd.f32 %v333, %v421
    %423 = vmatmul.bf16.gmra.mxu0 %v255
    %v424 = vpop.f32.mrf.mxu0
    %v425 = vadd.f32 %v336, %v424
    %v426 = vpop.f32.mrf.mxu0
    %v427 = vadd.f32 %v338, %v426
    %428 = vmatmul.bf16.gmra.mxu0 %v257
    %v429 = vpop.f32.mrf.mxu0
    %v430 = vadd.f32 %v341, %v429
    %v431 = vpop.f32.mrf.mxu0
    %v432 = vadd.f32 %v343, %v431
    %433 = vmatmul.bf16.gmra.mxu0 %v259
    %v434 = vpop.f32.mrf.mxu0
    %v435 = vadd.f32 %v346, %v434
    %v436 = vpop.f32.mrf.mxu0
    %v437 = vadd.f32 %v348, %v436
    %438 = vmatmul.bf16.gmra.mxu0 %v261
    %v439 = vpop.f32.mrf.mxu0
    %v440 = vadd.f32 %v351, %v439
    %v441 = vpop.f32.mrf.mxu0
    %v442 = vadd.f32 %v353, %v441
    %443 = vmatmul.bf16.gmra.mxu0 %v263
    %v444 = vpop.f32.mrf.mxu0
    %v445 = vadd.f32 %v356, %v444
    %v446 = vpop.f32.mrf.mxu0
    %v447 = vadd.f32 %v358, %v446
    %448 = vmatmul.bf16.gmra.mxu0 %v265
    %v449 = vpop.f32.mrf.mxu0
    %v450 = vadd.f32 %v361, %v449
    %v451 = vpop.f32.mrf.mxu0
    %v452 = vadd.f32 %v363, %v451
    %453 = vmatmul.bf16.gmra.mxu0 %v267
    %v454 = vpop.f32.mrf.mxu0
    %v455 = vadd.f32 %v366, %v454
    %v456 = vpop.f32.mrf.mxu0
    %v457 = vadd.f32 %v368, %v456
    %458 = vmatmul.bf16.gmra.mxu0 %v269
    %v459 = vpop.f32.mrf.mxu0
    %v460 = vadd.f32 %v371, %v459
    %v461 = vpop.f32.mrf.mxu0
    %v462 = vadd.f32 %v373, %v461
    %463 = vdwg.mxu0
    %v464 = vld [vmem:[%s7] sm:$0xff]
    %v465 = vld [vmem:[%s7 + $0x8] sm:$0xff]
    %v466 = vld [vmem:[%s7 + $0x10] sm:$0xff]
    %v467 = vld [vmem:[%s7 + $0x18] sm:$0xff]
    %v468 = vld [vmem:[%s7 + $0x20] sm:$0xff]
    %v469 = vld [vmem:[%s7 + $0x28] sm:$0xff]
    %v470 = vld [vmem:[%s7 + $0x30] sm:$0xff]
    %v471 = vld [vmem:[%s7 + $0x38] sm:$0xff]
    %v472 = vpack.c.bf16 %v387, %v385
    %v473 = vpack.c.bf16 %v465, %v464
    %v474 = vpack.c.bf16 %v467, %v466
    %v475 = vpack.c.bf16 %v469, %v468
    %v476 = vpack.c.bf16 %v471, %v470
    %s477 = scalar_lea.vmem %s7, 64
    %v478 = vld [vmem:[%s477] sm:$0xff]
    %v479 = vld [vmem:[%s477 + $0x8] sm:$0xff]
    %v480 = vld [vmem:[%s477 + $0x10] sm:$0xff]
    %v481 = vld [vmem:[%s477 + $0x18] sm:$0xff]
    %v482 = vld [vmem:[%s477 + $0x20] sm:$0xff]
    %v483 = vld [vmem:[%s477 + $0x28] sm:$0xff]
    %v484 = vld [vmem:[%s477 + $0x30] sm:$0xff]
    %v485 = vld [vmem:[%s477 + $0x38] sm:$0xff]
    %v486 = vpack.c.bf16 %v392, %v390
    %v487 = vpack.c.bf16 %v479, %v478
    %v488 = vpack.c.bf16 %v481, %v480
    %v489 = vpack.c.bf16 %v483, %v482
    %v490 = vpack.c.bf16 %v485, %v484
    %vm491 = vcmask 523264
    %v493 = vsel %vm491, %v486, 0
    %495 = vmatpush.bf16.msra.mxu0 0
    %496 = vmatpush.bf16.msra.mxu0 0
    %497 = vmatpush.bf16.msra.mxu0 0
    %498 = vmatpush.bf16.msra.mxu0 0
    %499 = vmatpush.bf16.msra.mxu0 %v490
    %500 = vmatpush.bf16.msra.mxu0 %v489
    %501 = vmatpush.bf16.msra.mxu0 %v488
    %502 = vmatpush.bf16.msra.mxu0 %v487
    %503 = vmatmul.bf16.gmra.mxu0 %v493
    %v504 = vpop.f32.mrf.mxu0
    %v505 = vadd.f32 0.0, %v504
    %v506 = vpop.f32.mrf.mxu0
    %v507 = vadd.f32 0.0, %v506
    %508 = vdwg.mxu0
    %v510 = vsel %vm491, %v472, 0
    %512 = vmatpush.bf16.msra.mxu0 0
    %513 = vmatpush.bf16.msra.mxu0 0
    %514 = vmatpush.bf16.msra.mxu0 0
    %515 = vmatpush.bf16.msra.mxu0 0
    %516 = vmatpush.bf16.msra.mxu0 %v476
    %517 = vmatpush.bf16.msra.mxu0 %v475
    %518 = vmatpush.bf16.msra.mxu0 %v474
    %519 = vmatpush.bf16.msra.mxu0 %v473
    %520 = vmatmul.bf16.gmra.mxu0 %v510
    %v521 = vpop.f32.mrf.mxu0
    %v522 = vadd.f32 %v505, %v521
    %v523 = vpop.f32.mrf.mxu0
    %v524 = vadd.f32 %v507, %v523
    %525 = vdwg.mxu0
    %s526 = scalar_lea.vmem %s7, 128
    %v527 = vld [vmem:[%s526] sm:$0xff]
    %v528 = vld [vmem:[%s526 + $0x8] sm:$0xff]
    %v529 = vld [vmem:[%s526 + $0x10] sm:$0xff]
    %v530 = vld [vmem:[%s526 + $0x18] sm:$0xff]
    %v531 = vld [vmem:[%s526 + $0x20] sm:$0xff]
    %v532 = vld [vmem:[%s526 + $0x28] sm:$0xff]
    %v533 = vld [vmem:[%s526 + $0x30] sm:$0xff]
    %v534 = vld [vmem:[%s526 + $0x38] sm:$0xff]
    %v535 = vpack.c.bf16 %v397, %v395
    %v536 = vpack.c.bf16 %v528, %v527
    %v537 = vpack.c.bf16 %v530, %v529
    %v538 = vpack.c.bf16 %v532, %v531
    %v539 = vpack.c.bf16 %v534, %v533
    %v541 = vsel %vm491, %v535, 0
    %543 = vmatpush.bf16.msra.mxu0 0
    %544 = vmatpush.bf16.msra.mxu0 0
    %545 = vmatpush.bf16.msra.mxu0 0
    %546 = vmatpush.bf16.msra.mxu0 0
    %547 = vmatpush.bf16.msra.mxu0 %v539
    %548 = vmatpush.bf16.msra.mxu0 %v538
    %549 = vmatpush.bf16.msra.mxu0 %v537
    %550 = vmatpush.bf16.msra.mxu0 %v536
    %551 = vmatmul.bf16.gmra.mxu0 %v541
    %v552 = vpop.f32.mrf.mxu0
    %v553 = vadd.f32 0.0, %v552
    %v554 = vpop.f32.mrf.mxu0
    %v555 = vadd.f32 0.0, %v554
    %556 = vdwg.mxu0
    %v557 = vadd.f32 %v522, %v553
    %v558 = vadd.f32 %v524, %v555
    %s559 = scalar_lea.vmem %s7, 192
    %v560 = vld [vmem:[%s559] sm:$0xff]
    %v561 = vld [vmem:[%s559 + $0x8] sm:$0xff]
    %v562 = vld [vmem:[%s559 + $0x10] sm:$0xff]
    %v563 = vld [vmem:[%s559 + $0x18] sm:$0xff]
    %v564 = vld [vmem:[%s559 + $0x20] sm:$0xff]
    %v565 = vld [vmem:[%s559 + $0x28] sm:$0xff]
    %v566 = vld [vmem:[%s559 + $0x30] sm:$0xff]
    %v567 = vld [vmem:[%s559 + $0x38] sm:$0xff]
    %v568 = vpack.c.bf16 %v402, %v400
    %v569 = vpack.c.bf16 %v561, %v560
    %v570 = vpack.c.bf16 %v563, %v562
    %v571 = vpack.c.bf16 %v565, %v564
    %v572 = vpack.c.bf16 %v567, %v566
    %v574 = vsel %vm491, %v568, 0
    %576 = vmatpush.bf16.msra.mxu0 0
    %577 = vmatpush.bf16.msra.mxu0 0
    %578 = vmatpush.bf16.msra.mxu0 0
    %579 = vmatpush.bf16.msra.mxu0 0
    %580 = vmatpush.bf16.msra.mxu0 %v572
    %581 = vmatpush.bf16.msra.mxu0 %v571
    %582 = vmatpush.bf16.msra.mxu0 %v570
    %583 = vmatpush.bf16.msra.mxu0 %v569
    %584 = vmatmul.bf16.gmra.mxu0 %v574
    %v585 = vpop.f32.mrf.mxu0
    %v586 = vadd.f32 0.0, %v585
    %v587 = vpop.f32.mrf.mxu0
    %v588 = vadd.f32 0.0, %v587
    %589 = vdwg.mxu0
    %v590 = vadd.f32 %v557, %v586
    %v591 = vadd.f32 %v558, %v588
    %s592 = scalar_lea.vmem %s7, 256
    %v593 = vld [vmem:[%s592] sm:$0xff]
    %v594 = vld [vmem:[%s592 + $0x8] sm:$0xff]
    %v595 = vld [vmem:[%s592 + $0x10] sm:$0xff]
    %v596 = vld [vmem:[%s592 + $0x18] sm:$0xff]
    %v597 = vld [vmem:[%s592 + $0x20] sm:$0xff]
    %v598 = vld [vmem:[%s592 + $0x28] sm:$0xff]
    %v599 = vld [vmem:[%s592 + $0x30] sm:$0xff]
    %v600 = vld [vmem:[%s592 + $0x38] sm:$0xff]
    %v601 = vpack.c.bf16 %v407, %v405
    %v602 = vpack.c.bf16 %v594, %v593
    %v603 = vpack.c.bf16 %v596, %v595
    %v604 = vpack.c.bf16 %v598, %v597
    %v605 = vpack.c.bf16 %v600, %v599
    %v607 = vsel %vm491, %v601, 0
    %609 = vmatpush.bf16.msra.mxu0 0
    %610 = vmatpush.bf16.msra.mxu0 0
    %611 = vmatpush.bf16.msra.mxu0 0
    %612 = vmatpush.bf16.msra.mxu0 0
    %613 = vmatpush.bf16.msra.mxu0 %v605
    %614 = vmatpush.bf16.msra.mxu0 %v604
    %615 = vmatpush.bf16.msra.mxu0 %v603
    %616 = vmatpush.bf16.msra.mxu0 %v602
    %617 = vmatmul.bf16.gmra.mxu0 %v607
    %v618 = vpop.f32.mrf.mxu0
    %v619 = vadd.f32 0.0, %v618
    %v620 = vpop.f32.mrf.mxu0
    %v621 = vadd.f32 0.0, %v620
    %622 = vdwg.mxu0
    %v623 = vadd.f32 %v590, %v619
    %v624 = vadd.f32 %v591, %v621
    %s625 = scalar_lea.vmem %s7, 320
    %v626 = vld [vmem:[%s625] sm:$0xff]
    %v627 = vld [vmem:[%s625 + $0x8] sm:$0xff]
    %v628 = vld [vmem:[%s625 + $0x10] sm:$0xff]
    %v629 = vld [vmem:[%s625 + $0x18] sm:$0xff]
    %v630 = vld [vmem:[%s625 + $0x20] sm:$0xff]
    %v631 = vld [vmem:[%s625 + $0x28] sm:$0xff]
    %v632 = vld [vmem:[%s625 + $0x30] sm:$0xff]
    %v633 = vld [vmem:[%s625 + $0x38] sm:$0xff]
    %v634 = vpack.c.bf16 %v412, %v410
    %v635 = vpack.c.bf16 %v627, %v626
    %v636 = vpack.c.bf16 %v629, %v628
    %v637 = vpack.c.bf16 %v631, %v630
    %v638 = vpack.c.bf16 %v633, %v632
    %v640 = vsel %vm491, %v634, 0
    %642 = vmatpush.bf16.msra.mxu0 0
    %643 = vmatpush.bf16.msra.mxu0 0
    %644 = vmatpush.bf16.msra.mxu0 0
    %645 = vmatpush.bf16.msra.mxu0 0
    %646 = vmatpush.bf16.msra.mxu0 %v638
    %647 = vmatpush.bf16.msra.mxu0 %v637
    %648 = vmatpush.bf16.msra.mxu0 %v636
    %649 = vmatpush.bf16.msra.mxu0 %v635
    %650 = vmatmul.bf16.gmra.mxu0 %v640
    %v651 = vpop.f32.mrf.mxu0
    %v652 = vadd.f32 0.0, %v651
    %v653 = vpop.f32.mrf.mxu0
    %v654 = vadd.f32 0.0, %v653
    %655 = vdwg.mxu0
    %v656 = vadd.f32 %v623, %v652
    %v657 = vadd.f32 %v624, %v654
    %s658 = scalar_lea.vmem %s7, 384
    %v659 = vld [vmem:[%s658] sm:$0xff]
    %v660 = vld [vmem:[%s658 + $0x8] sm:$0xff]
    %v661 = vld [vmem:[%s658 + $0x10] sm:$0xff]
    %v662 = vld [vmem:[%s658 + $0x18] sm:$0xff]
    %v663 = vld [vmem:[%s658 + $0x20] sm:$0xff]
    %v664 = vld [vmem:[%s658 + $0x28] sm:$0xff]
    %v665 = vld [vmem:[%s658 + $0x30] sm:$0xff]
    %v666 = vld [vmem:[%s658 + $0x38] sm:$0xff]
    %v667 = vpack.c.bf16 %v417, %v415
    %v668 = vpack.c.bf16 %v660, %v659
    %v669 = vpack.c.bf16 %v662, %v661
    %v670 = vpack.c.bf16 %v664, %v663
    %v671 = vpack.c.bf16 %v666, %v665
    %v673 = vsel %vm491, %v667, 0
    %675 = vmatpush.bf16.msra.mxu0 0
    %676 = vmatpush.bf16.msra.mxu0 0
    %677 = vmatpush.bf16.msra.mxu0 0
    %678 = vmatpush.bf16.msra.mxu0 0
    %679 = vmatpush.bf16.msra.mxu0 %v671
    %680 = vmatpush.bf16.msra.mxu0 %v670
    %681 = vmatpush.bf16.msra.mxu0 %v669
    %682 = vmatpush.bf16.msra.mxu0 %v668
    %683 = vmatmul.bf16.gmra.mxu0 %v673
    %v684 = vpop.f32.mrf.mxu0
    %v685 = vadd.f32 0.0, %v684
    %v686 = vpop.f32.mrf.mxu0
    %v687 = vadd.f32 0.0, %v686
    %688 = vdwg.mxu0
    %v689 = vadd.f32 %v656, %v685
    %v690 = vadd.f32 %v657, %v687
    %s691 = scalar_lea.vmem %s7, 448
    %v692 = vld [vmem:[%s691] sm:$0xff]
    %v693 = vld [vmem:[%s691 + $0x8] sm:$0xff]
    %v694 = vld [vmem:[%s691 + $0x10] sm:$0xff]
    %v695 = vld [vmem:[%s691 + $0x18] sm:$0xff]
    %v696 = vld [vmem:[%s691 + $0x20] sm:$0xff]
    %v697 = vld [vmem:[%s691 + $0x28] sm:$0xff]
    %v698 = vld [vmem:[%s691 + $0x30] sm:$0xff]
    %v699 = vld [vmem:[%s691 + $0x38] sm:$0xff]
    %v700 = vpack.c.bf16 %v422, %v420
    %v701 = vpack.c.bf16 %v693, %v692
    %v702 = vpack.c.bf16 %v695, %v694
    %v703 = vpack.c.bf16 %v697, %v696
    %v704 = vpack.c.bf16 %v699, %v698
    %v706 = vsel %vm491, %v700, 0
    %708 = vmatpush.bf16.msra.mxu0 0
    %709 = vmatpush.bf16.msra.mxu0 0
    %710 = vmatpush.bf16.msra.mxu0 0
    %711 = vmatpush.bf16.msra.mxu0 0
    %712 = vmatpush.bf16.msra.mxu0 %v704
    %713 = vmatpush.bf16.msra.mxu0 %v703
    %714 = vmatpush.bf16.msra.mxu0 %v702
    %715 = vmatpush.bf16.msra.mxu0 %v701
    %716 = vmatmul.bf16.gmra.mxu0 %v706
    %v717 = vpop.f32.mrf.mxu0
    %v718 = vadd.f32 0.0, %v717
    %v719 = vpop.f32.mrf.mxu0
    %v720 = vadd.f32 0.0, %v719
    %721 = vdwg.mxu0
    %v722 = vadd.f32 %v689, %v718
    %v723 = vadd.f32 %v690, %v720
    %s724 = scalar_lea.vmem %s7, 512
    %v725 = vld [vmem:[%s724] sm:$0xff]
    %v726 = vld [vmem:[%s724 + $0x8] sm:$0xff]
    %v727 = vld [vmem:[%s724 + $0x10] sm:$0xff]
    %v728 = vld [vmem:[%s724 + $0x18] sm:$0xff]
    %v729 = vld [vmem:[%s724 + $0x20] sm:$0xff]
    %v730 = vld [vmem:[%s724 + $0x28] sm:$0xff]
    %v731 = vld [vmem:[%s724 + $0x30] sm:$0xff]
    %v732 = vld [vmem:[%s724 + $0x38] sm:$0xff]
    %v733 = vpack.c.bf16 %v427, %v425
    %v734 = vpack.c.bf16 %v726, %v725
    %v735 = vpack.c.bf16 %v728, %v727
    %v736 = vpack.c.bf16 %v730, %v729
    %v737 = vpack.c.bf16 %v732, %v731
    %v739 = vsel %vm491, %v733, 0
    %741 = vmatpush.bf16.msra.mxu0 0
    %742 = vmatpush.bf16.msra.mxu0 0
    %743 = vmatpush.bf16.msra.mxu0 0
    %744 = vmatpush.bf16.msra.mxu0 0
    %745 = vmatpush.bf16.msra.mxu0 %v737
    %746 = vmatpush.bf16.msra.mxu0 %v736
    %747 = vmatpush.bf16.msra.mxu0 %v735
    %748 = vmatpush.bf16.msra.mxu0 %v734
    %749 = vmatmul.bf16.gmra.mxu0 %v739
    %v750 = vpop.f32.mrf.mxu0
    %v751 = vadd.f32 0.0, %v750
    %v752 = vpop.f32.mrf.mxu0
    %v753 = vadd.f32 0.0, %v752
    %754 = vdwg.mxu0
    %v755 = vadd.f32 %v722, %v751
    %v756 = vadd.f32 %v723, %v753
    %s757 = scalar_lea.vmem %s7, 576
    %v758 = vld [vmem:[%s757] sm:$0xff]
    %v759 = vld [vmem:[%s757 + $0x8] sm:$0xff]
    %v760 = vld [vmem:[%s757 + $0x10] sm:$0xff]
    %v761 = vld [vmem:[%s757 + $0x18] sm:$0xff]
    %v762 = vld [vmem:[%s757 + $0x20] sm:$0xff]
    %v763 = vld [vmem:[%s757 + $0x28] sm:$0xff]
    %v764 = vld [vmem:[%s757 + $0x30] sm:$0xff]
    %v765 = vld [vmem:[%s757 + $0x38] sm:$0xff]
    %v766 = vpack.c.bf16 %v432, %v430
    %v767 = vpack.c.bf16 %v759, %v758
    %v768 = vpack.c.bf16 %v761, %v760
    %v769 = vpack.c.bf16 %v763, %v762
    %v770 = vpack.c.bf16 %v765, %v764
    %v772 = vsel %vm491, %v766, 0
    %774 = vmatpush.bf16.msra.mxu0 0
    %775 = vmatpush.bf16.msra.mxu0 0
    %776 = vmatpush.bf16.msra.mxu0 0
    %777 = vmatpush.bf16.msra.mxu0 0
    %778 = vmatpush.bf16.msra.mxu0 %v770
    %779 = vmatpush.bf16.msra.mxu0 %v769
    %780 = vmatpush.bf16.msra.mxu0 %v768
    %781 = vmatpush.bf16.msra.mxu0 %v767
    %782 = vmatmul.bf16.gmra.mxu0 %v772
    %v783 = vpop.f32.mrf.mxu0
    %v784 = vadd.f32 0.0, %v783
    %v785 = vpop.f32.mrf.mxu0
    %v786 = vadd.f32 0.0, %v785
    %787 = vdwg.mxu0
    %v788 = vadd.f32 %v755, %v784
    %v789 = vadd.f32 %v756, %v786
    %s790 = scalar_lea.vmem %s7, 640
    %v791 = vld [vmem:[%s790] sm:$0xff]
    %v792 = vld [vmem:[%s790 + $0x8] sm:$0xff]
    %v793 = vld [vmem:[%s790 + $0x10] sm:$0xff]
    %v794 = vld [vmem:[%s790 + $0x18] sm:$0xff]
    %v795 = vld [vmem:[%s790 + $0x20] sm:$0xff]
    %v796 = vld [vmem:[%s790 + $0x28] sm:$0xff]
    %v797 = vld [vmem:[%s790 + $0x30] sm:$0xff]
    %v798 = vld [vmem:[%s790 + $0x38] sm:$0xff]
    %v799 = vpack.c.bf16 %v437, %v435
    %v800 = vpack.c.bf16 %v792, %v791
    %v801 = vpack.c.bf16 %v794, %v793
    %v802 = vpack.c.bf16 %v796, %v795
    %v803 = vpack.c.bf16 %v798, %v797
    %v805 = vsel %vm491, %v799, 0
    %807 = vmatpush.bf16.msra.mxu0 0
    %808 = vmatpush.bf16.msra.mxu0 0
    %809 = vmatpush.bf16.msra.mxu0 0
    %810 = vmatpush.bf16.msra.mxu0 0
    %811 = vmatpush.bf16.msra.mxu0 %v803
    %812 = vmatpush.bf16.msra.mxu0 %v802
    %813 = vmatpush.bf16.msra.mxu0 %v801
    %814 = vmatpush.bf16.msra.mxu0 %v800
    %815 = vmatmul.bf16.gmra.mxu0 %v805
    %v816 = vpop.f32.mrf.mxu0
    %v817 = vadd.f32 0.0, %v816
    %v818 = vpop.f32.mrf.mxu0
    %v819 = vadd.f32 0.0, %v818
    %820 = vdwg.mxu0
    %v821 = vadd.f32 %v788, %v817
    %v822 = vadd.f32 %v789, %v819
    %s823 = scalar_lea.vmem %s7, 704
    %v824 = vld [vmem:[%s823] sm:$0xff]
    %v825 = vld [vmem:[%s823 + $0x8] sm:$0xff]
    %v826 = vld [vmem:[%s823 + $0x10] sm:$0xff]
    %v827 = vld [vmem:[%s823 + $0x18] sm:$0xff]
    %v828 = vld [vmem:[%s823 + $0x20] sm:$0xff]
    %v829 = vld [vmem:[%s823 + $0x28] sm:$0xff]
    %v830 = vld [vmem:[%s823 + $0x30] sm:$0xff]
    %v831 = vld [vmem:[%s823 + $0x38] sm:$0xff]
    %v832 = vpack.c.bf16 %v442, %v440
    %v833 = vpack.c.bf16 %v825, %v824
    %v834 = vpack.c.bf16 %v827, %v826
    %v835 = vpack.c.bf16 %v829, %v828
    %v836 = vpack.c.bf16 %v831, %v830
    %v838 = vsel %vm491, %v832, 0
    %840 = vmatpush.bf16.msra.mxu0 0
    %841 = vmatpush.bf16.msra.mxu0 0
    %842 = vmatpush.bf16.msra.mxu0 0
    %843 = vmatpush.bf16.msra.mxu0 0
    %844 = vmatpush.bf16.msra.mxu0 %v836
    %845 = vmatpush.bf16.msra.mxu0 %v835
    %846 = vmatpush.bf16.msra.mxu0 %v834
    %847 = vmatpush.bf16.msra.mxu0 %v833
    %848 = vmatmul.bf16.gmra.mxu0 %v838
    %v849 = vpop.f32.mrf.mxu0
    %v850 = vadd.f32 0.0, %v849
    %v851 = vpop.f32.mrf.mxu0
    %v852 = vadd.f32 0.0, %v851
    %853 = vdwg.mxu0
    %v854 = vadd.f32 %v821, %v850
    %v855 = vadd.f32 %v822, %v852
    %s856 = scalar_lea.vmem %s7, 768
    %v857 = vld [vmem:[%s856] sm:$0xff]
    %v858 = vld [vmem:[%s856 + $0x8] sm:$0xff]
    %v859 = vld [vmem:[%s856 + $0x10] sm:$0xff]
    %v860 = vld [vmem:[%s856 + $0x18] sm:$0xff]
    %v861 = vld [vmem:[%s856 + $0x20] sm:$0xff]
    %v862 = vld [vmem:[%s856 + $0x28] sm:$0xff]
    %v863 = vld [vmem:[%s856 + $0x30] sm:$0xff]
    %v864 = vld [vmem:[%s856 + $0x38] sm:$0xff]
    %v865 = vpack.c.bf16 %v447, %v445
    %v866 = vpack.c.bf16 %v858, %v857
    %v867 = vpack.c.bf16 %v860, %v859
    %v868 = vpack.c.bf16 %v862, %v861
    %v869 = vpack.c.bf16 %v864, %v863
    %v871 = vsel %vm491, %v865, 0
    %873 = vmatpush.bf16.msra.mxu0 0
    %874 = vmatpush.bf16.msra.mxu0 0
    %875 = vmatpush.bf16.msra.mxu0 0
    %876 = vmatpush.bf16.msra.mxu0 0
    %877 = vmatpush.bf16.msra.mxu0 %v869
    %878 = vmatpush.bf16.msra.mxu0 %v868
    %879 = vmatpush.bf16.msra.mxu0 %v867
    %880 = vmatpush.bf16.msra.mxu0 %v866
    %881 = vmatmul.bf16.gmra.mxu0 %v871
    %v882 = vpop.f32.mrf.mxu0
    %v883 = vadd.f32 0.0, %v882
    %v884 = vpop.f32.mrf.mxu0
    %v885 = vadd.f32 0.0, %v884
    %886 = vdwg.mxu0
    %v887 = vadd.f32 %v854, %v883
    %v888 = vadd.f32 %v855, %v885
    %s889 = scalar_lea.vmem %s7, 832
    %v890 = vld [vmem:[%s889] sm:$0xff]
    %v891 = vld [vmem:[%s889 + $0x8] sm:$0xff]
    %v892 = vld [vmem:[%s889 + $0x10] sm:$0xff]
    %v893 = vld [vmem:[%s889 + $0x18] sm:$0xff]
    %v894 = vld [vmem:[%s889 + $0x20] sm:$0xff]
    %v895 = vld [vmem:[%s889 + $0x28] sm:$0xff]
    %v896 = vld [vmem:[%s889 + $0x30] sm:$0xff]
    %v897 = vld [vmem:[%s889 + $0x38] sm:$0xff]
    %v898 = vpack.c.bf16 %v452, %v450
    %v899 = vpack.c.bf16 %v891, %v890
    %v900 = vpack.c.bf16 %v893, %v892
    %v901 = vpack.c.bf16 %v895, %v894
    %v902 = vpack.c.bf16 %v897, %v896
    %v904 = vsel %vm491, %v898, 0
    %906 = vmatpush.bf16.msra.mxu0 0
    %907 = vmatpush.bf16.msra.mxu0 0
    %908 = vmatpush.bf16.msra.mxu0 0
    %909 = vmatpush.bf16.msra.mxu0 0
    %910 = vmatpush.bf16.msra.mxu0 %v902
    %911 = vmatpush.bf16.msra.mxu0 %v901
    %912 = vmatpush.bf16.msra.mxu0 %v900
    %913 = vmatpush.bf16.msra.mxu0 %v899
    %914 = vmatmul.bf16.gmra.mxu0 %v904
    %v915 = vpop.f32.mrf.mxu0
    %v916 = vadd.f32 0.0, %v915
    %v917 = vpop.f32.mrf.mxu0
    %v918 = vadd.f32 0.0, %v917
    %919 = vdwg.mxu0
    %v920 = vadd.f32 %v887, %v916
    %v921 = vadd.f32 %v888, %v918
    %s922 = scalar_lea.vmem %s7, 896
    %v923 = vld [vmem:[%s922] sm:$0xff]
    %v924 = vld [vmem:[%s922 + $0x8] sm:$0xff]
    %v925 = vld [vmem:[%s922 + $0x10] sm:$0xff]
    %v926 = vld [vmem:[%s922 + $0x18] sm:$0xff]
    %v927 = vld [vmem:[%s922 + $0x20] sm:$0xff]
    %v928 = vld [vmem:[%s922 + $0x28] sm:$0xff]
    %v929 = vld [vmem:[%s922 + $0x30] sm:$0xff]
    %v930 = vld [vmem:[%s922 + $0x38] sm:$0xff]
    %v931 = vpack.c.bf16 %v457, %v455
    %v932 = vpack.c.bf16 %v924, %v923
    %v933 = vpack.c.bf16 %v926, %v925
    %v934 = vpack.c.bf16 %v928, %v927
    %v935 = vpack.c.bf16 %v930, %v929
    %v937 = vsel %vm491, %v931, 0
    %939 = vmatpush.bf16.msra.mxu0 0
    %940 = vmatpush.bf16.msra.mxu0 0
    %941 = vmatpush.bf16.msra.mxu0 0
    %942 = vmatpush.bf16.msra.mxu0 0
    %943 = vmatpush.bf16.msra.mxu0 %v935
    %944 = vmatpush.bf16.msra.mxu0 %v934
    %945 = vmatpush.bf16.msra.mxu0 %v933
    %946 = vmatpush.bf16.msra.mxu0 %v932
    %947 = vmatmul.bf16.gmra.mxu0 %v937
    %v948 = vpop.f32.mrf.mxu0
    %v949 = vadd.f32 0.0, %v948
    %v950 = vpop.f32.mrf.mxu0
    %v951 = vadd.f32 0.0, %v950
    %952 = vdwg.mxu0
    %v953 = vadd.f32 %v920, %v949
    %v954 = vadd.f32 %v921, %v951
    %s955 = scalar_lea.vmem %s7, 960
    %v956 = vld [vmem:[%s955] sm:$0xff]
    %v957 = vld [vmem:[%s955 + $0x8] sm:$0xff]
    %v958 = vld [vmem:[%s955 + $0x10] sm:$0xff]
    %v959 = vld [vmem:[%s955 + $0x18] sm:$0xff]
    %v960 = vld [vmem:[%s955 + $0x20] sm:$0xff]
    %v961 = vld [vmem:[%s955 + $0x28] sm:$0xff]
    %v962 = vld [vmem:[%s955 + $0x30] sm:$0xff]
    %v963 = vld [vmem:[%s955 + $0x38] sm:$0xff]
    %v964 = vpack.c.bf16 %v462, %v460
    %v965 = vpack.c.bf16 %v957, %v956
    %v966 = vpack.c.bf16 %v959, %v958
    %v967 = vpack.c.bf16 %v961, %v960
    %v968 = vpack.c.bf16 %v963, %v962
    %v970 = vsel %vm491, %v964, 0
    %972 = vmatpush.bf16.msra.mxu0 0
    %973 = vmatpush.bf16.msra.mxu0 0
    %974 = vmatpush.bf16.msra.mxu0 0
    %975 = vmatpush.bf16.msra.mxu0 0
    %976 = vmatpush.bf16.msra.mxu0 %v968
    %977 = vmatpush.bf16.msra.mxu0 %v967
    %978 = vmatpush.bf16.msra.mxu0 %v966
    %979 = vmatpush.bf16.msra.mxu0 %v965
    %980 = vmatmul.bf16.gmra.mxu0 %v970
    %v981 = vpop.f32.mrf.mxu0
    %v982 = vadd.f32 0.0, %v981
    %v983 = vpop.f32.mrf.mxu0
    %v984 = vadd.f32 0.0, %v983
    %985 = vdwg.mxu0
    %v986 = vadd.f32 %v953, %v982
    %v987 = vadd.f32 %v954, %v984
    %v988 = vld [vmem:[%s9] sm:$0x1]
    %v990 = vperm.slane %v988, 0
    %v992 = vadd.f32 %v986, %v990
    %v993 = vadd.f32 %v987, %v990
    %v994 = vmax.f32 %v992, 0.0
    %v995 = vmax.f32 %v993, 0.0
    %v996 = vld [vmem:[%s11] sm:$0xff]
    %v997 = vld [vmem:[%s11 + $0x8] sm:$0xff]
    %v998 = vld [vmem:[%s11 + $0x10] sm:$0xff]
    %v999 = vld [vmem:[%s11 + $0x18] sm:$0xff]
    %v1000 = vld [vmem:[%s11 + $0x20] sm:$0xff]
    %v1001 = vld [vmem:[%s11 + $0x28] sm:$0xff]
    %v1002 = vld [vmem:[%s11 + $0x30] sm:$0xff]
    %v1003 = vld [vmem:[%s11 + $0x38] sm:$0xff]
    %v1004 = vld [vmem:[%s11 + $0x40] sm:$0xff]
    %v1005 = vld [vmem:[%s11 + $0x48] sm:$0xff]
    %v1006 = vld [vmem:[%s11 + $0x50] sm:$0xff]
    %v1007 = vld [vmem:[%s11 + $0x58] sm:$0xff]
    %v1008 = vld [vmem:[%s11 + $0x60] sm:$0xff]
    %v1009 = vld [vmem:[%s11 + $0x68] sm:$0xff]
    %v1010 = vld [vmem:[%s11 + $0x70] sm:$0xff]
    %v1011 = vld [vmem:[%s11 + $0x78] sm:$0xff]
    %v1012 = vpack.c.bf16 %v995, %v994
    %v1013 = vpack.c.bf16 %v997, %v996
    %v1014 = vpack.c.bf16 %v999, %v998
    %v1015 = vpack.c.bf16 %v1001, %v1000
    %v1016 = vpack.c.bf16 %v1003, %v1002
    %v1017 = vpack.c.bf16 %v1005, %v1004
    %v1018 = vpack.c.bf16 %v1007, %v1006
    %v1019 = vpack.c.bf16 %v1009, %v1008
    %v1020 = vpack.c.bf16 %v1011, %v1010
    %v1021 = vld [vmem:[%s13] sm:$0x1]
    %v1023 = vperm.slane %v1021, 0
    %1025 = vmatpush.bf16.msra.mxu0 %v1020
    %1026 = vmatpush.bf16.msra.mxu0 %v1019
    %1027 = vmatpush.bf16.msra.mxu0 %v1018
    %1028 = vmatpush.bf16.msra.mxu0 %v1017
    %1029 = vmatpush.bf16.msra.mxu0 %v1016
    %1030 = vmatpush.bf16.msra.mxu0 %v1015
    %1031 = vmatpush.bf16.msra.mxu0 %v1014
    %1032 = vmatpush.bf16.msra.mxu0 %v1013
    %1033 = vmatmul.bf16.gmra.mxu0 %v1012
    %v1034 = vpop.f32.mrf.mxu0
    %v1035 = vadd.f32 %v1023, %v1034
    %v1036 = vpop.f32.mrf.mxu0
    %v1037 = vadd.f32 %v1023, %v1036
    %1038 = vdwg.mxu0
    %v1039 = vmax.f32 %v1035, 0.0
    %v1040 = vmax.f32 %v1037, 0.0
    %v1041 = vld [vmem:[%s57] sm:$0xff]
    %v1042 = vld [vmem:[%s57 + $0x8] sm:$0xff]
    %v1043 = vld [vmem:[%s57 + $0x10] sm:$0xff]
    %v1044 = vld [vmem:[%s57 + $0x18] sm:$0xff]
    %v1045 = vld [vmem:[%s57 + $0x20] sm:$0xff]
    %v1046 = vld [vmem:[%s57 + $0x28] sm:$0xff]
    %v1047 = vld [vmem:[%s57 + $0x30] sm:$0xff]
    %v1048 = vld [vmem:[%s57 + $0x38] sm:$0xff]
    %v1049 = vld [vmem:[%s57 + $0x40] sm:$0xff]
    %v1050 = vld [vmem:[%s57 + $0x48] sm:$0xff]
    %v1051 = vld [vmem:[%s57 + $0x50] sm:$0xff]
    %v1052 = vld [vmem:[%s57 + $0x58] sm:$0xff]
    %v1053 = vld [vmem:[%s57 + $0x60] sm:$0xff]
    %v1054 = vld [vmem:[%s57 + $0x68] sm:$0xff]
    %v1055 = vld [vmem:[%s57 + $0x70] sm:$0xff]
    %v1056 = vld [vmem:[%s57 + $0x78] sm:$0xff]
    %v1057 = vpack.c.bf16 %v1040, %v1039
    %v1058 = vpack.c.bf16 %v1042, %v1041
    %v1059 = vpack.c.bf16 %v1044, %v1043
    %v1060 = vpack.c.bf16 %v1046, %v1045
    %v1061 = vpack.c.bf16 %v1048, %v1047
    %v1062 = vpack.c.bf16 %v1050, %v1049
    %v1063 = vpack.c.bf16 %v1052, %v1051
    %v1064 = vpack.c.bf16 %v1054, %v1053
    %v1065 = vpack.c.bf16 %v1056, %v1055
    %v1066 = vld [vmem:[%s59] sm:$0x1]
    %v1068 = vperm.slane %v1066, 0
    %1070 = vmatpush.bf16.msra.mxu0 %v1065
    %1071 = vmatpush.bf16.msra.mxu0 %v1064
    %1072 = vmatpush.bf16.msra.mxu0 %v1063
    %1073 = vmatpush.bf16.msra.mxu0 %v1062
    %1074 = vmatpush.bf16.msra.mxu0 %v1061
    %1075 = vmatpush.bf16.msra.mxu0 %v1060
    %1076 = vmatpush.bf16.msra.mxu0 %v1059
    %1077 = vmatpush.bf16.msra.mxu0 %v1058
    %1078 = vmatmul.bf16.gmra.mxu0 %v1057
    %v1079 = vpop.f32.mrf.mxu0
    %v1080 = vadd.f32 %v1068, %v1079
    %v1081 = vpop.f32.mrf.mxu0
    %v1082 = vadd.f32 %v1068, %v1081
    %1083 = vdwg.mxu0
    %1084 = vst [vmem:[#allocation4] sm:$0xff] %v1080
    %1085 = vst [vmem:[#allocation4 + $0x8] sm:$0xff] %v1082
    %v1086 = vld [vmem:[%s5] sm:$0xff]
    %v1087 = vld [vmem:[%s5 + $0x8] sm:$0xff]
    %v1088 = vld [vmem:[%s5 + $0x10] sm:$0xff]
    %v1089 = vld [vmem:[%s5 + $0x18] sm:$0xff]
    %v1090 = vld [vmem:[%s5 + $0x20] sm:$0xff]
    %v1091 = vld [vmem:[%s5 + $0x28] sm:$0xff]
    %v1092 = vld [vmem:[%s5 + $0x30] sm:$0xff]
    %v1093 = vld [vmem:[%s5 + $0x38] sm:$0xff]
    %v1094 = vld [vmem:[%s5 + $0x40] sm:$0xff]
    %v1095 = vld [vmem:[%s5 + $0x48] sm:$0xff]
    %v1096 = vld [vmem:[%s5 + $0x50] sm:$0xff]
    %v1097 = vld [vmem:[%s5 + $0x58] sm:$0xff]
    %v1098 = vld [vmem:[%s5 + $0x60] sm:$0xff]
    %v1099 = vld [vmem:[%s5 + $0x68] sm:$0xff]
    %v1100 = vld [vmem:[%s5 + $0x70] sm:$0xff]
    %v1101 = vld [vmem:[%s5 + $0x78] sm:$0xff]
    %v1102 = vld [vmem:[%s5 + $0x80] sm:$0xff]
    %v1103 = vld [vmem:[%s5 + $0x88] sm:$0xff]
    %v1104 = vld [vmem:[%s5 + $0x90] sm:$0xff]
    %v1105 = vld [vmem:[%s5 + $0x98] sm:$0xff]
    %v1106 = vld [vmem:[%s5 + $0xa0] sm:$0xff]
    %v1107 = vld [vmem:[%s5 + $0xa8] sm:$0xff]
    %v1108 = vld [vmem:[%s5 + $0xb0] sm:$0xff]
    %v1109 = vld [vmem:[%s5 + $0xb8] sm:$0xff]
    %v1110 = vld [vmem:[%s5 + $0xc0] sm:$0xff]
    %v1111 = vld [vmem:[%s5 + $0xc8] sm:$0xff]
    %v1112 = vld [vmem:[%s5 + $0xd0] sm:$0xff]
    %v1113 = vld [vmem:[%s5 + $0xd8] sm:$0xff]
    %v1114 = vld [vmem:[%s5 + $0xe0] sm:$0xff]
    %v1115 = vld [vmem:[%s5 + $0xe8] sm:$0xff]
    %v1116 = vld [vmem:[%s5 + $0xf0] sm:$0xff]
    %v1117 = vld [vmem:[%s5 + $0xf8] sm:$0xff]
    %v1118 = vpack.c.bf16 %v1088, %v1086
    %v1119 = vpack.c.bf16 %v1089, %v1087
    %v1120 = vpack.c.bf16 %v1092, %v1090
    %v1121 = vpack.c.bf16 %v1093, %v1091
    %v1122 = vpack.c.bf16 %v1096, %v1094
    %v1123 = vpack.c.bf16 %v1097, %v1095
    %v1124 = vpack.c.bf16 %v1100, %v1098
    %v1125 = vpack.c.bf16 %v1101, %v1099
    %v1126 = vpack.c.bf16 %v1104, %v1102
    %v1127 = vpack.c.bf16 %v1105, %v1103
    %v1128 = vpack.c.bf16 %v1108, %v1106
    %v1129 = vpack.c.bf16 %v1109, %v1107
    %v1130 = vpack.c.bf16 %v1112, %v1110
    %v1131 = vpack.c.bf16 %v1113, %v1111
    %v1132 = vpack.c.bf16 %v1116, %v1114
    %v1133 = vpack.c.bf16 %v1117, %v1115
    %1134 = vmatpush.bf16.msra.mxu0 %v277
    %1135 = vmatpush.bf16.msra.mxu0 %v276
    %1136 = vmatpush.bf16.msra.mxu0 %v275
    %1137 = vmatpush.bf16.msra.mxu0 %v274
    %1138 = vmatpush.bf16.msra.mxu0 %v273
    %1139 = vmatpush.bf16.msra.mxu0 %v272
    %1140 = vmatpush.bf16.msra.mxu0 %v271
    %1141 = vmatpush.bf16.msra.mxu0 %v270
    %1142 = vmatmul.bf16.gmra.mxu0 %v1118
    %v1143 = vpop.f32.mrf.mxu0
    %v1144 = vadd.f32 0.0, %v1143
    %v1145 = vpop.f32.mrf.mxu0
    %v1146 = vadd.f32 0.0, %v1145
    %1147 = vmatmul.bf16.gmra.mxu0 %v1120
    %v1148 = vpop.f32.mrf.mxu0
    %v1149 = vadd.f32 0.0, %v1148
    %v1150 = vpop.f32.mrf.mxu0
    %v1151 = vadd.f32 0.0, %v1150
    %1152 = vmatmul.bf16.gmra.mxu0 %v1122
    %v1153 = vpop.f32.mrf.mxu0
    %v1154 = vadd.f32 0.0, %v1153
    %v1155 = vpop.f32.mrf.mxu0
    %v1156 = vadd.f32 0.0, %v1155
    %1157 = vmatmul.bf16.gmra.mxu0 %v1124
    %v1158 = vpop.f32.mrf.mxu0
    %v1159 = vadd.f32 0.0, %v1158
    %v1160 = vpop.f32.mrf.mxu0
    %v1161 = vadd.f32 0.0, %v1160
    %1162 = vmatmul.bf16.gmra.mxu0 %v1126
    %v1163 = vpop.f32.mrf.mxu0
    %v1164 = vadd.f32 0.0, %v1163
    %v1165 = vpop.f32.mrf.mxu0
    %v1166 = vadd.f32 0.0, %v1165
    %1167 = vmatmul.bf16.gmra.mxu0 %v1128
    %v1168 = vpop.f32.mrf.mxu0
    %v1169 = vadd.f32 0.0, %v1168
    %v1170 = vpop.f32.mrf.mxu0
    %v1171 = vadd.f32 0.0, %v1170
    %1172 = vmatmul.bf16.gmra.mxu0 %v1130
    %v1173 = vpop.f32.mrf.mxu0
    %v1174 = vadd.f32 0.0, %v1173
    %v1175 = vpop.f32.mrf.mxu0
    %v1176 = vadd.f32 0.0, %v1175
    %1177 = vmatmul.bf16.gmra.mxu0 %v1132
    %v1178 = vpop.f32.mrf.mxu0
    %v1179 = vadd.f32 0.0, %v1178
    %v1180 = vpop.f32.mrf.mxu0
    %v1181 = vadd.f32 0.0, %v1180
    %1182 = vdwg.mxu0
    %1183 = vmatpush.bf16.msra.mxu0 %v285
    %1184 = vmatpush.bf16.msra.mxu0 %v284
    %1185 = vmatpush.bf16.msra.mxu0 %v283
    %1186 = vmatpush.bf16.msra.mxu0 %v282
    %1187 = vmatpush.bf16.msra.mxu0 %v281
    %1188 = vmatpush.bf16.msra.mxu0 %v280
    %1189 = vmatpush.bf16.msra.mxu0 %v279
    %1190 = vmatpush.bf16.msra.mxu0 %v278
    %1191 = vmatmul.bf16.gmra.mxu0 %v1119
    %v1192 = vpop.f32.mrf.mxu0
    %v1193 = vadd.f32 %v1144, %v1192
    %v1194 = vpop.f32.mrf.mxu0
    %v1195 = vadd.f32 %v1146, %v1194
    %1196 = vmatmul.bf16.gmra.mxu0 %v1121
    %v1197 = vpop.f32.mrf.mxu0
    %v1198 = vadd.f32 %v1149, %v1197
    %v1199 = vpop.f32.mrf.mxu0
    %v1200 = vadd.f32 %v1151, %v1199
    %1201 = vmatmul.bf16.gmra.mxu0 %v1123
    %v1202 = vpop.f32.mrf.mxu0
    %v1203 = vadd.f32 %v1154, %v1202
    %v1204 = vpop.f32.mrf.mxu0
    %v1205 = vadd.f32 %v1156, %v1204
    %1206 = vmatmul.bf16.gmra.mxu0 %v1125
    %v1207 = vpop.f32.mrf.mxu0
    %v1208 = vadd.f32 %v1159, %v1207
    %v1209 = vpop.f32.mrf.mxu0
    %v1210 = vadd.f32 %v1161, %v1209
    %1211 = vmatmul.bf16.gmra.mxu0 %v1127
    %v1212 = vpop.f32.mrf.mxu0
    %v1213 = vadd.f32 %v1164, %v1212
    %v1214 = vpop.f32.mrf.mxu0
    %v1215 = vadd.f32 %v1166, %v1214
    %1216 = vmatmul.bf16.gmra.mxu0 %v1129
    %v1217 = vpop.f32.mrf.mxu0
    %v1218 = vadd.f32 %v1169, %v1217
    %v1219 = vpop.f32.mrf.mxu0
    %v1220 = vadd.f32 %v1171, %v1219
    %1221 = vmatmul.bf16.gmra.mxu0 %v1131
    %v1222 = vpop.f32.mrf.mxu0
    %v1223 = vadd.f32 %v1174, %v1222
    %v1224 = vpop.f32.mrf.mxu0
    %v1225 = vadd.f32 %v1176, %v1224
    %1226 = vmatmul.bf16.gmra.mxu0 %v1133
    %v1227 = vpop.f32.mrf.mxu0
    %v1228 = vadd.f32 %v1179, %v1227
    %v1229 = vpop.f32.mrf.mxu0
    %v1230 = vadd.f32 %v1181, %v1229
    %1231 = vdwg.mxu0
    %v1232 = vld [vmem:[%s15] sm:$0xff]
    %v1233 = vld [vmem:[%s15 + $0x8] sm:$0xff]
    %v1234 = vld [vmem:[%s15 + $0x10] sm:$0xff]
    %v1235 = vld [vmem:[%s15 + $0x18] sm:$0xff]
    %v1236 = vld [vmem:[%s15 + $0x20] sm:$0xff]
    %v1237 = vld [vmem:[%s15 + $0x28] sm:$0xff]
    %v1238 = vld [vmem:[%s15 + $0x30] sm:$0xff]
    %v1239 = vld [vmem:[%s15 + $0x38] sm:$0xff]
    %v1240 = vld [vmem:[%s15 + $0x40] sm:$0xff]
    %v1241 = vld [vmem:[%s15 + $0x48] sm:$0xff]
    %v1242 = vld [vmem:[%s15 + $0x50] sm:$0xff]
    %v1243 = vld [vmem:[%s15 + $0x58] sm:$0xff]
    %v1244 = vld [vmem:[%s15 + $0x60] sm:$0xff]
    %v1245 = vld [vmem:[%s15 + $0x68] sm:$0xff]
    %v1246 = vld [vmem:[%s15 + $0x70] sm:$0xff]
    %v1247 = vld [vmem:[%s15 + $0x78] sm:$0xff]
    %v1248 = vld [vmem:[%s17] sm:$0xff]
    %v1249 = vld [vmem:[%s17 + $0x8] sm:$0xff]
    %v1250 = vld [vmem:[%s17 + $0x10] sm:$0xff]
    %v1251 = vld [vmem:[%s17 + $0x18] sm:$0xff]
    %v1252 = vld [vmem:[%s17 + $0x20] sm:$0xff]
    %v1253 = vld [vmem:[%s17 + $0x28] sm:$0xff]
    %v1254 = vld [vmem:[%s17 + $0x30] sm:$0xff]
    %v1255 = vld [vmem:[%s17 + $0x38] sm:$0xff]
    %v1256 = vpack.c.bf16 %v1195, %v1193
    %v1257 = vpack.c.bf16 %v1200, %v1198
    %v1258 = vpack.c.bf16 %v1205, %v1203
    %v1259 = vpack.c.bf16 %v1210, %v1208
    %v1260 = vpack.c.bf16 %v1215, %v1213
    %v1261 = vpack.c.bf16 %v1220, %v1218
    %v1262 = vpack.c.bf16 %v1225, %v1223
    %v1263 = vpack.c.bf16 %v1230, %v1228
    %v1264 = vpack.c.bf16 %v1249, %v1248
    %v1265 = vpack.c.bf16 %v1251, %v1250
    %v1266 = vpack.c.bf16 %v1253, %v1252
    %v1267 = vpack.c.bf16 %v1255, %v1254
    %v1269 = vsel %vm491, %v1256, 0
    %v1272 = vsel %vm491, %v1257, 0
    %v1275 = vsel %vm491, %v1258, 0
    %v1278 = vsel %vm491, %v1259, 0
    %v1281 = vsel %vm491, %v1260, 0
    %v1284 = vsel %vm491, %v1261, 0
    %v1287 = vsel %vm491, %v1262, 0
    %v1290 = vsel %vm491, %v1263, 0
    %1292 = vmatpush.bf16.msra.mxu0 0
    %1293 = vmatpush.bf16.msra.mxu0 0
    %1294 = vmatpush.bf16.msra.mxu0 0
    %1295 = vmatpush.bf16.msra.mxu0 0
    %1296 = vmatpush.bf16.msra.mxu0 %v1267
    %1297 = vmatpush.bf16.msra.mxu0 %v1266
    %1298 = vmatpush.bf16.msra.mxu0 %v1265
    %1299 = vmatpush.bf16.msra.mxu0 %v1264
    %1300 = vmatmul.bf16.gmra.mxu0 %v1269
    %v1301 = vpop.f32.mrf.mxu0
    %v1302 = vadd.f32 0.0, %v1301
    %v1303 = vpop.f32.mrf.mxu0
    %v1304 = vadd.f32 0.0, %v1303
    %1305 = vmatmul.bf16.gmra.mxu0 %v1272
    %v1306 = vpop.f32.mrf.mxu0
    %v1307 = vadd.f32 0.0, %v1306
    %v1308 = vpop.f32.mrf.mxu0
    %v1309 = vadd.f32 0.0, %v1308
    %1310 = vmatmul.bf16.gmra.mxu0 %v1275
    %v1311 = vpop.f32.mrf.mxu0
    %v1312 = vadd.f32 0.0, %v1311
    %v1313 = vpop.f32.mrf.mxu0
    %v1314 = vadd.f32 0.0, %v1313
    %1315 = vmatmul.bf16.gmra.mxu0 %v1278
    %v1316 = vpop.f32.mrf.mxu0
    %v1317 = vadd.f32 0.0, %v1316
    %v1318 = vpop.f32.mrf.mxu0
    %v1319 = vadd.f32 0.0, %v1318
    %1320 = vmatmul.bf16.gmra.mxu0 %v1281
    %v1321 = vpop.f32.mrf.mxu0
    %v1322 = vadd.f32 0.0, %v1321
    %v1323 = vpop.f32.mrf.mxu0
    %v1324 = vadd.f32 0.0, %v1323
    %1325 = vmatmul.bf16.gmra.mxu0 %v1284
    %v1326 = vpop.f32.mrf.mxu0
    %v1327 = vadd.f32 0.0, %v1326
    %v1328 = vpop.f32.mrf.mxu0
    %v1329 = vadd.f32 0.0, %v1328
    %1330 = vmatmul.bf16.gmra.mxu0 %v1287
    %v1331 = vpop.f32.mrf.mxu0
    %v1332 = vadd.f32 0.0, %v1331
    %v1333 = vpop.f32.mrf.mxu0
    %v1334 = vadd.f32 0.0, %v1333
    %1335 = vmatmul.bf16.gmra.mxu0 %v1290
    %v1336 = vpop.f32.mrf.mxu0
    %v1337 = vadd.f32 0.0, %v1336
    %v1338 = vpop.f32.mrf.mxu0
    %v1339 = vadd.f32 0.0, %v1338
    %1340 = vdwg.mxu0
    %v1341 = vpack.c.bf16 %v1233, %v1232
    %v1342 = vpack.c.bf16 %v1235, %v1234
    %v1343 = vpack.c.bf16 %v1237, %v1236
    %v1344 = vpack.c.bf16 %v1239, %v1238
    %v1345 = vpack.c.bf16 %v1241, %v1240
    %v1346 = vpack.c.bf16 %v1243, %v1242
    %v1347 = vpack.c.bf16 %v1245, %v1244
    %v1348 = vpack.c.bf16 %v1247, %v1246
    %v1349 = vpack.c.bf16 %v1304, %v1302
    %v1350 = vpack.c.bf16 %v1309, %v1307
    %v1351 = vpack.c.bf16 %v1314, %v1312
    %v1352 = vpack.c.bf16 %v1319, %v1317
    %v1353 = vpack.c.bf16 %v1324, %v1322
    %v1354 = vpack.c.bf16 %v1329, %v1327
    %v1355 = vpack.c.bf16 %v1334, %v1332
    %v1356 = vpack.c.bf16 %v1339, %v1337
    %s1357 = scalar_lea.vmem %s15, 128
    %v1358 = vld [vmem:[%s1357] sm:$0xff]
    %v1359 = vld [vmem:[%s1357 + $0x8] sm:$0xff]
    %v1360 = vld [vmem:[%s1357 + $0x10] sm:$0xff]
    %v1361 = vld [vmem:[%s1357 + $0x18] sm:$0xff]
    %v1362 = vld [vmem:[%s1357 + $0x20] sm:$0xff]
    %v1363 = vld [vmem:[%s1357 + $0x28] sm:$0xff]
    %v1364 = vld [vmem:[%s1357 + $0x30] sm:$0xff]
    %v1365 = vld [vmem:[%s1357 + $0x38] sm:$0xff]
    %v1366 = vld [vmem:[%s1357 + $0x40] sm:$0xff]
    %v1367 = vld [vmem:[%s1357 + $0x48] sm:$0xff]
    %v1368 = vld [vmem:[%s1357 + $0x50] sm:$0xff]
    %v1369 = vld [vmem:[%s1357 + $0x58] sm:$0xff]
    %v1370 = vld [vmem:[%s1357 + $0x60] sm:$0xff]
    %v1371 = vld [vmem:[%s1357 + $0x68] sm:$0xff]
    %v1372 = vld [vmem:[%s1357 + $0x70] sm:$0xff]
    %v1373 = vld [vmem:[%s1357 + $0x78] sm:$0xff]
    %s1374 = scalar_lea.vmem %s17, 64
    %v1375 = vld [vmem:[%s1374] sm:$0xff]
    %v1376 = vld [vmem:[%s1374 + $0x8] sm:$0xff]
    %v1377 = vld [vmem:[%s1374 + $0x10] sm:$0xff]
    %v1378 = vld [vmem:[%s1374 + $0x18] sm:$0xff]
    %v1379 = vld [vmem:[%s1374 + $0x20] sm:$0xff]
    %v1380 = vld [vmem:[%s1374 + $0x28] sm:$0xff]
    %v1381 = vld [vmem:[%s1374 + $0x30] sm:$0xff]
    %v1382 = vld [vmem:[%s1374 + $0x38] sm:$0xff]
    %v1383 = vpack.c.bf16 %v1376, %v1375
    %v1384 = vpack.c.bf16 %v1378, %v1377
    %v1385 = vpack.c.bf16 %v1380, %v1379
    %v1386 = vpack.c.bf16 %v1382, %v1381
    %1387 = vmatpush.bf16.msra.mxu0 0
    %1388 = vmatpush.bf16.msra.mxu0 0
    %1389 = vmatpush.bf16.msra.mxu0 0
    %1390 = vmatpush.bf16.msra.mxu0 0
    %1391 = vmatpush.bf16.msra.mxu0 %v1386
    %1392 = vmatpush.bf16.msra.mxu0 %v1385
    %1393 = vmatpush.bf16.msra.mxu0 %v1384
    %1394 = vmatpush.bf16.msra.mxu0 %v1383
    %1395 = vmatmul.bf16.gmra.mxu0 %v1269
    %v1396 = vpop.f32.mrf.mxu0
    %v1397 = vadd.f32 0.0, %v1396
    %v1398 = vpop.f32.mrf.mxu0
    %v1399 = vadd.f32 0.0, %v1398
    %1400 = vmatmul.bf16.gmra.mxu0 %v1272
    %v1401 = vpop.f32.mrf.mxu0
    %v1402 = vadd.f32 0.0, %v1401
    %v1403 = vpop.f32.mrf.mxu0
    %v1404 = vadd.f32 0.0, %v1403
    %1405 = vmatmul.bf16.gmra.mxu0 %v1275
    %v1406 = vpop.f32.mrf.mxu0
    %v1407 = vadd.f32 0.0, %v1406
    %v1408 = vpop.f32.mrf.mxu0
    %v1409 = vadd.f32 0.0, %v1408
    %1410 = vmatmul.bf16.gmra.mxu0 %v1278
    %v1411 = vpop.f32.mrf.mxu0
    %v1412 = vadd.f32 0.0, %v1411
    %v1413 = vpop.f32.mrf.mxu0
    %v1414 = vadd.f32 0.0, %v1413
    %1415 = vmatmul.bf16.gmra.mxu0 %v1281
    %v1416 = vpop.f32.mrf.mxu0
    %v1417 = vadd.f32 0.0, %v1416
    %v1418 = vpop.f32.mrf.mxu0
    %v1419 = vadd.f32 0.0, %v1418
    %1420 = vmatmul.bf16.gmra.mxu0 %v1284
    %v1421 = vpop.f32.mrf.mxu0
    %v1422 = vadd.f32 0.0, %v1421
    %v1423 = vpop.f32.mrf.mxu0
    %v1424 = vadd.f32 0.0, %v1423
    %1425 = vmatmul.bf16.gmra.mxu0 %v1287
    %v1426 = vpop.f32.mrf.mxu0
    %v1427 = vadd.f32 0.0, %v1426
    %v1428 = vpop.f32.mrf.mxu0
    %v1429 = vadd.f32 0.0, %v1428
    %1430 = vmatmul.bf16.gmra.mxu0 %v1290
    %v1431 = vpop.f32.mrf.mxu0
    %v1432 = vadd.f32 0.0, %v1431
    %v1433 = vpop.f32.mrf.mxu0
    %v1434 = vadd.f32 0.0, %v1433
    %1435 = vdwg.mxu0
    %v1436 = vpack.c.bf16 %v1359, %v1358
    %v1437 = vpack.c.bf16 %v1361, %v1360
    %v1438 = vpack.c.bf16 %v1363, %v1362
    %v1439 = vpack.c.bf16 %v1365, %v1364
    %v1440 = vpack.c.bf16 %v1367, %v1366
    %v1441 = vpack.c.bf16 %v1369, %v1368
    %v1442 = vpack.c.bf16 %v1371, %v1370
    %v1443 = vpack.c.bf16 %v1373, %v1372
    %v1444 = vpack.c.bf16 %v1399, %v1397
    %v1445 = vpack.c.bf16 %v1404, %v1402
    %v1446 = vpack.c.bf16 %v1409, %v1407
    %v1447 = vpack.c.bf16 %v1414, %v1412
    %v1448 = vpack.c.bf16 %v1419, %v1417
    %v1449 = vpack.c.bf16 %v1424, %v1422
    %v1450 = vpack.c.bf16 %v1429, %v1427
    %v1451 = vpack.c.bf16 %v1434, %v1432
    %1452 = vmatpush.bf16.msra.mxu0 %v1451
    %1453 = vmatpush.bf16.msra.mxu0 %v1450
    %1454 = vmatpush.bf16.msra.mxu0 %v1449
    %1455 = vmatpush.bf16.msra.mxu0 %v1448
    %1456 = vmatpush.bf16.msra.mxu0 %v1447
    %1457 = vmatpush.bf16.msra.mxu0 %v1446
    %1458 = vmatpush.bf16.msra.mxu0 %v1445
    %1459 = vmatpush.bf16.msra.mxu0 %v1444
    %1460 = vmatmul.bf16.gmra.mxu0 %v1436
    %v1461 = vpop.f32.mrf.mxu0
    %v1462 = vadd.f32 0.0, %v1461
    %v1463 = vpop.f32.mrf.mxu0
    %v1464 = vadd.f32 0.0, %v1463
    %1465 = vmatmul.bf16.gmra.mxu0 %v1437
    %v1466 = vpop.f32.mrf.mxu0
    %v1467 = vadd.f32 0.0, %v1466
    %v1468 = vpop.f32.mrf.mxu0
    %v1469 = vadd.f32 0.0, %v1468
    %1470 = vmatmul.bf16.gmra.mxu0 %v1438
    %v1471 = vpop.f32.mrf.mxu0
    %v1472 = vadd.f32 0.0, %v1471
    %v1473 = vpop.f32.mrf.mxu0
    %v1474 = vadd.f32 0.0, %v1473
    %1475 = vmatmul.bf16.gmra.mxu0 %v1439
    %v1476 = vpop.f32.mrf.mxu0
    %v1477 = vadd.f32 0.0, %v1476
    %v1478 = vpop.f32.mrf.mxu0
    %v1479 = vadd.f32 0.0, %v1478
    %1480 = vmatmul.bf16.gmra.mxu0 %v1440
    %v1481 = vpop.f32.mrf.mxu0
    %v1482 = vadd.f32 0.0, %v1481
    %v1483 = vpop.f32.mrf.mxu0
    %v1484 = vadd.f32 0.0, %v1483
    %1485 = vmatmul.bf16.gmra.mxu0 %v1441
    %v1486 = vpop.f32.mrf.mxu0
    %v1487 = vadd.f32 0.0, %v1486
    %v1488 = vpop.f32.mrf.mxu0
    %v1489 = vadd.f32 0.0, %v1488
    %1490 = vmatmul.bf16.gmra.mxu0 %v1442
    %v1491 = vpop.f32.mrf.mxu0
    %v1492 = vadd.f32 0.0, %v1491
    %v1493 = vpop.f32.mrf.mxu0
    %v1494 = vadd.f32 0.0, %v1493
    %1495 = vmatmul.bf16.gmra.mxu0 %v1443
    %v1496 = vpop.f32.mrf.mxu0
    %v1497 = vadd.f32 0.0, %v1496
    %v1498 = vpop.f32.mrf.mxu0
    %v1499 = vadd.f32 0.0, %v1498
    %1500 = vdwg.mxu0
    %1501 = vmatpush.bf16.msra.mxu0 %v1356
    %1502 = vmatpush.bf16.msra.mxu0 %v1355
    %1503 = vmatpush.bf16.msra.mxu0 %v1354
    %1504 = vmatpush.bf16.msra.mxu0 %v1353
    %1505 = vmatpush.bf16.msra.mxu0 %v1352
    %1506 = vmatpush.bf16.msra.mxu0 %v1351
    %1507 = vmatpush.bf16.msra.mxu0 %v1350
    %1508 = vmatpush.bf16.msra.mxu0 %v1349
    %1509 = vmatmul.bf16.gmra.mxu0 %v1341
    %v1510 = vpop.f32.mrf.mxu0
    %v1511 = vadd.f32 %v1462, %v1510
    %v1512 = vpop.f32.mrf.mxu0
    %v1513 = vadd.f32 %v1464, %v1512
    %1514 = vmatmul.bf16.gmra.mxu0 %v1342
    %v1515 = vpop.f32.mrf.mxu0
    %v1516 = vadd.f32 %v1467, %v1515
    %v1517 = vpop.f32.mrf.mxu0
    %v1518 = vadd.f32 %v1469, %v1517
    %1519 = vmatmul.bf16.gmra.mxu0 %v1343
    %v1520 = vpop.f32.mrf.mxu0
    %v1521 = vadd.f32 %v1472, %v1520
    %v1522 = vpop.f32.mrf.mxu0
    %v1523 = vadd.f32 %v1474, %v1522
    %1524 = vmatmul.bf16.gmra.mxu0 %v1344
    %v1525 = vpop.f32.mrf.mxu0
    %v1526 = vadd.f32 %v1477, %v1525
    %v1527 = vpop.f32.mrf.mxu0
    %v1528 = vadd.f32 %v1479, %v1527
    %1529 = vmatmul.bf16.gmra.mxu0 %v1345
    %v1530 = vpop.f32.mrf.mxu0
    %v1531 = vadd.f32 %v1482, %v1530
    %v1532 = vpop.f32.mrf.mxu0
    %v1533 = vadd.f32 %v1484, %v1532
    %1534 = vmatmul.bf16.gmra.mxu0 %v1346
    %v1535 = vpop.f32.mrf.mxu0
    %v1536 = vadd.f32 %v1487, %v1535
    %v1537 = vpop.f32.mrf.mxu0
    %v1538 = vadd.f32 %v1489, %v1537
    %1539 = vmatmul.bf16.gmra.mxu0 %v1347
    %v1540 = vpop.f32.mrf.mxu0
    %v1541 = vadd.f32 %v1492, %v1540
    %v1542 = vpop.f32.mrf.mxu0
    %v1543 = vadd.f32 %v1494, %v1542
    %1544 = vmatmul.bf16.gmra.mxu0 %v1348
    %v1545 = vpop.f32.mrf.mxu0
    %v1546 = vadd.f32 %v1497, %v1545
    %v1547 = vpop.f32.mrf.mxu0
    %v1548 = vadd.f32 %v1499, %v1547
    %1549 = vdwg.mxu0
    %s1550 = scalar_lea.vmem %s15, 256
    %v1551 = vld [vmem:[%s1550] sm:$0xff]
    %v1552 = vld [vmem:[%s1550 + $0x8] sm:$0xff]
    %v1553 = vld [vmem:[%s1550 + $0x10] sm:$0xff]
    %v1554 = vld [vmem:[%s1550 + $0x18] sm:$0xff]
    %v1555 = vld [vmem:[%s1550 + $0x20] sm:$0xff]
    %v1556 = vld [vmem:[%s1550 + $0x28] sm:$0xff]
    %v1557 = vld [vmem:[%s1550 + $0x30] sm:$0xff]
    %v1558 = vld [vmem:[%s1550 + $0x38] sm:$0xff]
    %v1559 = vld [vmem:[%s1550 + $0x40] sm:$0xff]
    %v1560 = vld [vmem:[%s1550 + $0x48] sm:$0xff]
    %v1561 = vld [vmem:[%s1550 + $0x50] sm:$0xff]
    %v1562 = vld [vmem:[%s1550 + $0x58] sm:$0xff]
    %v1563 = vld [vmem:[%s1550 + $0x60] sm:$0xff]
    %v1564 = vld [vmem:[%s1550 + $0x68] sm:$0xff]
    %v1565 = vld [vmem:[%s1550 + $0x70] sm:$0xff]
    %v1566 = vld [vmem:[%s1550 + $0x78] sm:$0xff]
    %s1567 = scalar_lea.vmem %s17, 128
    %v1568 = vld [vmem:[%s1567] sm:$0xff]
    %v1569 = vld [vmem:[%s1567 + $0x8] sm:$0xff]
    %v1570 = vld [vmem:[%s1567 + $0x10] sm:$0xff]
    %v1571 = vld [vmem:[%s1567 + $0x18] sm:$0xff]
    %v1572 = vld [vmem:[%s1567 + $0x20] sm:$0xff]
    %v1573 = vld [vmem:[%s1567 + $0x28] sm:$0xff]
    %v1574 = vld [vmem:[%s1567 + $0x30] sm:$0xff]
    %v1575 = vld [vmem:[%s1567 + $0x38] sm:$0xff]
    %v1576 = vpack.c.bf16 %v1569, %v1568
    %v1577 = vpack.c.bf16 %v1571, %v1570
    %v1578 = vpack.c.bf16 %v1573, %v1572
    %v1579 = vpack.c.bf16 %v1575, %v1574
    %1580 = vmatpush.bf16.msra.mxu0 0
    %1581 = vmatpush.bf16.msra.mxu0 0
    %1582 = vmatpush.bf16.msra.mxu0 0
    %1583 = vmatpush.bf16.msra.mxu0 0
    %1584 = vmatpush.bf16.msra.mxu0 %v1579
    %1585 = vmatpush.bf16.msra.mxu0 %v1578
    %1586 = vmatpush.bf16.msra.mxu0 %v1577
    %1587 = vmatpush.bf16.msra.mxu0 %v1576
    %1588 = vmatmul.bf16.gmra.mxu0 %v1269
    %v1589 = vpop.f32.mrf.mxu0
    %v1590 = vadd.f32 0.0, %v1589
    %v1591 = vpop.f32.mrf.mxu0
    %v1592 = vadd.f32 0.0, %v1591
    %1593 = vmatmul.bf16.gmra.mxu0 %v1272
    %v1594 = vpop.f32.mrf.mxu0
    %v1595 = vadd.f32 0.0, %v1594
    %v1596 = vpop.f32.mrf.mxu0
    %v1597 = vadd.f32 0.0, %v1596
    %1598 = vmatmul.bf16.gmra.mxu0 %v1275
    %v1599 = vpop.f32.mrf.mxu0
    %v1600 = vadd.f32 0.0, %v1599
    %v1601 = vpop.f32.mrf.mxu0
    %v1602 = vadd.f32 0.0, %v1601
    %1603 = vmatmul.bf16.gmra.mxu0 %v1278
    %v1604 = vpop.f32.mrf.mxu0
    %v1605 = vadd.f32 0.0, %v1604
    %v1606 = vpop.f32.mrf.mxu0
    %v1607 = vadd.f32 0.0, %v1606
    %1608 = vmatmul.bf16.gmra.mxu0 %v1281
    %v1609 = vpop.f32.mrf.mxu0
    %v1610 = vadd.f32 0.0, %v1609
    %v1611 = vpop.f32.mrf.mxu0
    %v1612 = vadd.f32 0.0, %v1611
    %1613 = vmatmul.bf16.gmra.mxu0 %v1284
    %v1614 = vpop.f32.mrf.mxu0
    %v1615 = vadd.f32 0.0, %v1614
    %v1616 = vpop.f32.mrf.mxu0
    %v1617 = vadd.f32 0.0, %v1616
    %1618 = vmatmul.bf16.gmra.mxu0 %v1287
    %v1619 = vpop.f32.mrf.mxu0
    %v1620 = vadd.f32 0.0, %v1619
    %v1621 = vpop.f32.mrf.mxu0
    %v1622 = vadd.f32 0.0, %v1621
    %1623 = vmatmul.bf16.gmra.mxu0 %v1290
    %v1624 = vpop.f32.mrf.mxu0
    %v1625 = vadd.f32 0.0, %v1624
    %v1626 = vpop.f32.mrf.mxu0
    %v1627 = vadd.f32 0.0, %v1626
    %1628 = vdwg.mxu0
    %v1629 = vpack.c.bf16 %v1552, %v1551
    %v1630 = vpack.c.bf16 %v1554, %v1553
    %v1631 = vpack.c.bf16 %v1556, %v1555
    %v1632 = vpack.c.bf16 %v1558, %v1557
    %v1633 = vpack.c.bf16 %v1560, %v1559
    %v1634 = vpack.c.bf16 %v1562, %v1561
    %v1635 = vpack.c.bf16 %v1564, %v1563
    %v1636 = vpack.c.bf16 %v1566, %v1565
    %v1637 = vpack.c.bf16 %v1592, %v1590
    %v1638 = vpack.c.bf16 %v1597, %v1595
    %v1639 = vpack.c.bf16 %v1602, %v1600
    %v1640 = vpack.c.bf16 %v1607, %v1605
    %v1641 = vpack.c.bf16 %v1612, %v1610
    %v1642 = vpack.c.bf16 %v1617, %v1615
    %v1643 = vpack.c.bf16 %v1622, %v1620
    %v1644 = vpack.c.bf16 %v1627, %v1625
    %1645 = vmatpush.bf16.msra.mxu0 %v1644
    %1646 = vmatpush.bf16.msra.mxu0 %v1643
    %1647 = vmatpush.bf16.msra.mxu0 %v1642
    %1648 = vmatpush.bf16.msra.mxu0 %v1641
    %1649 = vmatpush.bf16.msra.mxu0 %v1640
    %1650 = vmatpush.bf16.msra.mxu0 %v1639
    %1651 = vmatpush.bf16.msra.mxu0 %v1638
    %1652 = vmatpush.bf16.msra.mxu0 %v1637
    %1653 = vmatmul.bf16.gmra.mxu0 %v1629
    %v1654 = vpop.f32.mrf.mxu0
    %v1655 = vadd.f32 0.0, %v1654
    %v1656 = vpop.f32.mrf.mxu0
    %v1657 = vadd.f32 0.0, %v1656
    %1658 = vmatmul.bf16.gmra.mxu0 %v1630
    %v1659 = vpop.f32.mrf.mxu0
    %v1660 = vadd.f32 0.0, %v1659
    %v1661 = vpop.f32.mrf.mxu0
    %v1662 = vadd.f32 0.0, %v1661
    %1663 = vmatmul.bf16.gmra.mxu0 %v1631
    %v1664 = vpop.f32.mrf.mxu0
    %v1665 = vadd.f32 0.0, %v1664
    %v1666 = vpop.f32.mrf.mxu0
    %v1667 = vadd.f32 0.0, %v1666
    %1668 = vmatmul.bf16.gmra.mxu0 %v1632
    %v1669 = vpop.f32.mrf.mxu0
    %v1670 = vadd.f32 0.0, %v1669
    %v1671 = vpop.f32.mrf.mxu0
    %v1672 = vadd.f32 0.0, %v1671
    %1673 = vmatmul.bf16.gmra.mxu0 %v1633
    %v1674 = vpop.f32.mrf.mxu0
    %v1675 = vadd.f32 0.0, %v1674
    %v1676 = vpop.f32.mrf.mxu0
    %v1677 = vadd.f32 0.0, %v1676
    %1678 = vmatmul.bf16.gmra.mxu0 %v1634
    %v1679 = vpop.f32.mrf.mxu0
    %v1680 = vadd.f32 0.0, %v1679
    %v1681 = vpop.f32.mrf.mxu0
    %v1682 = vadd.f32 0.0, %v1681
    %1683 = vmatmul.bf16.gmra.mxu0 %v1635
    %v1684 = vpop.f32.mrf.mxu0
    %v1685 = vadd.f32 0.0, %v1684
    %v1686 = vpop.f32.mrf.mxu0
    %v1687 = vadd.f32 0.0, %v1686
    %1688 = vmatmul.bf16.gmra.mxu0 %v1636
    %v1689 = vpop.f32.mrf.mxu0
    %v1690 = vadd.f32 0.0, %v1689
    %v1691 = vpop.f32.mrf.mxu0
    %v1692 = vadd.f32 0.0, %v1691
    %1693 = vdwg.mxu0
    %v1694 = vadd.f32 %v1511, %v1655
    %v1695 = vadd.f32 %v1513, %v1657
    %v1696 = vadd.f32 %v1516, %v1660
    %v1697 = vadd.f32 %v1518, %v1662
    %v1698 = vadd.f32 %v1521, %v1665
    %v1699 = vadd.f32 %v1523, %v1667
    %v1700 = vadd.f32 %v1526, %v1670
    %v1701 = vadd.f32 %v1528, %v1672
    %v1702 = vadd.f32 %v1531, %v1675
    %v1703 = vadd.f32 %v1533, %v1677
    %v1704 = vadd.f32 %v1536, %v1680
    %v1705 = vadd.f32 %v1538, %v1682
    %v1706 = vadd.f32 %v1541, %v1685
    %v1707 = vadd.f32 %v1543, %v1687
    %v1708 = vadd.f32 %v1546, %v1690
    %v1709 = vadd.f32 %v1548, %v1692
    %s1710 = scalar_lea.vmem %s15, 384
    %v1711 = vld [vmem:[%s1710] sm:$0xff]
    %v1712 = vld [vmem:[%s1710 + $0x8] sm:$0xff]
    %v1713 = vld [vmem:[%s1710 + $0x10] sm:$0xff]
    %v1714 = vld [vmem:[%s1710 + $0x18] sm:$0xff]
    %v1715 = vld [vmem:[%s1710 + $0x20] sm:$0xff]
    %v1716 = vld [vmem:[%s1710 + $0x28] sm:$0xff]
    %v1717 = vld [vmem:[%s1710 + $0x30] sm:$0xff]
    %v1718 = vld [vmem:[%s1710 + $0x38] sm:$0xff]
    %v1719 = vld [vmem:[%s1710 + $0x40] sm:$0xff]
    %v1720 = vld [vmem:[%s1710 + $0x48] sm:$0xff]
    %v1721 = vld [vmem:[%s1710 + $0x50] sm:$0xff]
    %v1722 = vld [vmem:[%s1710 + $0x58] sm:$0xff]
    %v1723 = vld [vmem:[%s1710 + $0x60] sm:$0xff]
    %v1724 = vld [vmem:[%s1710 + $0x68] sm:$0xff]
    %v1725 = vld [vmem:[%s1710 + $0x70] sm:$0xff]
    %v1726 = vld [vmem:[%s1710 + $0x78] sm:$0xff]
    %s1727 = scalar_lea.vmem %s17, 192
    %v1728 = vld [vmem:[%s1727] sm:$0xff]
    %v1729 = vld [vmem:[%s1727 + $0x8] sm:$0xff]
    %v1730 = vld [vmem:[%s1727 + $0x10] sm:$0xff]
    %v1731 = vld [vmem:[%s1727 + $0x18] sm:$0xff]
    %v1732 = vld [vmem:[%s1727 + $0x20] sm:$0xff]
    %v1733 = vld [vmem:[%s1727 + $0x28] sm:$0xff]
    %v1734 = vld [vmem:[%s1727 + $0x30] sm:$0xff]
    %v1735 = vld [vmem:[%s1727 + $0x38] sm:$0xff]
    %v1736 = vpack.c.bf16 %v1729, %v1728
    %v1737 = vpack.c.bf16 %v1731, %v1730
    %v1738 = vpack.c.bf16 %v1733, %v1732
    %v1739 = vpack.c.bf16 %v1735, %v1734
    %1740 = vmatpush.bf16.msra.mxu0 0
    %1741 = vmatpush.bf16.msra.mxu0 0
    %1742 = vmatpush.bf16.msra.mxu0 0
    %1743 = vmatpush.bf16.msra.mxu0 0
    %1744 = vmatpush.bf16.msra.mxu0 %v1739
    %1745 = vmatpush.bf16.msra.mxu0 %v1738
    %1746 = vmatpush.bf16.msra.mxu0 %v1737
    %1747 = vmatpush.bf16.msra.mxu0 %v1736
    %1748 = vmatmul.bf16.gmra.mxu0 %v1269
    %v1749 = vpop.f32.mrf.mxu0
    %v1750 = vadd.f32 0.0, %v1749
    %v1751 = vpop.f32.mrf.mxu0
    %v1752 = vadd.f32 0.0, %v1751
    %1753 = vmatmul.bf16.gmra.mxu0 %v1272
    %v1754 = vpop.f32.mrf.mxu0
    %v1755 = vadd.f32 0.0, %v1754
    %v1756 = vpop.f32.mrf.mxu0
    %v1757 = vadd.f32 0.0, %v1756
    %1758 = vmatmul.bf16.gmra.mxu0 %v1275
    %v1759 = vpop.f32.mrf.mxu0
    %v1760 = vadd.f32 0.0, %v1759
    %v1761 = vpop.f32.mrf.mxu0
    %v1762 = vadd.f32 0.0, %v1761
    %1763 = vmatmul.bf16.gmra.mxu0 %v1278
    %v1764 = vpop.f32.mrf.mxu0
    %v1765 = vadd.f32 0.0, %v1764
    %v1766 = vpop.f32.mrf.mxu0
    %v1767 = vadd.f32 0.0, %v1766
    %1768 = vmatmul.bf16.gmra.mxu0 %v1281
    %v1769 = vpop.f32.mrf.mxu0
    %v1770 = vadd.f32 0.0, %v1769
    %v1771 = vpop.f32.mrf.mxu0
    %v1772 = vadd.f32 0.0, %v1771
    %1773 = vmatmul.bf16.gmra.mxu0 %v1284
    %v1774 = vpop.f32.mrf.mxu0
    %v1775 = vadd.f32 0.0, %v1774
    %v1776 = vpop.f32.mrf.mxu0
    %v1777 = vadd.f32 0.0, %v1776
    %1778 = vmatmul.bf16.gmra.mxu0 %v1287
    %v1779 = vpop.f32.mrf.mxu0
    %v1780 = vadd.f32 0.0, %v1779
    %v1781 = vpop.f32.mrf.mxu0
    %v1782 = vadd.f32 0.0, %v1781
    %1783 = vmatmul.bf16.gmra.mxu0 %v1290
    %v1784 = vpop.f32.mrf.mxu0
    %v1785 = vadd.f32 0.0, %v1784
    %v1786 = vpop.f32.mrf.mxu0
    %v1787 = vadd.f32 0.0, %v1786
    %1788 = vdwg.mxu0
    %v1789 = vpack.c.bf16 %v1712, %v1711
    %v1790 = vpack.c.bf16 %v1714, %v1713
    %v1791 = vpack.c.bf16 %v1716, %v1715
    %v1792 = vpack.c.bf16 %v1718, %v1717
    %v1793 = vpack.c.bf16 %v1720, %v1719
    %v1794 = vpack.c.bf16 %v1722, %v1721
    %v1795 = vpack.c.bf16 %v1724, %v1723
    %v1796 = vpack.c.bf16 %v1726, %v1725
    %v1797 = vpack.c.bf16 %v1752, %v1750
    %v1798 = vpack.c.bf16 %v1757, %v1755
    %v1799 = vpack.c.bf16 %v1762, %v1760
    %v1800 = vpack.c.bf16 %v1767, %v1765
    %v1801 = vpack.c.bf16 %v1772, %v1770
    %v1802 = vpack.c.bf16 %v1777, %v1775
    %v1803 = vpack.c.bf16 %v1782, %v1780
    %v1804 = vpack.c.bf16 %v1787, %v1785
    %1805 = vmatpush.bf16.msra.mxu0 %v1804
    %1806 = vmatpush.bf16.msra.mxu0 %v1803
    %1807 = vmatpush.bf16.msra.mxu0 %v1802
    %1808 = vmatpush.bf16.msra.mxu0 %v1801
    %1809 = vmatpush.bf16.msra.mxu0 %v1800
    %1810 = vmatpush.bf16.msra.mxu0 %v1799
    %1811 = vmatpush.bf16.msra.mxu0 %v1798
    %1812 = vmatpush.bf16.msra.mxu0 %v1797
    %1813 = vmatmul.bf16.gmra.mxu0 %v1789
    %v1814 = vpop.f32.mrf.mxu0
    %v1815 = vadd.f32 0.0, %v1814
    %v1816 = vpop.f32.mrf.mxu0
    %v1817 = vadd.f32 0.0, %v1816
    %1818 = vmatmul.bf16.gmra.mxu0 %v1790
    %v1819 = vpop.f32.mrf.mxu0
    %v1820 = vadd.f32 0.0, %v1819
    %v1821 = vpop.f32.mrf.mxu0
    %v1822 = vadd.f32 0.0, %v1821
    %1823 = vmatmul.bf16.gmra.mxu0 %v1791
    %v1824 = vpop.f32.mrf.mxu0
    %v1825 = vadd.f32 0.0, %v1824
    %v1826 = vpop.f32.mrf.mxu0
    %v1827 = vadd.f32 0.0, %v1826
    %1828 = vmatmul.bf16.gmra.mxu0 %v1792
    %v1829 = vpop.f32.mrf.mxu0
    %v1830 = vadd.f32 0.0, %v1829
    %v1831 = vpop.f32.mrf.mxu0
    %v1832 = vadd.f32 0.0, %v1831
    %1833 = vmatmul.bf16.gmra.mxu0 %v1793
    %v1834 = vpop.f32.mrf.mxu0
    %v1835 = vadd.f32 0.0, %v1834
    %v1836 = vpop.f32.mrf.mxu0
    %v1837 = vadd.f32 0.0, %v1836
    %1838 = vmatmul.bf16.gmra.mxu0 %v1794
    %v1839 = vpop.f32.mrf.mxu0
    %v1840 = vadd.f32 0.0, %v1839
    %v1841 = vpop.f32.mrf.mxu0
    %v1842 = vadd.f32 0.0, %v1841
    %1843 = vmatmul.bf16.gmra.mxu0 %v1795
    %v1844 = vpop.f32.mrf.mxu0
    %v1845 = vadd.f32 0.0, %v1844
    %v1846 = vpop.f32.mrf.mxu0
    %v1847 = vadd.f32 0.0, %v1846
    %1848 = vmatmul.bf16.gmra.mxu0 %v1796
    %v1849 = vpop.f32.mrf.mxu0
    %v1850 = vadd.f32 0.0, %v1849
    %v1851 = vpop.f32.mrf.mxu0
    %v1852 = vadd.f32 0.0, %v1851
    %1853 = vdwg.mxu0
    %v1854 = vadd.f32 %v1694, %v1815
    %v1855 = vadd.f32 %v1695, %v1817
    %v1856 = vadd.f32 %v1696, %v1820
    %v1857 = vadd.f32 %v1697, %v1822
    %v1858 = vadd.f32 %v1698, %v1825
    %v1859 = vadd.f32 %v1699, %v1827
    %v1860 = vadd.f32 %v1700, %v1830
    %v1861 = vadd.f32 %v1701, %v1832
    %v1862 = vadd.f32 %v1702, %v1835
    %v1863 = vadd.f32 %v1703, %v1837
    %v1864 = vadd.f32 %v1704, %v1840
    %v1865 = vadd.f32 %v1705, %v1842
    %v1866 = vadd.f32 %v1706, %v1845
    %v1867 = vadd.f32 %v1707, %v1847
    %v1868 = vadd.f32 %v1708, %v1850
    %v1869 = vadd.f32 %v1709, %v1852
    %s1870 = scalar_lea.vmem %s15, 512
    %v1871 = vld [vmem:[%s1870] sm:$0xff]
    %v1872 = vld [vmem:[%s1870 + $0x8] sm:$0xff]
    %v1873 = vld [vmem:[%s1870 + $0x10] sm:$0xff]
    %v1874 = vld [vmem:[%s1870 + $0x18] sm:$0xff]
    %v1875 = vld [vmem:[%s1870 + $0x20] sm:$0xff]
    %v1876 = vld [vmem:[%s1870 + $0x28] sm:$0xff]
    %v1877 = vld [vmem:[%s1870 + $0x30] sm:$0xff]
    %v1878 = vld [vmem:[%s1870 + $0x38] sm:$0xff]
    %v1879 = vld [vmem:[%s1870 + $0x40] sm:$0xff]
    %v1880 = vld [vmem:[%s1870 + $0x48] sm:$0xff]
    %v1881 = vld [vmem:[%s1870 + $0x50] sm:$0xff]
    %v1882 = vld [vmem:[%s1870 + $0x58] sm:$0xff]
    %v1883 = vld [vmem:[%s1870 + $0x60] sm:$0xff]
    %v1884 = vld [vmem:[%s1870 + $0x68] sm:$0xff]
    %v1885 = vld [vmem:[%s1870 + $0x70] sm:$0xff]
    %v1886 = vld [vmem:[%s1870 + $0x78] sm:$0xff]
    %s1887 = scalar_lea.vmem %s17, 256
    %v1888 = vld [vmem:[%s1887] sm:$0xff]
    %v1889 = vld [vmem:[%s1887 + $0x8] sm:$0xff]
    %v1890 = vld [vmem:[%s1887 + $0x10] sm:$0xff]
    %v1891 = vld [vmem:[%s1887 + $0x18] sm:$0xff]
    %v1892 = vld [vmem:[%s1887 + $0x20] sm:$0xff]
    %v1893 = vld [vmem:[%s1887 + $0x28] sm:$0xff]
    %v1894 = vld [vmem:[%s1887 + $0x30] sm:$0xff]
    %v1895 = vld [vmem:[%s1887 + $0x38] sm:$0xff]
    %v1896 = vpack.c.bf16 %v1889, %v1888
    %v1897 = vpack.c.bf16 %v1891, %v1890
    %v1898 = vpack.c.bf16 %v1893, %v1892
    %v1899 = vpack.c.bf16 %v1895, %v1894
    %1900 = vmatpush.bf16.msra.mxu0 0
    %1901 = vmatpush.bf16.msra.mxu0 0
    %1902 = vmatpush.bf16.msra.mxu0 0
    %1903 = vmatpush.bf16.msra.mxu0 0
    %1904 = vmatpush.bf16.msra.mxu0 %v1899
    %1905 = vmatpush.bf16.msra.mxu0 %v1898
    %1906 = vmatpush.bf16.msra.mxu0 %v1897
    %1907 = vmatpush.bf16.msra.mxu0 %v1896
    %1908 = vmatmul.bf16.gmra.mxu0 %v1269
    %v1909 = vpop.f32.mrf.mxu0
    %v1910 = vadd.f32 0.0, %v1909
    %v1911 = vpop.f32.mrf.mxu0
    %v1912 = vadd.f32 0.0, %v1911
    %1913 = vmatmul.bf16.gmra.mxu0 %v1272
    %v1914 = vpop.f32.mrf.mxu0
    %v1915 = vadd.f32 0.0, %v1914
    %v1916 = vpop.f32.mrf.mxu0
    %v1917 = vadd.f32 0.0, %v1916
    %1918 = vmatmul.bf16.gmra.mxu0 %v1275
    %v1919 = vpop.f32.mrf.mxu0
    %v1920 = vadd.f32 0.0, %v1919
    %v1921 = vpop.f32.mrf.mxu0
    %v1922 = vadd.f32 0.0, %v1921
    %1923 = vmatmul.bf16.gmra.mxu0 %v1278
    %v1924 = vpop.f32.mrf.mxu0
    %v1925 = vadd.f32 0.0, %v1924
    %v1926 = vpop.f32.mrf.mxu0
    %v1927 = vadd.f32 0.0, %v1926
    %1928 = vmatmul.bf16.gmra.mxu0 %v1281
    %v1929 = vpop.f32.mrf.mxu0
    %v1930 = vadd.f32 0.0, %v1929
    %v1931 = vpop.f32.mrf.mxu0
    %v1932 = vadd.f32 0.0, %v1931
    %1933 = vmatmul.bf16.gmra.mxu0 %v1284
    %v1934 = vpop.f32.mrf.mxu0
    %v1935 = vadd.f32 0.0, %v1934
    %v1936 = vpop.f32.mrf.mxu0
    %v1937 = vadd.f32 0.0, %v1936
    %1938 = vmatmul.bf16.gmra.mxu0 %v1287
    %v1939 = vpop.f32.mrf.mxu0
    %v1940 = vadd.f32 0.0, %v1939
    %v1941 = vpop.f32.mrf.mxu0
    %v1942 = vadd.f32 0.0, %v1941
    %1943 = vmatmul.bf16.gmra.mxu0 %v1290
    %v1944 = vpop.f32.mrf.mxu0
    %v1945 = vadd.f32 0.0, %v1944
    %v1946 = vpop.f32.mrf.mxu0
    %v1947 = vadd.f32 0.0, %v1946
    %1948 = vdwg.mxu0
    %v1949 = vpack.c.bf16 %v1872, %v1871
    %v1950 = vpack.c.bf16 %v1874, %v1873
    %v1951 = vpack.c.bf16 %v1876, %v1875
    %v1952 = vpack.c.bf16 %v1878, %v1877
    %v1953 = vpack.c.bf16 %v1880, %v1879
    %v1954 = vpack.c.bf16 %v1882, %v1881
    %v1955 = vpack.c.bf16 %v1884, %v1883
    %v1956 = vpack.c.bf16 %v1886, %v1885
    %v1957 = vpack.c.bf16 %v1912, %v1910
    %v1958 = vpack.c.bf16 %v1917, %v1915
    %v1959 = vpack.c.bf16 %v1922, %v1920
    %v1960 = vpack.c.bf16 %v1927, %v1925
    %v1961 = vpack.c.bf16 %v1932, %v1930
    %v1962 = vpack.c.bf16 %v1937, %v1935
    %v1963 = vpack.c.bf16 %v1942, %v1940
    %v1964 = vpack.c.bf16 %v1947, %v1945
    %1965 = vmatpush.bf16.msra.mxu0 %v1964
    %1966 = vmatpush.bf16.msra.mxu0 %v1963
    %1967 = vmatpush.bf16.msra.mxu0 %v1962
    %1968 = vmatpush.bf16.msra.mxu0 %v1961
    %1969 = vmatpush.bf16.msra.mxu0 %v1960
    %1970 = vmatpush.bf16.msra.mxu0 %v1959
    %1971 = vmatpush.bf16.msra.mxu0 %v1958
    %1972 = vmatpush.bf16.msra.mxu0 %v1957
    %1973 = vmatmul.bf16.gmra.mxu0 %v1949
    %v1974 = vpop.f32.mrf.mxu0
    %v1975 = vadd.f32 0.0, %v1974
    %v1976 = vpop.f32.mrf.mxu0
    %v1977 = vadd.f32 0.0, %v1976
    %1978 = vmatmul.bf16.gmra.mxu0 %v1950
    %v1979 = vpop.f32.mrf.mxu0
    %v1980 = vadd.f32 0.0, %v1979
    %v1981 = vpop.f32.mrf.mxu0
    %v1982 = vadd.f32 0.0, %v1981
    %1983 = vmatmul.bf16.gmra.mxu0 %v1951
    %v1984 = vpop.f32.mrf.mxu0
    %v1985 = vadd.f32 0.0, %v1984
    %v1986 = vpop.f32.mrf.mxu0
    %v1987 = vadd.f32 0.0, %v1986
    %1988 = vmatmul.bf16.gmra.mxu0 %v1952
    %v1989 = vpop.f32.mrf.mxu0
    %v1990 = vadd.f32 0.0, %v1989
    %v1991 = vpop.f32.mrf.mxu0
    %v1992 = vadd.f32 0.0, %v1991
    %1993 = vmatmul.bf16.gmra.mxu0 %v1953
    %v1994 = vpop.f32.mrf.mxu0
    %v1995 = vadd.f32 0.0, %v1994
    %v1996 = vpop.f32.mrf.mxu0
    %v1997 = vadd.f32 0.0, %v1996
    %1998 = vmatmul.bf16.gmra.mxu0 %v1954
    %v1999 = vpop.f32.mrf.mxu0
    %v2000 = vadd.f32 0.0, %v1999
    %v2001 = vpop.f32.mrf.mxu0
    %v2002 = vadd.f32 0.0, %v2001
    %2003 = vmatmul.bf16.gmra.mxu0 %v1955
    %v2004 = vpop.f32.mrf.mxu0
    %v2005 = vadd.f32 0.0, %v2004
    %v2006 = vpop.f32.mrf.mxu0
    %v2007 = vadd.f32 0.0, %v2006
    %2008 = vmatmul.bf16.gmra.mxu0 %v1956
    %v2009 = vpop.f32.mrf.mxu0
    %v2010 = vadd.f32 0.0, %v2009
    %v2011 = vpop.f32.mrf.mxu0
    %v2012 = vadd.f32 0.0, %v2011
    %2013 = vdwg.mxu0
    %v2014 = vadd.f32 %v1854, %v1975
    %v2015 = vadd.f32 %v1855, %v1977
    %v2016 = vadd.f32 %v1856, %v1980
    %v2017 = vadd.f32 %v1857, %v1982
    %v2018 = vadd.f32 %v1858, %v1985
    %v2019 = vadd.f32 %v1859, %v1987
    %v2020 = vadd.f32 %v1860, %v1990
    %v2021 = vadd.f32 %v1861, %v1992
    %v2022 = vadd.f32 %v1862, %v1995
    %v2023 = vadd.f32 %v1863, %v1997
    %v2024 = vadd.f32 %v1864, %v2000
    %v2025 = vadd.f32 %v1865, %v2002
    %v2026 = vadd.f32 %v1866, %v2005
    %v2027 = vadd.f32 %v1867, %v2007
    %v2028 = vadd.f32 %v1868, %v2010
    %v2029 = vadd.f32 %v1869, %v2012
    %s2030 = scalar_lea.vmem %s15, 640
    %v2031 = vld [vmem:[%s2030] sm:$0xff]
    %v2032 = vld [vmem:[%s2030 + $0x8] sm:$0xff]
    %v2033 = vld [vmem:[%s2030 + $0x10] sm:$0xff]
    %v2034 = vld [vmem:[%s2030 + $0x18] sm:$0xff]
    %v2035 = vld [vmem:[%s2030 + $0x20] sm:$0xff]
    %v2036 = vld [vmem:[%s2030 + $0x28] sm:$0xff]
    %v2037 = vld [vmem:[%s2030 + $0x30] sm:$0xff]
    %v2038 = vld [vmem:[%s2030 + $0x38] sm:$0xff]
    %v2039 = vld [vmem:[%s2030 + $0x40] sm:$0xff]
    %v2040 = vld [vmem:[%s2030 + $0x48] sm:$0xff]
    %v2041 = vld [vmem:[%s2030 + $0x50] sm:$0xff]
    %v2042 = vld [vmem:[%s2030 + $0x58] sm:$0xff]
    %v2043 = vld [vmem:[%s2030 + $0x60] sm:$0xff]
    %v2044 = vld [vmem:[%s2030 + $0x68] sm:$0xff]
    %v2045 = vld [vmem:[%s2030 + $0x70] sm:$0xff]
    %v2046 = vld [vmem:[%s2030 + $0x78] sm:$0xff]
    %s2047 = scalar_lea.vmem %s17, 320
    %v2048 = vld [vmem:[%s2047] sm:$0xff]
    %v2049 = vld [vmem:[%s2047 + $0x8] sm:$0xff]
    %v2050 = vld [vmem:[%s2047 + $0x10] sm:$0xff]
    %v2051 = vld [vmem:[%s2047 + $0x18] sm:$0xff]
    %v2052 = vld [vmem:[%s2047 + $0x20] sm:$0xff]
    %v2053 = vld [vmem:[%s2047 + $0x28] sm:$0xff]
    %v2054 = vld [vmem:[%s2047 + $0x30] sm:$0xff]
    %v2055 = vld [vmem:[%s2047 + $0x38] sm:$0xff]
    %v2056 = vpack.c.bf16 %v2049, %v2048
    %v2057 = vpack.c.bf16 %v2051, %v2050
    %v2058 = vpack.c.bf16 %v2053, %v2052
    %v2059 = vpack.c.bf16 %v2055, %v2054
    %2060 = vmatpush.bf16.msra.mxu0 0
    %2061 = vmatpush.bf16.msra.mxu0 0
    %2062 = vmatpush.bf16.msra.mxu0 0
    %2063 = vmatpush.bf16.msra.mxu0 0
    %2064 = vmatpush.bf16.msra.mxu0 %v2059
    %2065 = vmatpush.bf16.msra.mxu0 %v2058
    %2066 = vmatpush.bf16.msra.mxu0 %v2057
    %2067 = vmatpush.bf16.msra.mxu0 %v2056
    %2068 = vmatmul.bf16.gmra.mxu0 %v1269
    %v2069 = vpop.f32.mrf.mxu0
    %v2070 = vadd.f32 0.0, %v2069
    %v2071 = vpop.f32.mrf.mxu0
    %v2072 = vadd.f32 0.0, %v2071
    %2073 = vmatmul.bf16.gmra.mxu0 %v1272
    %v2074 = vpop.f32.mrf.mxu0
    %v2075 = vadd.f32 0.0, %v2074
    %v2076 = vpop.f32.mrf.mxu0
    %v2077 = vadd.f32 0.0, %v2076
    %2078 = vmatmul.bf16.gmra.mxu0 %v1275
    %v2079 = vpop.f32.mrf.mxu0
    %v2080 = vadd.f32 0.0, %v2079
    %v2081 = vpop.f32.mrf.mxu0
    %v2082 = vadd.f32 0.0, %v2081
    %2083 = vmatmul.bf16.gmra.mxu0 %v1278
    %v2084 = vpop.f32.mrf.mxu0
    %v2085 = vadd.f32 0.0, %v2084
    %v2086 = vpop.f32.mrf.mxu0
    %v2087 = vadd.f32 0.0, %v2086
    %2088 = vmatmul.bf16.gmra.mxu0 %v1281
    %v2089 = vpop.f32.mrf.mxu0
    %v2090 = vadd.f32 0.0, %v2089
    %v2091 = vpop.f32.mrf.mxu0
    %v2092 = vadd.f32 0.0, %v2091
    %2093 = vmatmul.bf16.gmra.mxu0 %v1284
    %v2094 = vpop.f32.mrf.mxu0
    %v2095 = vadd.f32 0.0, %v2094
    %v2096 = vpop.f32.mrf.mxu0
    %v2097 = vadd.f32 0.0, %v2096
    %2098 = vmatmul.bf16.gmra.mxu0 %v1287
    %v2099 = vpop.f32.mrf.mxu0
    %v2100 = vadd.f32 0.0, %v2099
    %v2101 = vpop.f32.mrf.mxu0
    %v2102 = vadd.f32 0.0, %v2101
    %2103 = vmatmul.bf16.gmra.mxu0 %v1290
    %v2104 = vpop.f32.mrf.mxu0
    %v2105 = vadd.f32 0.0, %v2104
    %v2106 = vpop.f32.mrf.mxu0
    %v2107 = vadd.f32 0.0, %v2106
    %2108 = vdwg.mxu0
    %v2109 = vpack.c.bf16 %v2032, %v2031
    %v2110 = vpack.c.bf16 %v2034, %v2033
    %v2111 = vpack.c.bf16 %v2036, %v2035
    %v2112 = vpack.c.bf16 %v2038, %v2037
    %v2113 = vpack.c.bf16 %v2040, %v2039
    %v2114 = vpack.c.bf16 %v2042, %v2041
    %v2115 = vpack.c.bf16 %v2044, %v2043
    %v2116 = vpack.c.bf16 %v2046, %v2045
    %v2117 = vpack.c.bf16 %v2072, %v2070
    %v2118 = vpack.c.bf16 %v2077, %v2075
    %v2119 = vpack.c.bf16 %v2082, %v2080
    %v2120 = vpack.c.bf16 %v2087, %v2085
    %v2121 = vpack.c.bf16 %v2092, %v2090
    %v2122 = vpack.c.bf16 %v2097, %v2095
    %v2123 = vpack.c.bf16 %v2102, %v2100
    %v2124 = vpack.c.bf16 %v2107, %v2105
    %2125 = vmatpush.bf16.msra.mxu0 %v2124
    %2126 = vmatpush.bf16.msra.mxu0 %v2123
    %2127 = vmatpush.bf16.msra.mxu0 %v2122
    %2128 = vmatpush.bf16.msra.mxu0 %v2121
    %2129 = vmatpush.bf16.msra.mxu0 %v2120
    %2130 = vmatpush.bf16.msra.mxu0 %v2119
    %2131 = vmatpush.bf16.msra.mxu0 %v2118
    %2132 = vmatpush.bf16.msra.mxu0 %v2117
    %2133 = vmatmul.bf16.gmra.mxu0 %v2109
    %v2134 = vpop.f32.mrf.mxu0
    %v2135 = vadd.f32 0.0, %v2134
    %v2136 = vpop.f32.mrf.mxu0
    %v2137 = vadd.f32 0.0, %v2136
    %2138 = vmatmul.bf16.gmra.mxu0 %v2110
    %v2139 = vpop.f32.mrf.mxu0
    %v2140 = vadd.f32 0.0, %v2139
    %v2141 = vpop.f32.mrf.mxu0
    %v2142 = vadd.f32 0.0, %v2141
    %2143 = vmatmul.bf16.gmra.mxu0 %v2111
    %v2144 = vpop.f32.mrf.mxu0
    %v2145 = vadd.f32 0.0, %v2144
    %v2146 = vpop.f32.mrf.mxu0
    %v2147 = vadd.f32 0.0, %v2146
    %2148 = vmatmul.bf16.gmra.mxu0 %v2112
    %v2149 = vpop.f32.mrf.mxu0
    %v2150 = vadd.f32 0.0, %v2149
    %v2151 = vpop.f32.mrf.mxu0
    %v2152 = vadd.f32 0.0, %v2151
    %2153 = vmatmul.bf16.gmra.mxu0 %v2113
    %v2154 = vpop.f32.mrf.mxu0
    %v2155 = vadd.f32 0.0, %v2154
    %v2156 = vpop.f32.mrf.mxu0
    %v2157 = vadd.f32 0.0, %v2156
    %2158 = vmatmul.bf16.gmra.mxu0 %v2114
    %v2159 = vpop.f32.mrf.mxu0
    %v2160 = vadd.f32 0.0, %v2159
    %v2161 = vpop.f32.mrf.mxu0
    %v2162 = vadd.f32 0.0, %v2161
    %2163 = vmatmul.bf16.gmra.mxu0 %v2115
    %v2164 = vpop.f32.mrf.mxu0
    %v2165 = vadd.f32 0.0, %v2164
    %v2166 = vpop.f32.mrf.mxu0
    %v2167 = vadd.f32 0.0, %v2166
    %2168 = vmatmul.bf16.gmra.mxu0 %v2116
    %v2169 = vpop.f32.mrf.mxu0
    %v2170 = vadd.f32 0.0, %v2169
    %v2171 = vpop.f32.mrf.mxu0
    %v2172 = vadd.f32 0.0, %v2171
    %2173 = vdwg.mxu0
    %v2174 = vadd.f32 %v2014, %v2135
    %v2175 = vadd.f32 %v2015, %v2137
    %v2176 = vadd.f32 %v2016, %v2140
    %v2177 = vadd.f32 %v2017, %v2142
    %v2178 = vadd.f32 %v2018, %v2145
    %v2179 = vadd.f32 %v2019, %v2147
    %v2180 = vadd.f32 %v2020, %v2150
    %v2181 = vadd.f32 %v2021, %v2152
    %v2182 = vadd.f32 %v2022, %v2155
    %v2183 = vadd.f32 %v2023, %v2157
    %v2184 = vadd.f32 %v2024, %v2160
    %v2185 = vadd.f32 %v2025, %v2162
    %v2186 = vadd.f32 %v2026, %v2165
    %v2187 = vadd.f32 %v2027, %v2167
    %v2188 = vadd.f32 %v2028, %v2170
    %v2189 = vadd.f32 %v2029, %v2172
    %s2190 = scalar_lea.vmem %s15, 768
    %v2191 = vld [vmem:[%s2190] sm:$0xff]
    %v2192 = vld [vmem:[%s2190 + $0x8] sm:$0xff]
    %v2193 = vld [vmem:[%s2190 + $0x10] sm:$0xff]
    %v2194 = vld [vmem:[%s2190 + $0x18] sm:$0xff]
    %v2195 = vld [vmem:[%s2190 + $0x20] sm:$0xff]
    %v2196 = vld [vmem:[%s2190 + $0x28] sm:$0xff]
    %v2197 = vld [vmem:[%s2190 + $0x30] sm:$0xff]
    %v2198 = vld [vmem:[%s2190 + $0x38] sm:$0xff]
    %v2199 = vld [vmem:[%s2190 + $0x40] sm:$0xff]
    %v2200 = vld [vmem:[%s2190 + $0x48] sm:$0xff]
    %v2201 = vld [vmem:[%s2190 + $0x50] sm:$0xff]
    %v2202 = vld [vmem:[%s2190 + $0x58] sm:$0xff]
    %v2203 = vld [vmem:[%s2190 + $0x60] sm:$0xff]
    %v2204 = vld [vmem:[%s2190 + $0x68] sm:$0xff]
    %v2205 = vld [vmem:[%s2190 + $0x70] sm:$0xff]
    %v2206 = vld [vmem:[%s2190 + $0x78] sm:$0xff]
    %s2207 = scalar_lea.vmem %s17, 384
    %v2208 = vld [vmem:[%s2207] sm:$0xff]
    %v2209 = vld [vmem:[%s2207 + $0x8] sm:$0xff]
    %v2210 = vld [vmem:[%s2207 + $0x10] sm:$0xff]
    %v2211 = vld [vmem:[%s2207 + $0x18] sm:$0xff]
    %v2212 = vld [vmem:[%s2207 + $0x20] sm:$0xff]
    %v2213 = vld [vmem:[%s2207 + $0x28] sm:$0xff]
    %v2214 = vld [vmem:[%s2207 + $0x30] sm:$0xff]
    %v2215 = vld [vmem:[%s2207 + $0x38] sm:$0xff]
    %v2216 = vpack.c.bf16 %v2209, %v2208
    %v2217 = vpack.c.bf16 %v2211, %v2210
    %v2218 = vpack.c.bf16 %v2213, %v2212
    %v2219 = vpack.c.bf16 %v2215, %v2214
    %2220 = vmatpush.bf16.msra.mxu0 0
    %2221 = vmatpush.bf16.msra.mxu0 0
    %2222 = vmatpush.bf16.msra.mxu0 0
    %2223 = vmatpush.bf16.msra.mxu0 0
    %2224 = vmatpush.bf16.msra.mxu0 %v2219
    %2225 = vmatpush.bf16.msra.mxu0 %v2218
    %2226 = vmatpush.bf16.msra.mxu0 %v2217
    %2227 = vmatpush.bf16.msra.mxu0 %v2216
    %2228 = vmatmul.bf16.gmra.mxu0 %v1269
    %v2229 = vpop.f32.mrf.mxu0
    %v2230 = vadd.f32 0.0, %v2229
    %v2231 = vpop.f32.mrf.mxu0
    %v2232 = vadd.f32 0.0, %v2231
    %2233 = vmatmul.bf16.gmra.mxu0 %v1272
    %v2234 = vpop.f32.mrf.mxu0
    %v2235 = vadd.f32 0.0, %v2234
    %v2236 = vpop.f32.mrf.mxu0
    %v2237 = vadd.f32 0.0, %v2236
    %2238 = vmatmul.bf16.gmra.mxu0 %v1275
    %v2239 = vpop.f32.mrf.mxu0
    %v2240 = vadd.f32 0.0, %v2239
    %v2241 = vpop.f32.mrf.mxu0
    %v2242 = vadd.f32 0.0, %v2241
    %2243 = vmatmul.bf16.gmra.mxu0 %v1278
    %v2244 = vpop.f32.mrf.mxu0
    %v2245 = vadd.f32 0.0, %v2244
    %v2246 = vpop.f32.mrf.mxu0
    %v2247 = vadd.f32 0.0, %v2246
    %2248 = vmatmul.bf16.gmra.mxu0 %v1281
    %v2249 = vpop.f32.mrf.mxu0
    %v2250 = vadd.f32 0.0, %v2249
    %v2251 = vpop.f32.mrf.mxu0
    %v2252 = vadd.f32 0.0, %v2251
    %2253 = vmatmul.bf16.gmra.mxu0 %v1284
    %v2254 = vpop.f32.mrf.mxu0
    %v2255 = vadd.f32 0.0, %v2254
    %v2256 = vpop.f32.mrf.mxu0
    %v2257 = vadd.f32 0.0, %v2256
    %2258 = vmatmul.bf16.gmra.mxu0 %v1287
    %v2259 = vpop.f32.mrf.mxu0
    %v2260 = vadd.f32 0.0, %v2259
    %v2261 = vpop.f32.mrf.mxu0
    %v2262 = vadd.f32 0.0, %v2261
    %2263 = vmatmul.bf16.gmra.mxu0 %v1290
    %v2264 = vpop.f32.mrf.mxu0
    %v2265 = vadd.f32 0.0, %v2264
    %v2266 = vpop.f32.mrf.mxu0
    %v2267 = vadd.f32 0.0, %v2266
    %2268 = vdwg.mxu0
    %v2269 = vpack.c.bf16 %v2192, %v2191
    %v2270 = vpack.c.bf16 %v2194, %v2193
    %v2271 = vpack.c.bf16 %v2196, %v2195
    %v2272 = vpack.c.bf16 %v2198, %v2197
    %v2273 = vpack.c.bf16 %v2200, %v2199
    %v2274 = vpack.c.bf16 %v2202, %v2201
    %v2275 = vpack.c.bf16 %v2204, %v2203
    %v2276 = vpack.c.bf16 %v2206, %v2205
    %v2277 = vpack.c.bf16 %v2232, %v2230
    %v2278 = vpack.c.bf16 %v2237, %v2235
    %v2279 = vpack.c.bf16 %v2242, %v2240
    %v2280 = vpack.c.bf16 %v2247, %v2245
    %v2281 = vpack.c.bf16 %v2252, %v2250
    %v2282 = vpack.c.bf16 %v2257, %v2255
    %v2283 = vpack.c.bf16 %v2262, %v2260
    %v2284 = vpack.c.bf16 %v2267, %v2265
    %2285 = vmatpush.bf16.msra.mxu0 %v2284
    %2286 = vmatpush.bf16.msra.mxu0 %v2283
    %2287 = vmatpush.bf16.msra.mxu0 %v2282
    %2288 = vmatpush.bf16.msra.mxu0 %v2281
    %2289 = vmatpush.bf16.msra.mxu0 %v2280
    %2290 = vmatpush.bf16.msra.mxu0 %v2279
    %2291 = vmatpush.bf16.msra.mxu0 %v2278
    %2292 = vmatpush.bf16.msra.mxu0 %v2277
    %2293 = vmatmul.bf16.gmra.mxu0 %v2269
    %v2294 = vpop.f32.mrf.mxu0
    %v2295 = vadd.f32 0.0, %v2294
    %v2296 = vpop.f32.mrf.mxu0
    %v2297 = vadd.f32 0.0, %v2296
    %2298 = vmatmul.bf16.gmra.mxu0 %v2270
    %v2299 = vpop.f32.mrf.mxu0
    %v2300 = vadd.f32 0.0, %v2299
    %v2301 = vpop.f32.mrf.mxu0
    %v2302 = vadd.f32 0.0, %v2301
    %2303 = vmatmul.bf16.gmra.mxu0 %v2271
    %v2304 = vpop.f32.mrf.mxu0
    %v2305 = vadd.f32 0.0, %v2304
    %v2306 = vpop.f32.mrf.mxu0
    %v2307 = vadd.f32 0.0, %v2306
    %2308 = vmatmul.bf16.gmra.mxu0 %v2272
    %v2309 = vpop.f32.mrf.mxu0
    %v2310 = vadd.f32 0.0, %v2309
    %v2311 = vpop.f32.mrf.mxu0
    %v2312 = vadd.f32 0.0, %v2311
    %2313 = vmatmul.bf16.gmra.mxu0 %v2273
    %v2314 = vpop.f32.mrf.mxu0
    %v2315 = vadd.f32 0.0, %v2314
    %v2316 = vpop.f32.mrf.mxu0
    %v2317 = vadd.f32 0.0, %v2316
    %2318 = vmatmul.bf16.gmra.mxu0 %v2274
    %v2319 = vpop.f32.mrf.mxu0
    %v2320 = vadd.f32 0.0, %v2319
    %v2321 = vpop.f32.mrf.mxu0
    %v2322 = vadd.f32 0.0, %v2321
    %2323 = vmatmul.bf16.gmra.mxu0 %v2275
    %v2324 = vpop.f32.mrf.mxu0
    %v2325 = vadd.f32 0.0, %v2324
    %v2326 = vpop.f32.mrf.mxu0
    %v2327 = vadd.f32 0.0, %v2326
    %2328 = vmatmul.bf16.gmra.mxu0 %v2276
    %v2329 = vpop.f32.mrf.mxu0
    %v2330 = vadd.f32 0.0, %v2329
    %v2331 = vpop.f32.mrf.mxu0
    %v2332 = vadd.f32 0.0, %v2331
    %2333 = vdwg.mxu0
    %v2334 = vadd.f32 %v2174, %v2295
    %v2335 = vadd.f32 %v2175, %v2297
    %v2336 = vadd.f32 %v2176, %v2300
    %v2337 = vadd.f32 %v2177, %v2302
    %v2338 = vadd.f32 %v2178, %v2305
    %v2339 = vadd.f32 %v2179, %v2307
    %v2340 = vadd.f32 %v2180, %v2310
    %v2341 = vadd.f32 %v2181, %v2312
    %v2342 = vadd.f32 %v2182, %v2315
    %v2343 = vadd.f32 %v2183, %v2317
    %v2344 = vadd.f32 %v2184, %v2320
    %v2345 = vadd.f32 %v2185, %v2322
    %v2346 = vadd.f32 %v2186, %v2325
    %v2347 = vadd.f32 %v2187, %v2327
    %v2348 = vadd.f32 %v2188, %v2330
    %v2349 = vadd.f32 %v2189, %v2332
    %s2350 = scalar_lea.vmem %s15, 896
    %v2351 = vld [vmem:[%s2350] sm:$0xff]
    %v2352 = vld [vmem:[%s2350 + $0x8] sm:$0xff]
    %v2353 = vld [vmem:[%s2350 + $0x10] sm:$0xff]
    %v2354 = vld [vmem:[%s2350 + $0x18] sm:$0xff]
    %v2355 = vld [vmem:[%s2350 + $0x20] sm:$0xff]
    %v2356 = vld [vmem:[%s2350 + $0x28] sm:$0xff]
    %v2357 = vld [vmem:[%s2350 + $0x30] sm:$0xff]
    %v2358 = vld [vmem:[%s2350 + $0x38] sm:$0xff]
    %v2359 = vld [vmem:[%s2350 + $0x40] sm:$0xff]
    %v2360 = vld [vmem:[%s2350 + $0x48] sm:$0xff]
    %v2361 = vld [vmem:[%s2350 + $0x50] sm:$0xff]
    %v2362 = vld [vmem:[%s2350 + $0x58] sm:$0xff]
    %v2363 = vld [vmem:[%s2350 + $0x60] sm:$0xff]
    %v2364 = vld [vmem:[%s2350 + $0x68] sm:$0xff]
    %v2365 = vld [vmem:[%s2350 + $0x70] sm:$0xff]
    %v2366 = vld [vmem:[%s2350 + $0x78] sm:$0xff]
    %s2367 = scalar_lea.vmem %s17, 448
    %v2368 = vld [vmem:[%s2367] sm:$0xff]
    %v2369 = vld [vmem:[%s2367 + $0x8] sm:$0xff]
    %v2370 = vld [vmem:[%s2367 + $0x10] sm:$0xff]
    %v2371 = vld [vmem:[%s2367 + $0x18] sm:$0xff]
    %v2372 = vld [vmem:[%s2367 + $0x20] sm:$0xff]
    %v2373 = vld [vmem:[%s2367 + $0x28] sm:$0xff]
    %v2374 = vld [vmem:[%s2367 + $0x30] sm:$0xff]
    %v2375 = vld [vmem:[%s2367 + $0x38] sm:$0xff]
    %v2376 = vpack.c.bf16 %v2369, %v2368
    %v2377 = vpack.c.bf16 %v2371, %v2370
    %v2378 = vpack.c.bf16 %v2373, %v2372
    %v2379 = vpack.c.bf16 %v2375, %v2374
    %2380 = vmatpush.bf16.msra.mxu0 0
    %2381 = vmatpush.bf16.msra.mxu0 0
    %2382 = vmatpush.bf16.msra.mxu0 0
    %2383 = vmatpush.bf16.msra.mxu0 0
    %2384 = vmatpush.bf16.msra.mxu0 %v2379
    %2385 = vmatpush.bf16.msra.mxu0 %v2378
    %2386 = vmatpush.bf16.msra.mxu0 %v2377
    %2387 = vmatpush.bf16.msra.mxu0 %v2376
    %2388 = vmatmul.bf16.gmra.mxu0 %v1269
    %v2389 = vpop.f32.mrf.mxu0
    %v2390 = vadd.f32 0.0, %v2389
    %v2391 = vpop.f32.mrf.mxu0
    %v2392 = vadd.f32 0.0, %v2391
    %2393 = vmatmul.bf16.gmra.mxu0 %v1272
    %v2394 = vpop.f32.mrf.mxu0
    %v2395 = vadd.f32 0.0, %v2394
    %v2396 = vpop.f32.mrf.mxu0
    %v2397 = vadd.f32 0.0, %v2396
    %2398 = vmatmul.bf16.gmra.mxu0 %v1275
    %v2399 = vpop.f32.mrf.mxu0
    %v2400 = vadd.f32 0.0, %v2399
    %v2401 = vpop.f32.mrf.mxu0
    %v2402 = vadd.f32 0.0, %v2401
    %2403 = vmatmul.bf16.gmra.mxu0 %v1278
    %v2404 = vpop.f32.mrf.mxu0
    %v2405 = vadd.f32 0.0, %v2404
    %v2406 = vpop.f32.mrf.mxu0
    %v2407 = vadd.f32 0.0, %v2406
    %2408 = vmatmul.bf16.gmra.mxu0 %v1281
    %v2409 = vpop.f32.mrf.mxu0
    %v2410 = vadd.f32 0.0, %v2409
    %v2411 = vpop.f32.mrf.mxu0
    %v2412 = vadd.f32 0.0, %v2411
    %2413 = vmatmul.bf16.gmra.mxu0 %v1284
    %v2414 = vpop.f32.mrf.mxu0
    %v2415 = vadd.f32 0.0, %v2414
    %v2416 = vpop.f32.mrf.mxu0
    %v2417 = vadd.f32 0.0, %v2416
    %2418 = vmatmul.bf16.gmra.mxu0 %v1287
    %v2419 = vpop.f32.mrf.mxu0
    %v2420 = vadd.f32 0.0, %v2419
    %v2421 = vpop.f32.mrf.mxu0
    %v2422 = vadd.f32 0.0, %v2421
    %2423 = vmatmul.bf16.gmra.mxu0 %v1290
    %v2424 = vpop.f32.mrf.mxu0
    %v2425 = vadd.f32 0.0, %v2424
    %v2426 = vpop.f32.mrf.mxu0
    %v2427 = vadd.f32 0.0, %v2426
    %2428 = vdwg.mxu0
    %v2429 = vpack.c.bf16 %v2352, %v2351
    %v2430 = vpack.c.bf16 %v2354, %v2353
    %v2431 = vpack.c.bf16 %v2356, %v2355
    %v2432 = vpack.c.bf16 %v2358, %v2357
    %v2433 = vpack.c.bf16 %v2360, %v2359
    %v2434 = vpack.c.bf16 %v2362, %v2361
    %v2435 = vpack.c.bf16 %v2364, %v2363
    %v2436 = vpack.c.bf16 %v2366, %v2365
    %v2437 = vpack.c.bf16 %v2392, %v2390
    %v2438 = vpack.c.bf16 %v2397, %v2395
    %v2439 = vpack.c.bf16 %v2402, %v2400
    %v2440 = vpack.c.bf16 %v2407, %v2405
    %v2441 = vpack.c.bf16 %v2412, %v2410
    %v2442 = vpack.c.bf16 %v2417, %v2415
    %v2443 = vpack.c.bf16 %v2422, %v2420
    %v2444 = vpack.c.bf16 %v2427, %v2425
    %2445 = vmatpush.bf16.msra.mxu0 %v2444
    %2446 = vmatpush.bf16.msra.mxu0 %v2443
    %2447 = vmatpush.bf16.msra.mxu0 %v2442
    %2448 = vmatpush.bf16.msra.mxu0 %v2441
    %2449 = vmatpush.bf16.msra.mxu0 %v2440
    %2450 = vmatpush.bf16.msra.mxu0 %v2439
    %2451 = vmatpush.bf16.msra.mxu0 %v2438
    %2452 = vmatpush.bf16.msra.mxu0 %v2437
    %2453 = vmatmul.bf16.gmra.mxu0 %v2429
    %v2454 = vpop.f32.mrf.mxu0
    %v2455 = vadd.f32 0.0, %v2454
    %v2456 = vpop.f32.mrf.mxu0
    %v2457 = vadd.f32 0.0, %v2456
    %2458 = vmatmul.bf16.gmra.mxu0 %v2430
    %v2459 = vpop.f32.mrf.mxu0
    %v2460 = vadd.f32 0.0, %v2459
    %v2461 = vpop.f32.mrf.mxu0
    %v2462 = vadd.f32 0.0, %v2461
    %2463 = vmatmul.bf16.gmra.mxu0 %v2431
    %v2464 = vpop.f32.mrf.mxu0
    %v2465 = vadd.f32 0.0, %v2464
    %v2466 = vpop.f32.mrf.mxu0
    %v2467 = vadd.f32 0.0, %v2466
    %2468 = vmatmul.bf16.gmra.mxu0 %v2432
    %v2469 = vpop.f32.mrf.mxu0
    %v2470 = vadd.f32 0.0, %v2469
    %v2471 = vpop.f32.mrf.mxu0
    %v2472 = vadd.f32 0.0, %v2471
    %2473 = vmatmul.bf16.gmra.mxu0 %v2433
    %v2474 = vpop.f32.mrf.mxu0
    %v2475 = vadd.f32 0.0, %v2474
    %v2476 = vpop.f32.mrf.mxu0
    %v2477 = vadd.f32 0.0, %v2476
    %2478 = vmatmul.bf16.gmra.mxu0 %v2434
    %v2479 = vpop.f32.mrf.mxu0
    %v2480 = vadd.f32 0.0, %v2479
    %v2481 = vpop.f32.mrf.mxu0
    %v2482 = vadd.f32 0.0, %v2481
    %2483 = vmatmul.bf16.gmra.mxu0 %v2435
    %v2484 = vpop.f32.mrf.mxu0
    %v2485 = vadd.f32 0.0, %v2484
    %v2486 = vpop.f32.mrf.mxu0
    %v2487 = vadd.f32 0.0, %v2486
    %2488 = vmatmul.bf16.gmra.mxu0 %v2436
    %v2489 = vpop.f32.mrf.mxu0
    %v2490 = vadd.f32 0.0, %v2489
    %v2491 = vpop.f32.mrf.mxu0
    %v2492 = vadd.f32 0.0, %v2491
    %2493 = vdwg.mxu0
    %v2494 = vadd.f32 %v2334, %v2455
    %v2495 = vadd.f32 %v2335, %v2457
    %v2496 = vadd.f32 %v2336, %v2460
    %v2497 = vadd.f32 %v2337, %v2462
    %v2498 = vadd.f32 %v2338, %v2465
    %v2499 = vadd.f32 %v2339, %v2467
    %v2500 = vadd.f32 %v2340, %v2470
    %v2501 = vadd.f32 %v2341, %v2472
    %v2502 = vadd.f32 %v2342, %v2475
    %v2503 = vadd.f32 %v2343, %v2477
    %v2504 = vadd.f32 %v2344, %v2480
    %v2505 = vadd.f32 %v2345, %v2482
    %v2506 = vadd.f32 %v2346, %v2485
    %v2507 = vadd.f32 %v2347, %v2487
    %v2508 = vadd.f32 %v2348, %v2490
    %v2509 = vadd.f32 %v2349, %v2492
    %s2510 = scalar_lea.vmem %s15, 1024
    %v2511 = vld [vmem:[%s2510] sm:$0xff]
    %v2512 = vld [vmem:[%s2510 + $0x8] sm:$0xff]
    %v2513 = vld [vmem:[%s2510 + $0x10] sm:$0xff]
    %v2514 = vld [vmem:[%s2510 + $0x18] sm:$0xff]
    %v2515 = vld [vmem:[%s2510 + $0x20] sm:$0xff]
    %v2516 = vld [vmem:[%s2510 + $0x28] sm:$0xff]
    %v2517 = vld [vmem:[%s2510 + $0x30] sm:$0xff]
    %v2518 = vld [vmem:[%s2510 + $0x38] sm:$0xff]
    %v2519 = vld [vmem:[%s2510 + $0x40] sm:$0xff]
    %v2520 = vld [vmem:[%s2510 + $0x48] sm:$0xff]
    %v2521 = vld [vmem:[%s2510 + $0x50] sm:$0xff]
    %v2522 = vld [vmem:[%s2510 + $0x58] sm:$0xff]
    %v2523 = vld [vmem:[%s2510 + $0x60] sm:$0xff]
    %v2524 = vld [vmem:[%s2510 + $0x68] sm:$0xff]
    %v2525 = vld [vmem:[%s2510 + $0x70] sm:$0xff]
    %v2526 = vld [vmem:[%s2510 + $0x78] sm:$0xff]
    %s2527 = scalar_lea.vmem %s17, 512
    %v2528 = vld [vmem:[%s2527] sm:$0xff]
    %v2529 = vld [vmem:[%s2527 + $0x8] sm:$0xff]
    %v2530 = vld [vmem:[%s2527 + $0x10] sm:$0xff]
    %v2531 = vld [vmem:[%s2527 + $0x18] sm:$0xff]
    %v2532 = vld [vmem:[%s2527 + $0x20] sm:$0xff]
    %v2533 = vld [vmem:[%s2527 + $0x28] sm:$0xff]
    %v2534 = vld [vmem:[%s2527 + $0x30] sm:$0xff]
    %v2535 = vld [vmem:[%s2527 + $0x38] sm:$0xff]
    %v2536 = vpack.c.bf16 %v2529, %v2528
    %v2537 = vpack.c.bf16 %v2531, %v2530
    %v2538 = vpack.c.bf16 %v2533, %v2532
    %v2539 = vpack.c.bf16 %v2535, %v2534
    %2540 = vmatpush.bf16.msra.mxu0 0
    %2541 = vmatpush.bf16.msra.mxu0 0
    %2542 = vmatpush.bf16.msra.mxu0 0
    %2543 = vmatpush.bf16.msra.mxu0 0
    %2544 = vmatpush.bf16.msra.mxu0 %v2539
    %2545 = vmatpush.bf16.msra.mxu0 %v2538
    %2546 = vmatpush.bf16.msra.mxu0 %v2537
    %2547 = vmatpush.bf16.msra.mxu0 %v2536
    %2548 = vmatmul.bf16.gmra.mxu0 %v1269
    %v2549 = vpop.f32.mrf.mxu0
    %v2550 = vadd.f32 0.0, %v2549
    %v2551 = vpop.f32.mrf.mxu0
    %v2552 = vadd.f32 0.0, %v2551
    %2553 = vmatmul.bf16.gmra.mxu0 %v1272
    %v2554 = vpop.f32.mrf.mxu0
    %v2555 = vadd.f32 0.0, %v2554
    %v2556 = vpop.f32.mrf.mxu0
    %v2557 = vadd.f32 0.0, %v2556
    %2558 = vmatmul.bf16.gmra.mxu0 %v1275
    %v2559 = vpop.f32.mrf.mxu0
    %v2560 = vadd.f32 0.0, %v2559
    %v2561 = vpop.f32.mrf.mxu0
    %v2562 = vadd.f32 0.0, %v2561
    %2563 = vmatmul.bf16.gmra.mxu0 %v1278
    %v2564 = vpop.f32.mrf.mxu0
    %v2565 = vadd.f32 0.0, %v2564
    %v2566 = vpop.f32.mrf.mxu0
    %v2567 = vadd.f32 0.0, %v2566
    %2568 = vmatmul.bf16.gmra.mxu0 %v1281
    %v2569 = vpop.f32.mrf.mxu0
    %v2570 = vadd.f32 0.0, %v2569
    %v2571 = vpop.f32.mrf.mxu0
    %v2572 = vadd.f32 0.0, %v2571
    %2573 = vmatmul.bf16.gmra.mxu0 %v1284
    %v2574 = vpop.f32.mrf.mxu0
    %v2575 = vadd.f32 0.0, %v2574
    %v2576 = vpop.f32.mrf.mxu0
    %v2577 = vadd.f32 0.0, %v2576
    %2578 = vmatmul.bf16.gmra.mxu0 %v1287
    %v2579 = vpop.f32.mrf.mxu0
    %v2580 = vadd.f32 0.0, %v2579
    %v2581 = vpop.f32.mrf.mxu0
    %v2582 = vadd.f32 0.0, %v2581
    %2583 = vmatmul.bf16.gmra.mxu0 %v1290
    %v2584 = vpop.f32.mrf.mxu0
    %v2585 = vadd.f32 0.0, %v2584
    %v2586 = vpop.f32.mrf.mxu0
    %v2587 = vadd.f32 0.0, %v2586
    %2588 = vdwg.mxu0
    %v2589 = vpack.c.bf16 %v2512, %v2511
    %v2590 = vpack.c.bf16 %v2514, %v2513
    %v2591 = vpack.c.bf16 %v2516, %v2515
    %v2592 = vpack.c.bf16 %v2518, %v2517
    %v2593 = vpack.c.bf16 %v2520, %v2519
    %v2594 = vpack.c.bf16 %v2522, %v2521
    %v2595 = vpack.c.bf16 %v2524, %v2523
    %v2596 = vpack.c.bf16 %v2526, %v2525
    %v2597 = vpack.c.bf16 %v2552, %v2550
    %v2598 = vpack.c.bf16 %v2557, %v2555
    %v2599 = vpack.c.bf16 %v2562, %v2560
    %v2600 = vpack.c.bf16 %v2567, %v2565
    %v2601 = vpack.c.bf16 %v2572, %v2570
    %v2602 = vpack.c.bf16 %v2577, %v2575
    %v2603 = vpack.c.bf16 %v2582, %v2580
    %v2604 = vpack.c.bf16 %v2587, %v2585
    %2605 = vmatpush.bf16.msra.mxu0 %v2604
    %2606 = vmatpush.bf16.msra.mxu0 %v2603
    %2607 = vmatpush.bf16.msra.mxu0 %v2602
    %2608 = vmatpush.bf16.msra.mxu0 %v2601
    %2609 = vmatpush.bf16.msra.mxu0 %v2600
    %2610 = vmatpush.bf16.msra.mxu0 %v2599
    %2611 = vmatpush.bf16.msra.mxu0 %v2598
    %2612 = vmatpush.bf16.msra.mxu0 %v2597
    %2613 = vmatmul.bf16.gmra.mxu0 %v2589
    %v2614 = vpop.f32.mrf.mxu0
    %v2615 = vadd.f32 0.0, %v2614
    %v2616 = vpop.f32.mrf.mxu0
    %v2617 = vadd.f32 0.0, %v2616
    %2618 = vmatmul.bf16.gmra.mxu0 %v2590
    %v2619 = vpop.f32.mrf.mxu0
    %v2620 = vadd.f32 0.0, %v2619
    %v2621 = vpop.f32.mrf.mxu0
    %v2622 = vadd.f32 0.0, %v2621
    %2623 = vmatmul.bf16.gmra.mxu0 %v2591
    %v2624 = vpop.f32.mrf.mxu0
    %v2625 = vadd.f32 0.0, %v2624
    %v2626 = vpop.f32.mrf.mxu0
    %v2627 = vadd.f32 0.0, %v2626
    %2628 = vmatmul.bf16.gmra.mxu0 %v2592
    %v2629 = vpop.f32.mrf.mxu0
    %v2630 = vadd.f32 0.0, %v2629
    %v2631 = vpop.f32.mrf.mxu0
    %v2632 = vadd.f32 0.0, %v2631
    %2633 = vmatmul.bf16.gmra.mxu0 %v2593
    %v2634 = vpop.f32.mrf.mxu0
    %v2635 = vadd.f32 0.0, %v2634
    %v2636 = vpop.f32.mrf.mxu0
    %v2637 = vadd.f32 0.0, %v2636
    %2638 = vmatmul.bf16.gmra.mxu0 %v2594
    %v2639 = vpop.f32.mrf.mxu0
    %v2640 = vadd.f32 0.0, %v2639
    %v2641 = vpop.f32.mrf.mxu0
    %v2642 = vadd.f32 0.0, %v2641
    %2643 = vmatmul.bf16.gmra.mxu0 %v2595
    %v2644 = vpop.f32.mrf.mxu0
    %v2645 = vadd.f32 0.0, %v2644
    %v2646 = vpop.f32.mrf.mxu0
    %v2647 = vadd.f32 0.0, %v2646
    %2648 = vmatmul.bf16.gmra.mxu0 %v2596
    %v2649 = vpop.f32.mrf.mxu0
    %v2650 = vadd.f32 0.0, %v2649
    %v2651 = vpop.f32.mrf.mxu0
    %v2652 = vadd.f32 0.0, %v2651
    %2653 = vdwg.mxu0
    %v2654 = vadd.f32 %v2494, %v2615
    %v2655 = vadd.f32 %v2495, %v2617
    %v2656 = vadd.f32 %v2496, %v2620
    %v2657 = vadd.f32 %v2497, %v2622
    %v2658 = vadd.f32 %v2498, %v2625
    %v2659 = vadd.f32 %v2499, %v2627
    %v2660 = vadd.f32 %v2500, %v2630
    %v2661 = vadd.f32 %v2501, %v2632
    %v2662 = vadd.f32 %v2502, %v2635
    %v2663 = vadd.f32 %v2503, %v2637
    %v2664 = vadd.f32 %v2504, %v2640
    %v2665 = vadd.f32 %v2505, %v2642
    %v2666 = vadd.f32 %v2506, %v2645
    %v2667 = vadd.f32 %v2507, %v2647
    %v2668 = vadd.f32 %v2508, %v2650
    %v2669 = vadd.f32 %v2509, %v2652
    %v2670 = vld [vmem:[%s19] sm:$0x1]
    %v2672 = vperm.slane %v2670, 0
    %v2674 = vadd.f32 %v2654, %v2672
    %v2675 = vadd.f32 %v2655, %v2672
    %v2676 = vadd.f32 %v2656, %v2672
    %v2677 = vadd.f32 %v2657, %v2672
    %v2678 = vadd.f32 %v2658, %v2672
    %v2679 = vadd.f32 %v2659, %v2672
    %v2680 = vadd.f32 %v2660, %v2672
    %v2681 = vadd.f32 %v2661, %v2672
    %v2682 = vadd.f32 %v2662, %v2672
    %v2683 = vadd.f32 %v2663, %v2672
    %v2684 = vadd.f32 %v2664, %v2672
    %v2685 = vadd.f32 %v2665, %v2672
    %v2686 = vadd.f32 %v2666, %v2672
    %v2687 = vadd.f32 %v2667, %v2672
    %v2688 = vadd.f32 %v2668, %v2672
    %v2689 = vadd.f32 %v2669, %v2672
    %v2690 = vmax.f32 %v2674, 0.0
    %v2691 = vmax.f32 %v2675, 0.0
    %v2692 = vmax.f32 %v2676, 0.0
    %v2693 = vmax.f32 %v2677, 0.0
    %v2694 = vmax.f32 %v2678, 0.0
    %v2695 = vmax.f32 %v2679, 0.0
    %v2696 = vmax.f32 %v2680, 0.0
    %v2697 = vmax.f32 %v2681, 0.0
    %v2698 = vmax.f32 %v2682, 0.0
    %v2699 = vmax.f32 %v2683, 0.0
    %v2700 = vmax.f32 %v2684, 0.0
    %v2701 = vmax.f32 %v2685, 0.0
    %v2702 = vmax.f32 %v2686, 0.0
    %v2703 = vmax.f32 %v2687, 0.0
    %v2704 = vmax.f32 %v2688, 0.0
    %v2705 = vmax.f32 %v2689, 0.0
    %v2706 = vld [vmem:[%s21] sm:$0xff]
    %v2707 = vld [vmem:[%s21 + $0x8] sm:$0xff]
    %v2708 = vld [vmem:[%s21 + $0x10] sm:$0xff]
    %v2709 = vld [vmem:[%s21 + $0x18] sm:$0xff]
    %v2710 = vld [vmem:[%s21 + $0x20] sm:$0xff]
    %v2711 = vld [vmem:[%s21 + $0x28] sm:$0xff]
    %v2712 = vld [vmem:[%s21 + $0x30] sm:$0xff]
    %v2713 = vld [vmem:[%s21 + $0x38] sm:$0xff]
    %v2714 = vpack.c.bf16 %v2691, %v2690
    %v2715 = vpack.c.bf16 %v2693, %v2692
    %v2716 = vpack.c.bf16 %v2695, %v2694
    %v2717 = vpack.c.bf16 %v2697, %v2696
    %v2718 = vpack.c.bf16 %v2699, %v2698
    %v2719 = vpack.c.bf16 %v2701, %v2700
    %v2720 = vpack.c.bf16 %v2703, %v2702
    %v2721 = vpack.c.bf16 %v2705, %v2704
    %v2722 = vpack.c.bf16 %v2707, %v2706
    %v2723 = vpack.c.bf16 %v2709, %v2708
    %v2724 = vpack.c.bf16 %v2711, %v2710
    %v2725 = vpack.c.bf16 %v2713, %v2712
    %v2727 = vsel %vm491, %v2714, 0
    %v2730 = vsel %vm491, %v2715, 0
    %v2733 = vsel %vm491, %v2716, 0
    %v2736 = vsel %vm491, %v2717, 0
    %v2739 = vsel %vm491, %v2718, 0
    %v2742 = vsel %vm491, %v2719, 0
    %v2745 = vsel %vm491, %v2720, 0
    %v2748 = vsel %vm491, %v2721, 0
    %2750 = vmatpush.bf16.msra.mxu0 0
    %2751 = vmatpush.bf16.msra.mxu0 0
    %2752 = vmatpush.bf16.msra.mxu0 0
    %2753 = vmatpush.bf16.msra.mxu0 0
    %2754 = vmatpush.bf16.msra.mxu0 %v2725
    %2755 = vmatpush.bf16.msra.mxu0 %v2724
    %2756 = vmatpush.bf16.msra.mxu0 %v2723
    %2757 = vmatpush.bf16.msra.mxu0 %v2722
    %2758 = vmatmul.bf16.gmra.mxu0 %v2727
    %v2759 = vpop.f32.mrf.mxu0
    %v2760 = vadd.f32 0.0, %v2759
    %v2761 = vpop.f32.mrf.mxu0
    %v2762 = vadd.f32 0.0, %v2761
    %2763 = vmatmul.bf16.gmra.mxu0 %v2730
    %v2764 = vpop.f32.mrf.mxu0
    %v2765 = vadd.f32 0.0, %v2764
    %v2766 = vpop.f32.mrf.mxu0
    %v2767 = vadd.f32 0.0, %v2766
    %2768 = vmatmul.bf16.gmra.mxu0 %v2733
    %v2769 = vpop.f32.mrf.mxu0
    %v2770 = vadd.f32 0.0, %v2769
    %v2771 = vpop.f32.mrf.mxu0
    %v2772 = vadd.f32 0.0, %v2771
    %2773 = vmatmul.bf16.gmra.mxu0 %v2736
    %v2774 = vpop.f32.mrf.mxu0
    %v2775 = vadd.f32 0.0, %v2774
    %v2776 = vpop.f32.mrf.mxu0
    %v2777 = vadd.f32 0.0, %v2776
    %2778 = vmatmul.bf16.gmra.mxu0 %v2739
    %v2779 = vpop.f32.mrf.mxu0
    %v2780 = vadd.f32 0.0, %v2779
    %v2781 = vpop.f32.mrf.mxu0
    %v2782 = vadd.f32 0.0, %v2781
    %2783 = vmatmul.bf16.gmra.mxu0 %v2742
    %v2784 = vpop.f32.mrf.mxu0
    %v2785 = vadd.f32 0.0, %v2784
    %v2786 = vpop.f32.mrf.mxu0
    %v2787 = vadd.f32 0.0, %v2786
    %2788 = vmatmul.bf16.gmra.mxu0 %v2745
    %v2789 = vpop.f32.mrf.mxu0
    %v2790 = vadd.f32 0.0, %v2789
    %v2791 = vpop.f32.mrf.mxu0
    %v2792 = vadd.f32 0.0, %v2791
    %2793 = vmatmul.bf16.gmra.mxu0 %v2748
    %v2794 = vpop.f32.mrf.mxu0
    %v2795 = vadd.f32 0.0, %v2794
    %v2796 = vpop.f32.mrf.mxu0
    %v2797 = vadd.f32 0.0, %v2796
    %2798 = vdwg.mxu0
    %v2799 = vpack.c.bf16 %v2762, %v2760
    %v2800 = vpack.c.bf16 %v2767, %v2765
    %v2801 = vpack.c.bf16 %v2772, %v2770
    %v2802 = vpack.c.bf16 %v2777, %v2775
    %v2803 = vpack.c.bf16 %v2782, %v2780
    %v2804 = vpack.c.bf16 %v2787, %v2785
    %v2805 = vpack.c.bf16 %v2792, %v2790
    %v2806 = vpack.c.bf16 %v2797, %v2795
    %s2807 = scalar_lea.vmem %s21, 64
    %v2808 = vld [vmem:[%s2807] sm:$0xff]
    %v2809 = vld [vmem:[%s2807 + $0x8] sm:$0xff]
    %v2810 = vld [vmem:[%s2807 + $0x10] sm:$0xff]
    %v2811 = vld [vmem:[%s2807 + $0x18] sm:$0xff]
    %v2812 = vld [vmem:[%s2807 + $0x20] sm:$0xff]
    %v2813 = vld [vmem:[%s2807 + $0x28] sm:$0xff]
    %v2814 = vld [vmem:[%s2807 + $0x30] sm:$0xff]
    %v2815 = vld [vmem:[%s2807 + $0x38] sm:$0xff]
    %v2816 = vpack.c.bf16 %v2809, %v2808
    %v2817 = vpack.c.bf16 %v2811, %v2810
    %v2818 = vpack.c.bf16 %v2813, %v2812
    %v2819 = vpack.c.bf16 %v2815, %v2814
    %2820 = vmatpush.bf16.msra.mxu0 0
    %2821 = vmatpush.bf16.msra.mxu0 0
    %2822 = vmatpush.bf16.msra.mxu0 0
    %2823 = vmatpush.bf16.msra.mxu0 0
    %2824 = vmatpush.bf16.msra.mxu0 %v2819
    %2825 = vmatpush.bf16.msra.mxu0 %v2818
    %2826 = vmatpush.bf16.msra.mxu0 %v2817
    %2827 = vmatpush.bf16.msra.mxu0 %v2816
    %2828 = vmatmul.bf16.gmra.mxu0 %v2727
    %v2829 = vpop.f32.mrf.mxu0
    %v2830 = vadd.f32 0.0, %v2829
    %v2831 = vpop.f32.mrf.mxu0
    %v2832 = vadd.f32 0.0, %v2831
    %2833 = vmatmul.bf16.gmra.mxu0 %v2730
    %v2834 = vpop.f32.mrf.mxu0
    %v2835 = vadd.f32 0.0, %v2834
    %v2836 = vpop.f32.mrf.mxu0
    %v2837 = vadd.f32 0.0, %v2836
    %2838 = vmatmul.bf16.gmra.mxu0 %v2733
    %v2839 = vpop.f32.mrf.mxu0
    %v2840 = vadd.f32 0.0, %v2839
    %v2841 = vpop.f32.mrf.mxu0
    %v2842 = vadd.f32 0.0, %v2841
    %2843 = vmatmul.bf16.gmra.mxu0 %v2736
    %v2844 = vpop.f32.mrf.mxu0
    %v2845 = vadd.f32 0.0, %v2844
    %v2846 = vpop.f32.mrf.mxu0
    %v2847 = vadd.f32 0.0, %v2846
    %2848 = vmatmul.bf16.gmra.mxu0 %v2739
    %v2849 = vpop.f32.mrf.mxu0
    %v2850 = vadd.f32 0.0, %v2849
    %v2851 = vpop.f32.mrf.mxu0
    %v2852 = vadd.f32 0.0, %v2851
    %2853 = vmatmul.bf16.gmra.mxu0 %v2742
    %v2854 = vpop.f32.mrf.mxu0
    %v2855 = vadd.f32 0.0, %v2854
    %v2856 = vpop.f32.mrf.mxu0
    %v2857 = vadd.f32 0.0, %v2856
    %2858 = vmatmul.bf16.gmra.mxu0 %v2745
    %v2859 = vpop.f32.mrf.mxu0
    %v2860 = vadd.f32 0.0, %v2859
    %v2861 = vpop.f32.mrf.mxu0
    %v2862 = vadd.f32 0.0, %v2861
    %2863 = vmatmul.bf16.gmra.mxu0 %v2748
    %v2864 = vpop.f32.mrf.mxu0
    %v2865 = vadd.f32 0.0, %v2864
    %v2866 = vpop.f32.mrf.mxu0
    %v2867 = vadd.f32 0.0, %v2866
    %2868 = vdwg.mxu0
    %v2869 = vpack.c.bf16 %v2832, %v2830
    %v2870 = vpack.c.bf16 %v2837, %v2835
    %v2871 = vpack.c.bf16 %v2842, %v2840
    %v2872 = vpack.c.bf16 %v2847, %v2845
    %v2873 = vpack.c.bf16 %v2852, %v2850
    %v2874 = vpack.c.bf16 %v2857, %v2855
    %v2875 = vpack.c.bf16 %v2862, %v2860
    %v2876 = vpack.c.bf16 %v2867, %v2865
    %2877 = vmatpush.bf16.msra.mxu0 %v2876
    %2878 = vmatpush.bf16.msra.mxu0 %v2875
    %2879 = vmatpush.bf16.msra.mxu0 %v2874
    %2880 = vmatpush.bf16.msra.mxu0 %v2873
    %2881 = vmatpush.bf16.msra.mxu0 %v2872
    %2882 = vmatpush.bf16.msra.mxu0 %v2871
    %2883 = vmatpush.bf16.msra.mxu0 %v2870
    %2884 = vmatpush.bf16.msra.mxu0 %v2869
    %2885 = vmatmul.bf16.gmra.mxu0 %v1436
    %v2886 = vpop.f32.mrf.mxu0
    %v2887 = vadd.f32 0.0, %v2886
    %v2888 = vpop.f32.mrf.mxu0
    %v2889 = vadd.f32 0.0, %v2888
    %2890 = vmatmul.bf16.gmra.mxu0 %v1437
    %v2891 = vpop.f32.mrf.mxu0
    %v2892 = vadd.f32 0.0, %v2891
    %v2893 = vpop.f32.mrf.mxu0
    %v2894 = vadd.f32 0.0, %v2893
    %2895 = vmatmul.bf16.gmra.mxu0 %v1438
    %v2896 = vpop.f32.mrf.mxu0
    %v2897 = vadd.f32 0.0, %v2896
    %v2898 = vpop.f32.mrf.mxu0
    %v2899 = vadd.f32 0.0, %v2898
    %2900 = vmatmul.bf16.gmra.mxu0 %v1439
    %v2901 = vpop.f32.mrf.mxu0
    %v2902 = vadd.f32 0.0, %v2901
    %v2903 = vpop.f32.mrf.mxu0
    %v2904 = vadd.f32 0.0, %v2903
    %2905 = vmatmul.bf16.gmra.mxu0 %v1440
    %v2906 = vpop.f32.mrf.mxu0
    %v2907 = vadd.f32 0.0, %v2906
    %v2908 = vpop.f32.mrf.mxu0
    %v2909 = vadd.f32 0.0, %v2908
    %2910 = vmatmul.bf16.gmra.mxu0 %v1441
    %v2911 = vpop.f32.mrf.mxu0
    %v2912 = vadd.f32 0.0, %v2911
    %v2913 = vpop.f32.mrf.mxu0
    %v2914 = vadd.f32 0.0, %v2913
    %2915 = vmatmul.bf16.gmra.mxu0 %v1442
    %v2916 = vpop.f32.mrf.mxu0
    %v2917 = vadd.f32 0.0, %v2916
    %v2918 = vpop.f32.mrf.mxu0
    %v2919 = vadd.f32 0.0, %v2918
    %2920 = vmatmul.bf16.gmra.mxu0 %v1443
    %v2921 = vpop.f32.mrf.mxu0
    %v2922 = vadd.f32 0.0, %v2921
    %v2923 = vpop.f32.mrf.mxu0
    %v2924 = vadd.f32 0.0, %v2923
    %2925 = vdwg.mxu0
    %2926 = vmatpush.bf16.msra.mxu0 %v2806
    %2927 = vmatpush.bf16.msra.mxu0 %v2805
    %2928 = vmatpush.bf16.msra.mxu0 %v2804
    %2929 = vmatpush.bf16.msra.mxu0 %v2803
    %2930 = vmatpush.bf16.msra.mxu0 %v2802
    %2931 = vmatpush.bf16.msra.mxu0 %v2801
    %2932 = vmatpush.bf16.msra.mxu0 %v2800
    %2933 = vmatpush.bf16.msra.mxu0 %v2799
    %2934 = vmatmul.bf16.gmra.mxu0 %v1341
    %v2935 = vpop.f32.mrf.mxu0
    %v2936 = vadd.f32 %v2887, %v2935
    %v2937 = vpop.f32.mrf.mxu0
    %v2938 = vadd.f32 %v2889, %v2937
    %2939 = vmatmul.bf16.gmra.mxu0 %v1342
    %v2940 = vpop.f32.mrf.mxu0
    %v2941 = vadd.f32 %v2892, %v2940
    %v2942 = vpop.f32.mrf.mxu0
    %v2943 = vadd.f32 %v2894, %v2942
    %2944 = vmatmul.bf16.gmra.mxu0 %v1343
    %v2945 = vpop.f32.mrf.mxu0
    %v2946 = vadd.f32 %v2897, %v2945
    %v2947 = vpop.f32.mrf.mxu0
    %v2948 = vadd.f32 %v2899, %v2947
    %2949 = vmatmul.bf16.gmra.mxu0 %v1344
    %v2950 = vpop.f32.mrf.mxu0
    %v2951 = vadd.f32 %v2902, %v2950
    %v2952 = vpop.f32.mrf.mxu0
    %v2953 = vadd.f32 %v2904, %v2952
    %2954 = vmatmul.bf16.gmra.mxu0 %v1345
    %v2955 = vpop.f32.mrf.mxu0
    %v2956 = vadd.f32 %v2907, %v2955
    %v2957 = vpop.f32.mrf.mxu0
    %v2958 = vadd.f32 %v2909, %v2957
    %2959 = vmatmul.bf16.gmra.mxu0 %v1346
    %v2960 = vpop.f32.mrf.mxu0
    %v2961 = vadd.f32 %v2912, %v2960
    %v2962 = vpop.f32.mrf.mxu0
    %v2963 = vadd.f32 %v2914, %v2962
    %2964 = vmatmul.bf16.gmra.mxu0 %v1347
    %v2965 = vpop.f32.mrf.mxu0
    %v2966 = vadd.f32 %v2917, %v2965
    %v2967 = vpop.f32.mrf.mxu0
    %v2968 = vadd.f32 %v2919, %v2967
    %2969 = vmatmul.bf16.gmra.mxu0 %v1348
    %v2970 = vpop.f32.mrf.mxu0
    %v2971 = vadd.f32 %v2922, %v2970
    %v2972 = vpop.f32.mrf.mxu0
    %v2973 = vadd.f32 %v2924, %v2972
    %2974 = vdwg.mxu0
    %s2975 = scalar_lea.vmem %s21, 128
    %v2976 = vld [vmem:[%s2975] sm:$0xff]
    %v2977 = vld [vmem:[%s2975 + $0x8] sm:$0xff]
    %v2978 = vld [vmem:[%s2975 + $0x10] sm:$0xff]
    %v2979 = vld [vmem:[%s2975 + $0x18] sm:$0xff]
    %v2980 = vld [vmem:[%s2975 + $0x20] sm:$0xff]
    %v2981 = vld [vmem:[%s2975 + $0x28] sm:$0xff]
    %v2982 = vld [vmem:[%s2975 + $0x30] sm:$0xff]
    %v2983 = vld [vmem:[%s2975 + $0x38] sm:$0xff]
    %v2984 = vpack.c.bf16 %v2977, %v2976
    %v2985 = vpack.c.bf16 %v2979, %v2978
    %v2986 = vpack.c.bf16 %v2981, %v2980
    %v2987 = vpack.c.bf16 %v2983, %v2982
    %2988 = vmatpush.bf16.msra.mxu0 0
    %2989 = vmatpush.bf16.msra.mxu0 0
    %2990 = vmatpush.bf16.msra.mxu0 0
    %2991 = vmatpush.bf16.msra.mxu0 0
    %2992 = vmatpush.bf16.msra.mxu0 %v2987
    %2993 = vmatpush.bf16.msra.mxu0 %v2986
    %2994 = vmatpush.bf16.msra.mxu0 %v2985
    %2995 = vmatpush.bf16.msra.mxu0 %v2984
    %2996 = vmatmul.bf16.gmra.mxu0 %v2727
    %v2997 = vpop.f32.mrf.mxu0
    %v2998 = vadd.f32 0.0, %v2997
    %v2999 = vpop.f32.mrf.mxu0
    %v3000 = vadd.f32 0.0, %v2999
    %3001 = vmatmul.bf16.gmra.mxu0 %v2730
    %v3002 = vpop.f32.mrf.mxu0
    %v3003 = vadd.f32 0.0, %v3002
    %v3004 = vpop.f32.mrf.mxu0
    %v3005 = vadd.f32 0.0, %v3004
    %3006 = vmatmul.bf16.gmra.mxu0 %v2733
    %v3007 = vpop.f32.mrf.mxu0
    %v3008 = vadd.f32 0.0, %v3007
    %v3009 = vpop.f32.mrf.mxu0
    %v3010 = vadd.f32 0.0, %v3009
    %3011 = vmatmul.bf16.gmra.mxu0 %v2736
    %v3012 = vpop.f32.mrf.mxu0
    %v3013 = vadd.f32 0.0, %v3012
    %v3014 = vpop.f32.mrf.mxu0
    %v3015 = vadd.f32 0.0, %v3014
    %3016 = vmatmul.bf16.gmra.mxu0 %v2739
    %v3017 = vpop.f32.mrf.mxu0
    %v3018 = vadd.f32 0.0, %v3017
    %v3019 = vpop.f32.mrf.mxu0
    %v3020 = vadd.f32 0.0, %v3019
    %3021 = vmatmul.bf16.gmra.mxu0 %v2742
    %v3022 = vpop.f32.mrf.mxu0
    %v3023 = vadd.f32 0.0, %v3022
    %v3024 = vpop.f32.mrf.mxu0
    %v3025 = vadd.f32 0.0, %v3024
    %3026 = vmatmul.bf16.gmra.mxu0 %v2745
    %v3027 = vpop.f32.mrf.mxu0
    %v3028 = vadd.f32 0.0, %v3027
    %v3029 = vpop.f32.mrf.mxu0
    %v3030 = vadd.f32 0.0, %v3029
    %3031 = vmatmul.bf16.gmra.mxu0 %v2748
    %v3032 = vpop.f32.mrf.mxu0
    %v3033 = vadd.f32 0.0, %v3032
    %v3034 = vpop.f32.mrf.mxu0
    %v3035 = vadd.f32 0.0, %v3034
    %3036 = vdwg.mxu0
    %v3037 = vpack.c.bf16 %v3000, %v2998
    %v3038 = vpack.c.bf16 %v3005, %v3003
    %v3039 = vpack.c.bf16 %v3010, %v3008
    %v3040 = vpack.c.bf16 %v3015, %v3013
    %v3041 = vpack.c.bf16 %v3020, %v3018
    %v3042 = vpack.c.bf16 %v3025, %v3023
    %v3043 = vpack.c.bf16 %v3030, %v3028
    %v3044 = vpack.c.bf16 %v3035, %v3033
    %3045 = vmatpush.bf16.msra.mxu0 %v3044
    %3046 = vmatpush.bf16.msra.mxu0 %v3043
    %3047 = vmatpush.bf16.msra.mxu0 %v3042
    %3048 = vmatpush.bf16.msra.mxu0 %v3041
    %3049 = vmatpush.bf16.msra.mxu0 %v3040
    %3050 = vmatpush.bf16.msra.mxu0 %v3039
    %3051 = vmatpush.bf16.msra.mxu0 %v3038
    %3052 = vmatpush.bf16.msra.mxu0 %v3037
    %3053 = vmatmul.bf16.gmra.mxu0 %v1629
    %v3054 = vpop.f32.mrf.mxu0
    %v3055 = vadd.f32 0.0, %v3054
    %v3056 = vpop.f32.mrf.mxu0
    %v3057 = vadd.f32 0.0, %v3056
    %3058 = vmatmul.bf16.gmra.mxu0 %v1630
    %v3059 = vpop.f32.mrf.mxu0
    %v3060 = vadd.f32 0.0, %v3059
    %v3061 = vpop.f32.mrf.mxu0
    %v3062 = vadd.f32 0.0, %v3061
    %3063 = vmatmul.bf16.gmra.mxu0 %v1631
    %v3064 = vpop.f32.mrf.mxu0
    %v3065 = vadd.f32 0.0, %v3064
    %v3066 = vpop.f32.mrf.mxu0
    %v3067 = vadd.f32 0.0, %v3066
    %3068 = vmatmul.bf16.gmra.mxu0 %v1632
    %v3069 = vpop.f32.mrf.mxu0
    %v3070 = vadd.f32 0.0, %v3069
    %v3071 = vpop.f32.mrf.mxu0
    %v3072 = vadd.f32 0.0, %v3071
    %3073 = vmatmul.bf16.gmra.mxu0 %v1633
    %v3074 = vpop.f32.mrf.mxu0
    %v3075 = vadd.f32 0.0, %v3074
    %v3076 = vpop.f32.mrf.mxu0
    %v3077 = vadd.f32 0.0, %v3076
    %3078 = vmatmul.bf16.gmra.mxu0 %v1634
    %v3079 = vpop.f32.mrf.mxu0
    %v3080 = vadd.f32 0.0, %v3079
    %v3081 = vpop.f32.mrf.mxu0
    %v3082 = vadd.f32 0.0, %v3081
    %3083 = vmatmul.bf16.gmra.mxu0 %v1635
    %v3084 = vpop.f32.mrf.mxu0
    %v3085 = vadd.f32 0.0, %v3084
    %v3086 = vpop.f32.mrf.mxu0
    %v3087 = vadd.f32 0.0, %v3086
    %3088 = vmatmul.bf16.gmra.mxu0 %v1636
    %v3089 = vpop.f32.mrf.mxu0
    %v3090 = vadd.f32 0.0, %v3089
    %v3091 = vpop.f32.mrf.mxu0
    %v3092 = vadd.f32 0.0, %v3091
    %3093 = vdwg.mxu0
    %v3094 = vadd.f32 %v2936, %v3055
    %v3095 = vadd.f32 %v2938, %v3057
    %v3096 = vadd.f32 %v2941, %v3060
    %v3097 = vadd.f32 %v2943, %v3062
    %v3098 = vadd.f32 %v2946, %v3065
    %v3099 = vadd.f32 %v2948, %v3067
    %v3100 = vadd.f32 %v2951, %v3070
    %v3101 = vadd.f32 %v2953, %v3072
    %v3102 = vadd.f32 %v2956, %v3075
    %v3103 = vadd.f32 %v2958, %v3077
    %v3104 = vadd.f32 %v2961, %v3080
    %v3105 = vadd.f32 %v2963, %v3082
    %v3106 = vadd.f32 %v2966, %v3085
    %v3107 = vadd.f32 %v2968, %v3087
    %v3108 = vadd.f32 %v2971, %v3090
    %v3109 = vadd.f32 %v2973, %v3092
    %s3110 = scalar_lea.vmem %s21, 192
    %v3111 = vld [vmem:[%s3110] sm:$0xff]
    %v3112 = vld [vmem:[%s3110 + $0x8] sm:$0xff]
    %v3113 = vld [vmem:[%s3110 + $0x10] sm:$0xff]
    %v3114 = vld [vmem:[%s3110 + $0x18] sm:$0xff]
    %v3115 = vld [vmem:[%s3110 + $0x20] sm:$0xff]
    %v3116 = vld [vmem:[%s3110 + $0x28] sm:$0xff]
    %v3117 = vld [vmem:[%s3110 + $0x30] sm:$0xff]
    %v3118 = vld [vmem:[%s3110 + $0x38] sm:$0xff]
    %v3119 = vpack.c.bf16 %v3112, %v3111
    %v3120 = vpack.c.bf16 %v3114, %v3113
    %v3121 = vpack.c.bf16 %v3116, %v3115
    %v3122 = vpack.c.bf16 %v3118, %v3117
    %3123 = vmatpush.bf16.msra.mxu0 0
    %3124 = vmatpush.bf16.msra.mxu0 0
    %3125 = vmatpush.bf16.msra.mxu0 0
    %3126 = vmatpush.bf16.msra.mxu0 0
    %3127 = vmatpush.bf16.msra.mxu0 %v3122
    %3128 = vmatpush.bf16.msra.mxu0 %v3121
    %3129 = vmatpush.bf16.msra.mxu0 %v3120
    %3130 = vmatpush.bf16.msra.mxu0 %v3119
    %3131 = vmatmul.bf16.gmra.mxu0 %v2727
    %v3132 = vpop.f32.mrf.mxu0
    %v3133 = vadd.f32 0.0, %v3132
    %v3134 = vpop.f32.mrf.mxu0
    %v3135 = vadd.f32 0.0, %v3134
    %3136 = vmatmul.bf16.gmra.mxu0 %v2730
    %v3137 = vpop.f32.mrf.mxu0
    %v3138 = vadd.f32 0.0, %v3137
    %v3139 = vpop.f32.mrf.mxu0
    %v3140 = vadd.f32 0.0, %v3139
    %3141 = vmatmul.bf16.gmra.mxu0 %v2733
    %v3142 = vpop.f32.mrf.mxu0
    %v3143 = vadd.f32 0.0, %v3142
    %v3144 = vpop.f32.mrf.mxu0
    %v3145 = vadd.f32 0.0, %v3144
    %3146 = vmatmul.bf16.gmra.mxu0 %v2736
    %v3147 = vpop.f32.mrf.mxu0
    %v3148 = vadd.f32 0.0, %v3147
    %v3149 = vpop.f32.mrf.mxu0
    %v3150 = vadd.f32 0.0, %v3149
    %3151 = vmatmul.bf16.gmra.mxu0 %v2739
    %v3152 = vpop.f32.mrf.mxu0
    %v3153 = vadd.f32 0.0, %v3152
    %v3154 = vpop.f32.mrf.mxu0
    %v3155 = vadd.f32 0.0, %v3154
    %3156 = vmatmul.bf16.gmra.mxu0 %v2742
    %v3157 = vpop.f32.mrf.mxu0
    %v3158 = vadd.f32 0.0, %v3157
    %v3159 = vpop.f32.mrf.mxu0
    %v3160 = vadd.f32 0.0, %v3159
    %3161 = vmatmul.bf16.gmra.mxu0 %v2745
    %v3162 = vpop.f32.mrf.mxu0
    %v3163 = vadd.f32 0.0, %v3162
    %v3164 = vpop.f32.mrf.mxu0
    %v3165 = vadd.f32 0.0, %v3164
    %3166 = vmatmul.bf16.gmra.mxu0 %v2748
    %v3167 = vpop.f32.mrf.mxu0
    %v3168 = vadd.f32 0.0, %v3167
    %v3169 = vpop.f32.mrf.mxu0
    %v3170 = vadd.f32 0.0, %v3169
    %3171 = vdwg.mxu0
    %v3172 = vpack.c.bf16 %v3135, %v3133
    %v3173 = vpack.c.bf16 %v3140, %v3138
    %v3174 = vpack.c.bf16 %v3145, %v3143
    %v3175 = vpack.c.bf16 %v3150, %v3148
    %v3176 = vpack.c.bf16 %v3155, %v3153
    %v3177 = vpack.c.bf16 %v3160, %v3158
    %v3178 = vpack.c.bf16 %v3165, %v3163
    %v3179 = vpack.c.bf16 %v3170, %v3168
    %3180 = vmatpush.bf16.msra.mxu0 %v3179
    %3181 = vmatpush.bf16.msra.mxu0 %v3178
    %3182 = vmatpush.bf16.msra.mxu0 %v3177
    %3183 = vmatpush.bf16.msra.mxu0 %v3176
    %3184 = vmatpush.bf16.msra.mxu0 %v3175
    %3185 = vmatpush.bf16.msra.mxu0 %v3174
    %3186 = vmatpush.bf16.msra.mxu0 %v3173
    %3187 = vmatpush.bf16.msra.mxu0 %v3172
    %3188 = vmatmul.bf16.gmra.mxu0 %v1789
    %v3189 = vpop.f32.mrf.mxu0
    %v3190 = vadd.f32 0.0, %v3189
    %v3191 = vpop.f32.mrf.mxu0
    %v3192 = vadd.f32 0.0, %v3191
    %3193 = vmatmul.bf16.gmra.mxu0 %v1790
    %v3194 = vpop.f32.mrf.mxu0
    %v3195 = vadd.f32 0.0, %v3194
    %v3196 = vpop.f32.mrf.mxu0
    %v3197 = vadd.f32 0.0, %v3196
    %3198 = vmatmul.bf16.gmra.mxu0 %v1791
    %v3199 = vpop.f32.mrf.mxu0
    %v3200 = vadd.f32 0.0, %v3199
    %v3201 = vpop.f32.mrf.mxu0
    %v3202 = vadd.f32 0.0, %v3201
    %3203 = vmatmul.bf16.gmra.mxu0 %v1792
    %v3204 = vpop.f32.mrf.mxu0
    %v3205 = vadd.f32 0.0, %v3204
    %v3206 = vpop.f32.mrf.mxu0
    %v3207 = vadd.f32 0.0, %v3206
    %3208 = vmatmul.bf16.gmra.mxu0 %v1793
    %v3209 = vpop.f32.mrf.mxu0
    %v3210 = vadd.f32 0.0, %v3209
    %v3211 = vpop.f32.mrf.mxu0
    %v3212 = vadd.f32 0.0, %v3211
    %3213 = vmatmul.bf16.gmra.mxu0 %v1794
    %v3214 = vpop.f32.mrf.mxu0
    %v3215 = vadd.f32 0.0, %v3214
    %v3216 = vpop.f32.mrf.mxu0
    %v3217 = vadd.f32 0.0, %v3216
    %3218 = vmatmul.bf16.gmra.mxu0 %v1795
    %v3219 = vpop.f32.mrf.mxu0
    %v3220 = vadd.f32 0.0, %v3219
    %v3221 = vpop.f32.mrf.mxu0
    %v3222 = vadd.f32 0.0, %v3221
    %3223 = vmatmul.bf16.gmra.mxu0 %v1796
    %v3224 = vpop.f32.mrf.mxu0
    %v3225 = vadd.f32 0.0, %v3224
    %v3226 = vpop.f32.mrf.mxu0
    %v3227 = vadd.f32 0.0, %v3226
    %3228 = vdwg.mxu0
    %v3229 = vadd.f32 %v3094, %v3190
    %v3230 = vadd.f32 %v3095, %v3192
    %v3231 = vadd.f32 %v3096, %v3195
    %v3232 = vadd.f32 %v3097, %v3197
    %v3233 = vadd.f32 %v3098, %v3200
    %v3234 = vadd.f32 %v3099, %v3202
    %v3235 = vadd.f32 %v3100, %v3205
    %v3236 = vadd.f32 %v3101, %v3207
    %v3237 = vadd.f32 %v3102, %v3210
    %v3238 = vadd.f32 %v3103, %v3212
    %v3239 = vadd.f32 %v3104, %v3215
    %v3240 = vadd.f32 %v3105, %v3217
    %v3241 = vadd.f32 %v3106, %v3220
    %v3242 = vadd.f32 %v3107, %v3222
    %v3243 = vadd.f32 %v3108, %v3225
    %v3244 = vadd.f32 %v3109, %v3227
    %s3245 = scalar_lea.vmem %s21, 256
    %v3246 = vld [vmem:[%s3245] sm:$0xff]
    %v3247 = vld [vmem:[%s3245 + $0x8] sm:$0xff]
    %v3248 = vld [vmem:[%s3245 + $0x10] sm:$0xff]
    %v3249 = vld [vmem:[%s3245 + $0x18] sm:$0xff]
    %v3250 = vld [vmem:[%s3245 + $0x20] sm:$0xff]
    %v3251 = vld [vmem:[%s3245 + $0x28] sm:$0xff]
    %v3252 = vld [vmem:[%s3245 + $0x30] sm:$0xff]
    %v3253 = vld [vmem:[%s3245 + $0x38] sm:$0xff]
    %v3254 = vpack.c.bf16 %v3247, %v3246
    %v3255 = vpack.c.bf16 %v3249, %v3248
    %v3256 = vpack.c.bf16 %v3251, %v3250
    %v3257 = vpack.c.bf16 %v3253, %v3252
    %3258 = vmatpush.bf16.msra.mxu0 0
    %3259 = vmatpush.bf16.msra.mxu0 0
    %3260 = vmatpush.bf16.msra.mxu0 0
    %3261 = vmatpush.bf16.msra.mxu0 0
    %3262 = vmatpush.bf16.msra.mxu0 %v3257
    %3263 = vmatpush.bf16.msra.mxu0 %v3256
    %3264 = vmatpush.bf16.msra.mxu0 %v3255
    %3265 = vmatpush.bf16.msra.mxu0 %v3254
    %3266 = vmatmul.bf16.gmra.mxu0 %v2727
    %v3267 = vpop.f32.mrf.mxu0
    %v3268 = vadd.f32 0.0, %v3267
    %v3269 = vpop.f32.mrf.mxu0
    %v3270 = vadd.f32 0.0, %v3269
    %3271 = vmatmul.bf16.gmra.mxu0 %v2730
    %v3272 = vpop.f32.mrf.mxu0
    %v3273 = vadd.f32 0.0, %v3272
    %v3274 = vpop.f32.mrf.mxu0
    %v3275 = vadd.f32 0.0, %v3274
    %3276 = vmatmul.bf16.gmra.mxu0 %v2733
    %v3277 = vpop.f32.mrf.mxu0
    %v3278 = vadd.f32 0.0, %v3277
    %v3279 = vpop.f32.mrf.mxu0
    %v3280 = vadd.f32 0.0, %v3279
    %3281 = vmatmul.bf16.gmra.mxu0 %v2736
    %v3282 = vpop.f32.mrf.mxu0
    %v3283 = vadd.f32 0.0, %v3282
    %v3284 = vpop.f32.mrf.mxu0
    %v3285 = vadd.f32 0.0, %v3284
    %3286 = vmatmul.bf16.gmra.mxu0 %v2739
    %v3287 = vpop.f32.mrf.mxu0
    %v3288 = vadd.f32 0.0, %v3287
    %v3289 = vpop.f32.mrf.mxu0
    %v3290 = vadd.f32 0.0, %v3289
    %3291 = vmatmul.bf16.gmra.mxu0 %v2742
    %v3292 = vpop.f32.mrf.mxu0
    %v3293 = vadd.f32 0.0, %v3292
    %v3294 = vpop.f32.mrf.mxu0
    %v3295 = vadd.f32 0.0, %v3294
    %3296 = vmatmul.bf16.gmra.mxu0 %v2745
    %v3297 = vpop.f32.mrf.mxu0
    %v3298 = vadd.f32 0.0, %v3297
    %v3299 = vpop.f32.mrf.mxu0
    %v3300 = vadd.f32 0.0, %v3299
    %3301 = vmatmul.bf16.gmra.mxu0 %v2748
    %v3302 = vpop.f32.mrf.mxu0
    %v3303 = vadd.f32 0.0, %v3302
    %v3304 = vpop.f32.mrf.mxu0
    %v3305 = vadd.f32 0.0, %v3304
    %3306 = vdwg.mxu0
    %v3307 = vpack.c.bf16 %v3270, %v3268
    %v3308 = vpack.c.bf16 %v3275, %v3273
    %v3309 = vpack.c.bf16 %v3280, %v3278
    %v3310 = vpack.c.bf16 %v3285, %v3283
    %v3311 = vpack.c.bf16 %v3290, %v3288
    %v3312 = vpack.c.bf16 %v3295, %v3293
    %v3313 = vpack.c.bf16 %v3300, %v3298
    %v3314 = vpack.c.bf16 %v3305, %v3303
    %3315 = vmatpush.bf16.msra.mxu0 %v3314
    %3316 = vmatpush.bf16.msra.mxu0 %v3313
    %3317 = vmatpush.bf16.msra.mxu0 %v3312
    %3318 = vmatpush.bf16.msra.mxu0 %v3311
    %3319 = vmatpush.bf16.msra.mxu0 %v3310
    %3320 = vmatpush.bf16.msra.mxu0 %v3309
    %3321 = vmatpush.bf16.msra.mxu0 %v3308
    %3322 = vmatpush.bf16.msra.mxu0 %v3307
    %3323 = vmatmul.bf16.gmra.mxu0 %v1949
    %v3324 = vpop.f32.mrf.mxu0
    %v3325 = vadd.f32 0.0, %v3324
    %v3326 = vpop.f32.mrf.mxu0
    %v3327 = vadd.f32 0.0, %v3326
    %3328 = vmatmul.bf16.gmra.mxu0 %v1950
    %v3329 = vpop.f32.mrf.mxu0
    %v3330 = vadd.f32 0.0, %v3329
    %v3331 = vpop.f32.mrf.mxu0
    %v3332 = vadd.f32 0.0, %v3331
    %3333 = vmatmul.bf16.gmra.mxu0 %v1951
    %v3334 = vpop.f32.mrf.mxu0
    %v3335 = vadd.f32 0.0, %v3334
    %v3336 = vpop.f32.mrf.mxu0
    %v3337 = vadd.f32 0.0, %v3336
    %3338 = vmatmul.bf16.gmra.mxu0 %v1952
    %v3339 = vpop.f32.mrf.mxu0
    %v3340 = vadd.f32 0.0, %v3339
    %v3341 = vpop.f32.mrf.mxu0
    %v3342 = vadd.f32 0.0, %v3341
    %3343 = vmatmul.bf16.gmra.mxu0 %v1953
    %v3344 = vpop.f32.mrf.mxu0
    %v3345 = vadd.f32 0.0, %v3344
    %v3346 = vpop.f32.mrf.mxu0
    %v3347 = vadd.f32 0.0, %v3346
    %3348 = vmatmul.bf16.gmra.mxu0 %v1954
    %v3349 = vpop.f32.mrf.mxu0
    %v3350 = vadd.f32 0.0, %v3349
    %v3351 = vpop.f32.mrf.mxu0
    %v3352 = vadd.f32 0.0, %v3351
    %3353 = vmatmul.bf16.gmra.mxu0 %v1955
    %v3354 = vpop.f32.mrf.mxu0
    %v3355 = vadd.f32 0.0, %v3354
    %v3356 = vpop.f32.mrf.mxu0
    %v3357 = vadd.f32 0.0, %v3356
    %3358 = vmatmul.bf16.gmra.mxu0 %v1956
    %v3359 = vpop.f32.mrf.mxu0
    %v3360 = vadd.f32 0.0, %v3359
    %v3361 = vpop.f32.mrf.mxu0
    %v3362 = vadd.f32 0.0, %v3361
    %3363 = vdwg.mxu0
    %v3364 = vadd.f32 %v3229, %v3325
    %v3365 = vadd.f32 %v3230, %v3327
    %v3366 = vadd.f32 %v3231, %v3330
    %v3367 = vadd.f32 %v3232, %v3332
    %v3368 = vadd.f32 %v3233, %v3335
    %v3369 = vadd.f32 %v3234, %v3337
    %v3370 = vadd.f32 %v3235, %v3340
    %v3371 = vadd.f32 %v3236, %v3342
    %v3372 = vadd.f32 %v3237, %v3345
    %v3373 = vadd.f32 %v3238, %v3347
    %v3374 = vadd.f32 %v3239, %v3350
    %v3375 = vadd.f32 %v3240, %v3352
    %v3376 = vadd.f32 %v3241, %v3355
    %v3377 = vadd.f32 %v3242, %v3357
    %v3378 = vadd.f32 %v3243, %v3360
    %v3379 = vadd.f32 %v3244, %v3362
    %s3380 = scalar_lea.vmem %s21, 320
    %v3381 = vld [vmem:[%s3380] sm:$0xff]
    %v3382 = vld [vmem:[%s3380 + $0x8] sm:$0xff]
    %v3383 = vld [vmem:[%s3380 + $0x10] sm:$0xff]
    %v3384 = vld [vmem:[%s3380 + $0x18] sm:$0xff]
    %v3385 = vld [vmem:[%s3380 + $0x20] sm:$0xff]
    %v3386 = vld [vmem:[%s3380 + $0x28] sm:$0xff]
    %v3387 = vld [vmem:[%s3380 + $0x30] sm:$0xff]
    %v3388 = vld [vmem:[%s3380 + $0x38] sm:$0xff]
    %v3389 = vpack.c.bf16 %v3382, %v3381
    %v3390 = vpack.c.bf16 %v3384, %v3383
    %v3391 = vpack.c.bf16 %v3386, %v3385
    %v3392 = vpack.c.bf16 %v3388, %v3387
    %3393 = vmatpush.bf16.msra.mxu0 0
    %3394 = vmatpush.bf16.msra.mxu0 0
    %3395 = vmatpush.bf16.msra.mxu0 0
    %3396 = vmatpush.bf16.msra.mxu0 0
    %3397 = vmatpush.bf16.msra.mxu0 %v3392
    %3398 = vmatpush.bf16.msra.mxu0 %v3391
    %3399 = vmatpush.bf16.msra.mxu0 %v3390
    %3400 = vmatpush.bf16.msra.mxu0 %v3389
    %3401 = vmatmul.bf16.gmra.mxu0 %v2727
    %v3402 = vpop.f32.mrf.mxu0
    %v3403 = vadd.f32 0.0, %v3402
    %v3404 = vpop.f32.mrf.mxu0
    %v3405 = vadd.f32 0.0, %v3404
    %3406 = vmatmul.bf16.gmra.mxu0 %v2730
    %v3407 = vpop.f32.mrf.mxu0
    %v3408 = vadd.f32 0.0, %v3407
    %v3409 = vpop.f32.mrf.mxu0
    %v3410 = vadd.f32 0.0, %v3409
    %3411 = vmatmul.bf16.gmra.mxu0 %v2733
    %v3412 = vpop.f32.mrf.mxu0
    %v3413 = vadd.f32 0.0, %v3412
    %v3414 = vpop.f32.mrf.mxu0
    %v3415 = vadd.f32 0.0, %v3414
    %3416 = vmatmul.bf16.gmra.mxu0 %v2736
    %v3417 = vpop.f32.mrf.mxu0
    %v3418 = vadd.f32 0.0, %v3417
    %v3419 = vpop.f32.mrf.mxu0
    %v3420 = vadd.f32 0.0, %v3419
    %3421 = vmatmul.bf16.gmra.mxu0 %v2739
    %v3422 = vpop.f32.mrf.mxu0
    %v3423 = vadd.f32 0.0, %v3422
    %v3424 = vpop.f32.mrf.mxu0
    %v3425 = vadd.f32 0.0, %v3424
    %3426 = vmatmul.bf16.gmra.mxu0 %v2742
    %v3427 = vpop.f32.mrf.mxu0
    %v3428 = vadd.f32 0.0, %v3427
    %v3429 = vpop.f32.mrf.mxu0
    %v3430 = vadd.f32 0.0, %v3429
    %3431 = vmatmul.bf16.gmra.mxu0 %v2745
    %v3432 = vpop.f32.mrf.mxu0
    %v3433 = vadd.f32 0.0, %v3432
    %v3434 = vpop.f32.mrf.mxu0
    %v3435 = vadd.f32 0.0, %v3434
    %3436 = vmatmul.bf16.gmra.mxu0 %v2748
    %v3437 = vpop.f32.mrf.mxu0
    %v3438 = vadd.f32 0.0, %v3437
    %v3439 = vpop.f32.mrf.mxu0
    %v3440 = vadd.f32 0.0, %v3439
    %3441 = vdwg.mxu0
    %v3442 = vpack.c.bf16 %v3405, %v3403
    %v3443 = vpack.c.bf16 %v3410, %v3408
    %v3444 = vpack.c.bf16 %v3415, %v3413
    %v3445 = vpack.c.bf16 %v3420, %v3418
    %v3446 = vpack.c.bf16 %v3425, %v3423
    %v3447 = vpack.c.bf16 %v3430, %v3428
    %v3448 = vpack.c.bf16 %v3435, %v3433
    %v3449 = vpack.c.bf16 %v3440, %v3438
    %3450 = vmatpush.bf16.msra.mxu0 %v3449
    %3451 = vmatpush.bf16.msra.mxu0 %v3448
    %3452 = vmatpush.bf16.msra.mxu0 %v3447
    %3453 = vmatpush.bf16.msra.mxu0 %v3446
    %3454 = vmatpush.bf16.msra.mxu0 %v3445
    %3455 = vmatpush.bf16.msra.mxu0 %v3444
    %3456 = vmatpush.bf16.msra.mxu0 %v3443
    %3457 = vmatpush.bf16.msra.mxu0 %v3442
    %3458 = vmatmul.bf16.gmra.mxu0 %v2109
    %v3459 = vpop.f32.mrf.mxu0
    %v3460 = vadd.f32 0.0, %v3459
    %v3461 = vpop.f32.mrf.mxu0
    %v3462 = vadd.f32 0.0, %v3461
    %3463 = vmatmul.bf16.gmra.mxu0 %v2110
    %v3464 = vpop.f32.mrf.mxu0
    %v3465 = vadd.f32 0.0, %v3464
    %v3466 = vpop.f32.mrf.mxu0
    %v3467 = vadd.f32 0.0, %v3466
    %3468 = vmatmul.bf16.gmra.mxu0 %v2111
    %v3469 = vpop.f32.mrf.mxu0
    %v3470 = vadd.f32 0.0, %v3469
    %v3471 = vpop.f32.mrf.mxu0
    %v3472 = vadd.f32 0.0, %v3471
    %3473 = vmatmul.bf16.gmra.mxu0 %v2112
    %v3474 = vpop.f32.mrf.mxu0
    %v3475 = vadd.f32 0.0, %v3474
    %v3476 = vpop.f32.mrf.mxu0
    %v3477 = vadd.f32 0.0, %v3476
    %3478 = vmatmul.bf16.gmra.mxu0 %v2113
    %v3479 = vpop.f32.mrf.mxu0
    %v3480 = vadd.f32 0.0, %v3479
    %v3481 = vpop.f32.mrf.mxu0
    %v3482 = vadd.f32 0.0, %v3481
    %3483 = vmatmul.bf16.gmra.mxu0 %v2114
    %v3484 = vpop.f32.mrf.mxu0
    %v3485 = vadd.f32 0.0, %v3484
    %v3486 = vpop.f32.mrf.mxu0
    %v3487 = vadd.f32 0.0, %v3486
    %3488 = vmatmul.bf16.gmra.mxu0 %v2115
    %v3489 = vpop.f32.mrf.mxu0
    %v3490 = vadd.f32 0.0, %v3489
    %v3491 = vpop.f32.mrf.mxu0
    %v3492 = vadd.f32 0.0, %v3491
    %3493 = vmatmul.bf16.gmra.mxu0 %v2116
    %v3494 = vpop.f32.mrf.mxu0
    %v3495 = vadd.f32 0.0, %v3494
    %v3496 = vpop.f32.mrf.mxu0
    %v3497 = vadd.f32 0.0, %v3496
    %3498 = vdwg.mxu0
    %v3499 = vadd.f32 %v3364, %v3460
    %v3500 = vadd.f32 %v3365, %v3462
    %v3501 = vadd.f32 %v3366, %v3465
    %v3502 = vadd.f32 %v3367, %v3467
    %v3503 = vadd.f32 %v3368, %v3470
    %v3504 = vadd.f32 %v3369, %v3472
    %v3505 = vadd.f32 %v3370, %v3475
    %v3506 = vadd.f32 %v3371, %v3477
    %v3507 = vadd.f32 %v3372, %v3480
    %v3508 = vadd.f32 %v3373, %v3482
    %v3509 = vadd.f32 %v3374, %v3485
    %v3510 = vadd.f32 %v3375, %v3487
    %v3511 = vadd.f32 %v3376, %v3490
    %v3512 = vadd.f32 %v3377, %v3492
    %v3513 = vadd.f32 %v3378, %v3495
    %v3514 = vadd.f32 %v3379, %v3497
    %s3515 = scalar_lea.vmem %s21, 384
    %v3516 = vld [vmem:[%s3515] sm:$0xff]
    %v3517 = vld [vmem:[%s3515 + $0x8] sm:$0xff]
    %v3518 = vld [vmem:[%s3515 + $0x10] sm:$0xff]
    %v3519 = vld [vmem:[%s3515 + $0x18] sm:$0xff]
    %v3520 = vld [vmem:[%s3515 + $0x20] sm:$0xff]
    %v3521 = vld [vmem:[%s3515 + $0x28] sm:$0xff]
    %v3522 = vld [vmem:[%s3515 + $0x30] sm:$0xff]
    %v3523 = vld [vmem:[%s3515 + $0x38] sm:$0xff]
    %v3524 = vpack.c.bf16 %v3517, %v3516
    %v3525 = vpack.c.bf16 %v3519, %v3518
    %v3526 = vpack.c.bf16 %v3521, %v3520
    %v3527 = vpack.c.bf16 %v3523, %v3522
    %3528 = vmatpush.bf16.msra.mxu0 0
    %3529 = vmatpush.bf16.msra.mxu0 0
    %3530 = vmatpush.bf16.msra.mxu0 0
    %3531 = vmatpush.bf16.msra.mxu0 0
    %3532 = vmatpush.bf16.msra.mxu0 %v3527
    %3533 = vmatpush.bf16.msra.mxu0 %v3526
    %3534 = vmatpush.bf16.msra.mxu0 %v3525
    %3535 = vmatpush.bf16.msra.mxu0 %v3524
    %3536 = vmatmul.bf16.gmra.mxu0 %v2727
    %v3537 = vpop.f32.mrf.mxu0
    %v3538 = vadd.f32 0.0, %v3537
    %v3539 = vpop.f32.mrf.mxu0
    %v3540 = vadd.f32 0.0, %v3539
    %3541 = vmatmul.bf16.gmra.mxu0 %v2730
    %v3542 = vpop.f32.mrf.mxu0
    %v3543 = vadd.f32 0.0, %v3542
    %v3544 = vpop.f32.mrf.mxu0
    %v3545 = vadd.f32 0.0, %v3544
    %3546 = vmatmul.bf16.gmra.mxu0 %v2733
    %v3547 = vpop.f32.mrf.mxu0
    %v3548 = vadd.f32 0.0, %v3547
    %v3549 = vpop.f32.mrf.mxu0
    %v3550 = vadd.f32 0.0, %v3549
    %3551 = vmatmul.bf16.gmra.mxu0 %v2736
    %v3552 = vpop.f32.mrf.mxu0
    %v3553 = vadd.f32 0.0, %v3552
    %v3554 = vpop.f32.mrf.mxu0
    %v3555 = vadd.f32 0.0, %v3554
    %3556 = vmatmul.bf16.gmra.mxu0 %v2739
    %v3557 = vpop.f32.mrf.mxu0
    %v3558 = vadd.f32 0.0, %v3557
    %v3559 = vpop.f32.mrf.mxu0
    %v3560 = vadd.f32 0.0, %v3559
    %3561 = vmatmul.bf16.gmra.mxu0 %v2742
    %v3562 = vpop.f32.mrf.mxu0
    %v3563 = vadd.f32 0.0, %v3562
    %v3564 = vpop.f32.mrf.mxu0
    %v3565 = vadd.f32 0.0, %v3564
    %3566 = vmatmul.bf16.gmra.mxu0 %v2745
    %v3567 = vpop.f32.mrf.mxu0
    %v3568 = vadd.f32 0.0, %v3567
    %v3569 = vpop.f32.mrf.mxu0
    %v3570 = vadd.f32 0.0, %v3569
    %3571 = vmatmul.bf16.gmra.mxu0 %v2748
    %v3572 = vpop.f32.mrf.mxu0
    %v3573 = vadd.f32 0.0, %v3572
    %v3574 = vpop.f32.mrf.mxu0
    %v3575 = vadd.f32 0.0, %v3574
    %3576 = vdwg.mxu0
    %v3577 = vpack.c.bf16 %v3540, %v3538
    %v3578 = vpack.c.bf16 %v3545, %v3543
    %v3579 = vpack.c.bf16 %v3550, %v3548
    %v3580 = vpack.c.bf16 %v3555, %v3553
    %v3581 = vpack.c.bf16 %v3560, %v3558
    %v3582 = vpack.c.bf16 %v3565, %v3563
    %v3583 = vpack.c.bf16 %v3570, %v3568
    %v3584 = vpack.c.bf16 %v3575, %v3573
    %3585 = vmatpush.bf16.msra.mxu0 %v3584
    %3586 = vmatpush.bf16.msra.mxu0 %v3583
    %3587 = vmatpush.bf16.msra.mxu0 %v3582
    %3588 = vmatpush.bf16.msra.mxu0 %v3581
    %3589 = vmatpush.bf16.msra.mxu0 %v3580
    %3590 = vmatpush.bf16.msra.mxu0 %v3579
    %3591 = vmatpush.bf16.msra.mxu0 %v3578
    %3592 = vmatpush.bf16.msra.mxu0 %v3577
    %3593 = vmatmul.bf16.gmra.mxu0 %v2269
    %v3594 = vpop.f32.mrf.mxu0
    %v3595 = vadd.f32 0.0, %v3594
    %v3596 = vpop.f32.mrf.mxu0
    %v3597 = vadd.f32 0.0, %v3596
    %3598 = vmatmul.bf16.gmra.mxu0 %v2270
    %v3599 = vpop.f32.mrf.mxu0
    %v3600 = vadd.f32 0.0, %v3599
    %v3601 = vpop.f32.mrf.mxu0
    %v3602 = vadd.f32 0.0, %v3601
    %3603 = vmatmul.bf16.gmra.mxu0 %v2271
    %v3604 = vpop.f32.mrf.mxu0
    %v3605 = vadd.f32 0.0, %v3604
    %v3606 = vpop.f32.mrf.mxu0
    %v3607 = vadd.f32 0.0, %v3606
    %3608 = vmatmul.bf16.gmra.mxu0 %v2272
    %v3609 = vpop.f32.mrf.mxu0
    %v3610 = vadd.f32 0.0, %v3609
    %v3611 = vpop.f32.mrf.mxu0
    %v3612 = vadd.f32 0.0, %v3611
    %3613 = vmatmul.bf16.gmra.mxu0 %v2273
    %v3614 = vpop.f32.mrf.mxu0
    %v3615 = vadd.f32 0.0, %v3614
    %v3616 = vpop.f32.mrf.mxu0
    %v3617 = vadd.f32 0.0, %v3616
    %3618 = vmatmul.bf16.gmra.mxu0 %v2274
    %v3619 = vpop.f32.mrf.mxu0
    %v3620 = vadd.f32 0.0, %v3619
    %v3621 = vpop.f32.mrf.mxu0
    %v3622 = vadd.f32 0.0, %v3621
    %3623 = vmatmul.bf16.gmra.mxu0 %v2275
    %v3624 = vpop.f32.mrf.mxu0
    %v3625 = vadd.f32 0.0, %v3624
    %v3626 = vpop.f32.mrf.mxu0
    %v3627 = vadd.f32 0.0, %v3626
    %3628 = vmatmul.bf16.gmra.mxu0 %v2276
    %v3629 = vpop.f32.mrf.mxu0
    %v3630 = vadd.f32 0.0, %v3629
    %v3631 = vpop.f32.mrf.mxu0
    %v3632 = vadd.f32 0.0, %v3631
    %3633 = vdwg.mxu0
    %v3634 = vadd.f32 %v3499, %v3595
    %v3635 = vadd.f32 %v3500, %v3597
    %v3636 = vadd.f32 %v3501, %v3600
    %v3637 = vadd.f32 %v3502, %v3602
    %v3638 = vadd.f32 %v3503, %v3605
    %v3639 = vadd.f32 %v3504, %v3607
    %v3640 = vadd.f32 %v3505, %v3610
    %v3641 = vadd.f32 %v3506, %v3612
    %v3642 = vadd.f32 %v3507, %v3615
    %v3643 = vadd.f32 %v3508, %v3617
    %v3644 = vadd.f32 %v3509, %v3620
    %v3645 = vadd.f32 %v3510, %v3622
    %v3646 = vadd.f32 %v3511, %v3625
    %v3647 = vadd.f32 %v3512, %v3627
    %v3648 = vadd.f32 %v3513, %v3630
    %v3649 = vadd.f32 %v3514, %v3632
    %s3650 = scalar_lea.vmem %s21, 448
    %v3651 = vld [vmem:[%s3650] sm:$0xff]
    %v3652 = vld [vmem:[%s3650 + $0x8] sm:$0xff]
    %v3653 = vld [vmem:[%s3650 + $0x10] sm:$0xff]
    %v3654 = vld [vmem:[%s3650 + $0x18] sm:$0xff]
    %v3655 = vld [vmem:[%s3650 + $0x20] sm:$0xff]
    %v3656 = vld [vmem:[%s3650 + $0x28] sm:$0xff]
    %v3657 = vld [vmem:[%s3650 + $0x30] sm:$0xff]
    %v3658 = vld [vmem:[%s3650 + $0x38] sm:$0xff]
    %v3659 = vpack.c.bf16 %v3652, %v3651
    %v3660 = vpack.c.bf16 %v3654, %v3653
    %v3661 = vpack.c.bf16 %v3656, %v3655
    %v3662 = vpack.c.bf16 %v3658, %v3657
    %3663 = vmatpush.bf16.msra.mxu0 0
    %3664 = vmatpush.bf16.msra.mxu0 0
    %3665 = vmatpush.bf16.msra.mxu0 0
    %3666 = vmatpush.bf16.msra.mxu0 0
    %3667 = vmatpush.bf16.msra.mxu0 %v3662
    %3668 = vmatpush.bf16.msra.mxu0 %v3661
    %3669 = vmatpush.bf16.msra.mxu0 %v3660
    %3670 = vmatpush.bf16.msra.mxu0 %v3659
    %3671 = vmatmul.bf16.gmra.mxu0 %v2727
    %v3672 = vpop.f32.mrf.mxu0
    %v3673 = vadd.f32 0.0, %v3672
    %v3674 = vpop.f32.mrf.mxu0
    %v3675 = vadd.f32 0.0, %v3674
    %3676 = vmatmul.bf16.gmra.mxu0 %v2730
    %v3677 = vpop.f32.mrf.mxu0
    %v3678 = vadd.f32 0.0, %v3677
    %v3679 = vpop.f32.mrf.mxu0
    %v3680 = vadd.f32 0.0, %v3679
    %3681 = vmatmul.bf16.gmra.mxu0 %v2733
    %v3682 = vpop.f32.mrf.mxu0
    %v3683 = vadd.f32 0.0, %v3682
    %v3684 = vpop.f32.mrf.mxu0
    %v3685 = vadd.f32 0.0, %v3684
    %3686 = vmatmul.bf16.gmra.mxu0 %v2736
    %v3687 = vpop.f32.mrf.mxu0
    %v3688 = vadd.f32 0.0, %v3687
    %v3689 = vpop.f32.mrf.mxu0
    %v3690 = vadd.f32 0.0, %v3689
    %3691 = vmatmul.bf16.gmra.mxu0 %v2739
    %v3692 = vpop.f32.mrf.mxu0
    %v3693 = vadd.f32 0.0, %v3692
    %v3694 = vpop.f32.mrf.mxu0
    %v3695 = vadd.f32 0.0, %v3694
    %3696 = vmatmul.bf16.gmra.mxu0 %v2742
    %v3697 = vpop.f32.mrf.mxu0
    %v3698 = vadd.f32 0.0, %v3697
    %v3699 = vpop.f32.mrf.mxu0
    %v3700 = vadd.f32 0.0, %v3699
    %3701 = vmatmul.bf16.gmra.mxu0 %v2745
    %v3702 = vpop.f32.mrf.mxu0
    %v3703 = vadd.f32 0.0, %v3702
    %v3704 = vpop.f32.mrf.mxu0
    %v3705 = vadd.f32 0.0, %v3704
    %3706 = vmatmul.bf16.gmra.mxu0 %v2748
    %v3707 = vpop.f32.mrf.mxu0
    %v3708 = vadd.f32 0.0, %v3707
    %v3709 = vpop.f32.mrf.mxu0
    %v3710 = vadd.f32 0.0, %v3709
    %3711 = vdwg.mxu0
    %v3712 = vpack.c.bf16 %v3675, %v3673
    %v3713 = vpack.c.bf16 %v3680, %v3678
    %v3714 = vpack.c.bf16 %v3685, %v3683
    %v3715 = vpack.c.bf16 %v3690, %v3688
    %v3716 = vpack.c.bf16 %v3695, %v3693
    %v3717 = vpack.c.bf16 %v3700, %v3698
    %v3718 = vpack.c.bf16 %v3705, %v3703
    %v3719 = vpack.c.bf16 %v3710, %v3708
    %3720 = vmatpush.bf16.msra.mxu0 %v3719
    %3721 = vmatpush.bf16.msra.mxu0 %v3718
    %3722 = vmatpush.bf16.msra.mxu0 %v3717
    %3723 = vmatpush.bf16.msra.mxu0 %v3716
    %3724 = vmatpush.bf16.msra.mxu0 %v3715
    %3725 = vmatpush.bf16.msra.mxu0 %v3714
    %3726 = vmatpush.bf16.msra.mxu0 %v3713
    %3727 = vmatpush.bf16.msra.mxu0 %v3712
    %3728 = vmatmul.bf16.gmra.mxu0 %v2429
    %v3729 = vpop.f32.mrf.mxu0
    %v3730 = vadd.f32 0.0, %v3729
    %v3731 = vpop.f32.mrf.mxu0
    %v3732 = vadd.f32 0.0, %v3731
    %3733 = vmatmul.bf16.gmra.mxu0 %v2430
    %v3734 = vpop.f32.mrf.mxu0
    %v3735 = vadd.f32 0.0, %v3734
    %v3736 = vpop.f32.mrf.mxu0
    %v3737 = vadd.f32 0.0, %v3736
    %3738 = vmatmul.bf16.gmra.mxu0 %v2431
    %v3739 = vpop.f32.mrf.mxu0
    %v3740 = vadd.f32 0.0, %v3739
    %v3741 = vpop.f32.mrf.mxu0
    %v3742 = vadd.f32 0.0, %v3741
    %3743 = vmatmul.bf16.gmra.mxu0 %v2432
    %v3744 = vpop.f32.mrf.mxu0
    %v3745 = vadd.f32 0.0, %v3744
    %v3746 = vpop.f32.mrf.mxu0
    %v3747 = vadd.f32 0.0, %v3746
    %3748 = vmatmul.bf16.gmra.mxu0 %v2433
    %v3749 = vpop.f32.mrf.mxu0
    %v3750 = vadd.f32 0.0, %v3749
    %v3751 = vpop.f32.mrf.mxu0
    %v3752 = vadd.f32 0.0, %v3751
    %3753 = vmatmul.bf16.gmra.mxu0 %v2434
    %v3754 = vpop.f32.mrf.mxu0
    %v3755 = vadd.f32 0.0, %v3754
    %v3756 = vpop.f32.mrf.mxu0
    %v3757 = vadd.f32 0.0, %v3756
    %3758 = vmatmul.bf16.gmra.mxu0 %v2435
    %v3759 = vpop.f32.mrf.mxu0
    %v3760 = vadd.f32 0.0, %v3759
    %v3761 = vpop.f32.mrf.mxu0
    %v3762 = vadd.f32 0.0, %v3761
    %3763 = vmatmul.bf16.gmra.mxu0 %v2436
    %v3764 = vpop.f32.mrf.mxu0
    %v3765 = vadd.f32 0.0, %v3764
    %v3766 = vpop.f32.mrf.mxu0
    %v3767 = vadd.f32 0.0, %v3766
    %3768 = vdwg.mxu0
    %v3769 = vadd.f32 %v3634, %v3730
    %v3770 = vadd.f32 %v3635, %v3732
    %v3771 = vadd.f32 %v3636, %v3735
    %v3772 = vadd.f32 %v3637, %v3737
    %v3773 = vadd.f32 %v3638, %v3740
    %v3774 = vadd.f32 %v3639, %v3742
    %v3775 = vadd.f32 %v3640, %v3745
    %v3776 = vadd.f32 %v3641, %v3747
    %v3777 = vadd.f32 %v3642, %v3750
    %v3778 = vadd.f32 %v3643, %v3752
    %v3779 = vadd.f32 %v3644, %v3755
    %v3780 = vadd.f32 %v3645, %v3757
    %v3781 = vadd.f32 %v3646, %v3760
    %v3782 = vadd.f32 %v3647, %v3762
    %v3783 = vadd.f32 %v3648, %v3765
    %v3784 = vadd.f32 %v3649, %v3767
    %s3785 = scalar_lea.vmem %s21, 512
    %v3786 = vld [vmem:[%s3785] sm:$0xff]
    %v3787 = vld [vmem:[%s3785 + $0x8] sm:$0xff]
    %v3788 = vld [vmem:[%s3785 + $0x10] sm:$0xff]
    %v3789 = vld [vmem:[%s3785 + $0x18] sm:$0xff]
    %v3790 = vld [vmem:[%s3785 + $0x20] sm:$0xff]
    %v3791 = vld [vmem:[%s3785 + $0x28] sm:$0xff]
    %v3792 = vld [vmem:[%s3785 + $0x30] sm:$0xff]
    %v3793 = vld [vmem:[%s3785 + $0x38] sm:$0xff]
    %v3794 = vpack.c.bf16 %v3787, %v3786
    %v3795 = vpack.c.bf16 %v3789, %v3788
    %v3796 = vpack.c.bf16 %v3791, %v3790
    %v3797 = vpack.c.bf16 %v3793, %v3792
    %3798 = vmatpush.bf16.msra.mxu0 0
    %3799 = vmatpush.bf16.msra.mxu0 0
    %3800 = vmatpush.bf16.msra.mxu0 0
    %3801 = vmatpush.bf16.msra.mxu0 0
    %3802 = vmatpush.bf16.msra.mxu0 %v3797
    %3803 = vmatpush.bf16.msra.mxu0 %v3796
    %3804 = vmatpush.bf16.msra.mxu0 %v3795
    %3805 = vmatpush.bf16.msra.mxu0 %v3794
    %3806 = vmatmul.bf16.gmra.mxu0 %v2727
    %v3807 = vpop.f32.mrf.mxu0
    %v3808 = vadd.f32 0.0, %v3807
    %v3809 = vpop.f32.mrf.mxu0
    %v3810 = vadd.f32 0.0, %v3809
    %3811 = vmatmul.bf16.gmra.mxu0 %v2730
    %v3812 = vpop.f32.mrf.mxu0
    %v3813 = vadd.f32 0.0, %v3812
    %v3814 = vpop.f32.mrf.mxu0
    %v3815 = vadd.f32 0.0, %v3814
    %3816 = vmatmul.bf16.gmra.mxu0 %v2733
    %v3817 = vpop.f32.mrf.mxu0
    %v3818 = vadd.f32 0.0, %v3817
    %v3819 = vpop.f32.mrf.mxu0
    %v3820 = vadd.f32 0.0, %v3819
    %3821 = vmatmul.bf16.gmra.mxu0 %v2736
    %v3822 = vpop.f32.mrf.mxu0
    %v3823 = vadd.f32 0.0, %v3822
    %v3824 = vpop.f32.mrf.mxu0
    %v3825 = vadd.f32 0.0, %v3824
    %3826 = vmatmul.bf16.gmra.mxu0 %v2739
    %v3827 = vpop.f32.mrf.mxu0
    %v3828 = vadd.f32 0.0, %v3827
    %v3829 = vpop.f32.mrf.mxu0
    %v3830 = vadd.f32 0.0, %v3829
    %3831 = vmatmul.bf16.gmra.mxu0 %v2742
    %v3832 = vpop.f32.mrf.mxu0
    %v3833 = vadd.f32 0.0, %v3832
    %v3834 = vpop.f32.mrf.mxu0
    %v3835 = vadd.f32 0.0, %v3834
    %3836 = vmatmul.bf16.gmra.mxu0 %v2745
    %v3837 = vpop.f32.mrf.mxu0
    %v3838 = vadd.f32 0.0, %v3837
    %v3839 = vpop.f32.mrf.mxu0
    %v3840 = vadd.f32 0.0, %v3839
    %3841 = vmatmul.bf16.gmra.mxu0 %v2748
    %v3842 = vpop.f32.mrf.mxu0
    %v3843 = vadd.f32 0.0, %v3842
    %v3844 = vpop.f32.mrf.mxu0
    %v3845 = vadd.f32 0.0, %v3844
    %3846 = vdwg.mxu0
    %v3847 = vpack.c.bf16 %v3810, %v3808
    %v3848 = vpack.c.bf16 %v3815, %v3813
    %v3849 = vpack.c.bf16 %v3820, %v3818
    %v3850 = vpack.c.bf16 %v3825, %v3823
    %v3851 = vpack.c.bf16 %v3830, %v3828
    %v3852 = vpack.c.bf16 %v3835, %v3833
    %v3853 = vpack.c.bf16 %v3840, %v3838
    %v3854 = vpack.c.bf16 %v3845, %v3843
    %3855 = vmatpush.bf16.msra.mxu0 %v3854
    %3856 = vmatpush.bf16.msra.mxu0 %v3853
    %3857 = vmatpush.bf16.msra.mxu0 %v3852
    %3858 = vmatpush.bf16.msra.mxu0 %v3851
    %3859 = vmatpush.bf16.msra.mxu0 %v3850
    %3860 = vmatpush.bf16.msra.mxu0 %v3849
    %3861 = vmatpush.bf16.msra.mxu0 %v3848
    %3862 = vmatpush.bf16.msra.mxu0 %v3847
    %3863 = vmatmul.bf16.gmra.mxu0 %v2589
    %v3864 = vpop.f32.mrf.mxu0
    %v3865 = vadd.f32 0.0, %v3864
    %v3866 = vpop.f32.mrf.mxu0
    %v3867 = vadd.f32 0.0, %v3866
    %3868 = vmatmul.bf16.gmra.mxu0 %v2590
    %v3869 = vpop.f32.mrf.mxu0
    %v3870 = vadd.f32 0.0, %v3869
    %v3871 = vpop.f32.mrf.mxu0
    %v3872 = vadd.f32 0.0, %v3871
    %3873 = vmatmul.bf16.gmra.mxu0 %v2591
    %v3874 = vpop.f32.mrf.mxu0
    %v3875 = vadd.f32 0.0, %v3874
    %v3876 = vpop.f32.mrf.mxu0
    %v3877 = vadd.f32 0.0, %v3876
    %3878 = vmatmul.bf16.gmra.mxu0 %v2592
    %v3879 = vpop.f32.mrf.mxu0
    %v3880 = vadd.f32 0.0, %v3879
    %v3881 = vpop.f32.mrf.mxu0
    %v3882 = vadd.f32 0.0, %v3881
    %3883 = vmatmul.bf16.gmra.mxu0 %v2593
    %v3884 = vpop.f32.mrf.mxu0
    %v3885 = vadd.f32 0.0, %v3884
    %v3886 = vpop.f32.mrf.mxu0
    %v3887 = vadd.f32 0.0, %v3886
    %3888 = vmatmul.bf16.gmra.mxu0 %v2594
    %v3889 = vpop.f32.mrf.mxu0
    %v3890 = vadd.f32 0.0, %v3889
    %v3891 = vpop.f32.mrf.mxu0
    %v3892 = vadd.f32 0.0, %v3891
    %3893 = vmatmul.bf16.gmra.mxu0 %v2595
    %v3894 = vpop.f32.mrf.mxu0
    %v3895 = vadd.f32 0.0, %v3894
    %v3896 = vpop.f32.mrf.mxu0
    %v3897 = vadd.f32 0.0, %v3896
    %3898 = vmatmul.bf16.gmra.mxu0 %v2596
    %v3899 = vpop.f32.mrf.mxu0
    %v3900 = vadd.f32 0.0, %v3899
    %v3901 = vpop.f32.mrf.mxu0
    %v3902 = vadd.f32 0.0, %v3901
    %3903 = vdwg.mxu0
    %v3904 = vadd.f32 %v3769, %v3865
    %v3905 = vadd.f32 %v3770, %v3867
    %v3906 = vadd.f32 %v3771, %v3870
    %v3907 = vadd.f32 %v3772, %v3872
    %v3908 = vadd.f32 %v3773, %v3875
    %v3909 = vadd.f32 %v3774, %v3877
    %v3910 = vadd.f32 %v3775, %v3880
    %v3911 = vadd.f32 %v3776, %v3882
    %v3912 = vadd.f32 %v3777, %v3885
    %v3913 = vadd.f32 %v3778, %v3887
    %v3914 = vadd.f32 %v3779, %v3890
    %v3915 = vadd.f32 %v3780, %v3892
    %v3916 = vadd.f32 %v3781, %v3895
    %v3917 = vadd.f32 %v3782, %v3897
    %v3918 = vadd.f32 %v3783, %v3900
    %v3919 = vadd.f32 %v3784, %v3902
    %v3920 = vld [vmem:[%s23] sm:$0x1]
    %v3922 = vperm.slane %v3920, 0
    %v3924 = vadd.f32 %v3904, %v3922
    %v3925 = vadd.f32 %v3905, %v3922
    %v3926 = vadd.f32 %v3906, %v3922
    %v3927 = vadd.f32 %v3907, %v3922
    %v3928 = vadd.f32 %v3908, %v3922
    %v3929 = vadd.f32 %v3909, %v3922
    %v3930 = vadd.f32 %v3910, %v3922
    %v3931 = vadd.f32 %v3911, %v3922
    %v3932 = vadd.f32 %v3912, %v3922
    %v3933 = vadd.f32 %v3913, %v3922
    %v3934 = vadd.f32 %v3914, %v3922
    %v3935 = vadd.f32 %v3915, %v3922
    %v3936 = vadd.f32 %v3916, %v3922
    %v3937 = vadd.f32 %v3917, %v3922
    %v3938 = vadd.f32 %v3918, %v3922
    %v3939 = vadd.f32 %v3919, %v3922
    %v3940 = vld [vmem:[%s25] sm:$0xff]
    %v3941 = vpack.c.bf16 %v3940, %v3940
    %v3942 = vpack.c.bf16 %v3925, %v3924
    %v3943 = vpack.c.bf16 %v3927, %v3926
    %v3944 = vpack.c.bf16 %v3929, %v3928
    %v3945 = vpack.c.bf16 %v3931, %v3930
    %v3946 = vpack.c.bf16 %v3933, %v3932
    %v3947 = vpack.c.bf16 %v3935, %v3934
    %v3948 = vpack.c.bf16 %v3937, %v3936
    %v3949 = vpack.c.bf16 %v3939, %v3938
    %3950 = vmatpush.bf16.msra.mxu0 %v3949
    %3951 = vmatpush.bf16.msra.mxu0 %v3948
    %3952 = vmatpush.bf16.msra.mxu0 %v3947
    %3953 = vmatpush.bf16.msra.mxu0 %v3946
    %3954 = vmatpush.bf16.msra.mxu0 %v3945
    %3955 = vmatpush.bf16.msra.mxu0 %v3944
    %3956 = vmatpush.bf16.msra.mxu0 %v3943
    %3957 = vmatpush.bf16.msra.mxu0 %v3942
    %3958 = vmatmul.bf16.gmra.mxu0 %v3941
    %v3959 = vpop.f32.mrf.mxu0
    %v3960 = vadd.f32 0.0, %v3959
    %v3961 = vpop.f32.mrf.mxu0
    %3962 = vdwg.mxu0
    %v3963 = vld [vmem:[%s27] sm:$0xff]
    %v3964 = vld [vmem:[%s27 + $0x8] sm:$0xff]
    %v3965 = vpack.c.bf16 %v3964, %v3963
    %v3966 = vpack.c.bf16 %v3960, %v3960
    %vm3967 = vcmask 64512
    %v3969 = vsel %vm3967, %v3965, 0
    %vm3971 = vcmask 1043456
    %v3973 = vsel %vm3971, %v3966, 0
    %3975 = vmatpush.bf16.msra.mxu0 0
    %3976 = vmatpush.bf16.msra.mxu0 0
    %3977 = vmatpush.bf16.msra.mxu0 0
    %3978 = vmatpush.bf16.msra.mxu0 0
    %3979 = vmatpush.bf16.msra.mxu0 0
    %3980 = vmatpush.bf16.msra.mxu0 0
    %3981 = vmatpush.bf16.msra.mxu0 0
    %3982 = vmatpush.bf16.msra.mxu0 %v3973
    %3983 = vmatmul.bf16.gmra.mxu0 %v3969
    %v3984 = vpop.f32.mrf.mxu0
    %v3985 = vadd.f32 0.0, %v3984
    %v3986 = vpop.f32.mrf.mxu0
    %v3987 = vadd.f32 0.0, %v3986
    %3988 = vdwg.mxu0
    %v3989 = vld [vmem:[%s31] sm:$0xff]
    %v3990 = vld [vmem:[%s31 + $0x8] sm:$0xff]
    %v3991 = vld [vmem:[%s31 + $0x10] sm:$0xff]
    %v3992 = vld [vmem:[%s31 + $0x18] sm:$0xff]
    %v3993 = vld [vmem:[%s31 + $0x20] sm:$0xff]
    %v3994 = vld [vmem:[%s31 + $0x28] sm:$0xff]
    %v3995 = vld [vmem:[%s31 + $0x30] sm:$0xff]
    %v3996 = vld [vmem:[%s31 + $0x38] sm:$0xff]
    %v3997 = vpack.c.bf16 %v3987, %v3985
    %v3998 = vpack.c.bf16 %v3990, %v3989
    %v3999 = vpack.c.bf16 %v3992, %v3991
    %v4000 = vpack.c.bf16 %v3994, %v3993
    %v4001 = vpack.c.bf16 %v3996, %v3995
    %v4002 = vld [vmem:[%s33] sm:$0x1]
    %v4004 = vperm.slane %v4002, 0
    %v4007 = vsel %vm491, %v3997, 0
    %4009 = vmatpush.bf16.msra.mxu0 0
    %4010 = vmatpush.bf16.msra.mxu0 0
    %4011 = vmatpush.bf16.msra.mxu0 0
    %4012 = vmatpush.bf16.msra.mxu0 0
    %4013 = vmatpush.bf16.msra.mxu0 %v4001
    %4014 = vmatpush.bf16.msra.mxu0 %v4000
    %4015 = vmatpush.bf16.msra.mxu0 %v3999
    %4016 = vmatpush.bf16.msra.mxu0 %v3998
    %4017 = vmatmul.bf16.gmra.mxu0 %v4007
    %v4018 = vpop.f32.mrf.mxu0
    %v4019 = vadd.f32 %v4004, %v4018
    %v4020 = vpop.f32.mrf.mxu0
    %v4021 = vadd.f32 %v4004, %v4020
    %4022 = vdwg.mxu0
    %v4023 = vmax.f32 %v4019, 0.0
    %v4024 = vmax.f32 %v4021, 0.0
    %v4025 = vadd.f32 %v1035, %v4023
    %v4026 = vadd.f32 %v1037, %v4024
    %v4027 = vld [vmem:[%s29] sm:$0xff]
    %v4028 = vpack.c.bf16 %v4027, %v4027
    %v4029 = vpack.c.bf16 %v4026, %v4025
    %vm4030 = vcmask 130048
    %v4032 = vsel %vm4030, %v4028, 0
    %4034 = vmatpush.bf16.msra.mxu0 0
    %4035 = vmatpush.bf16.msra.mxu0 0
    %4036 = vmatpush.bf16.msra.mxu0 0
    %4037 = vmatpush.bf16.msra.mxu0 0
    %4038 = vmatpush.bf16.msra.mxu0 0
    %4039 = vmatpush.bf16.msra.mxu0 0
    %4040 = vmatpush.bf16.msra.mxu0 0
    %4041 = vmatpush.bf16.msra.mxu0 %v4029
    %4042 = vmatmul.bf16.gmra.mxu0 %v4032
    %v4043 = vpop.f32.mrf.mxu0
    %v4044 = vadd.f32 0.0, %v4043
    %v4045 = vpop.f32.mrf.mxu0
    %4046 = vdwg.mxu0
    %v4047 = vld [vmem:[%s35] sm:$0xff]
    %v4048 = vld [vmem:[%s35 + $0x8] sm:$0xff]
    %v4049 = vld [vmem:[%s35 + $0x10] sm:$0xff]
    %v4050 = vld [vmem:[%s35 + $0x18] sm:$0xff]
    %v4051 = vld [vmem:[%s35 + $0x20] sm:$0xff]
    %v4052 = vld [vmem:[%s35 + $0x28] sm:$0xff]
    %v4053 = vld [vmem:[%s35 + $0x30] sm:$0xff]
    %v4054 = vld [vmem:[%s35 + $0x38] sm:$0xff]
    %v4055 = vld [vmem:[%s35 + $0x40] sm:$0xff]
    %v4056 = vld [vmem:[%s35 + $0x48] sm:$0xff]
    %v4057 = vld [vmem:[%s35 + $0x50] sm:$0xff]
    %v4058 = vld [vmem:[%s35 + $0x58] sm:$0xff]
    %v4059 = vld [vmem:[%s35 + $0x60] sm:$0xff]
    %v4060 = vld [vmem:[%s35 + $0x68] sm:$0xff]
    %v4061 = vld [vmem:[%s35 + $0x70] sm:$0xff]
    %v4062 = vld [vmem:[%s35 + $0x78] sm:$0xff]
    %v4063 = vpack.c.bf16 %v4044, %v4044
    %v4064 = vpack.c.bf16 %v4048, %v4047
    %v4065 = vpack.c.bf16 %v4050, %v4049
    %v4066 = vpack.c.bf16 %v4052, %v4051
    %v4067 = vpack.c.bf16 %v4054, %v4053
    %v4068 = vpack.c.bf16 %v4056, %v4055
    %v4069 = vpack.c.bf16 %v4058, %v4057
    %v4070 = vpack.c.bf16 %v4060, %v4059
    %v4071 = vpack.c.bf16 %v4062, %v4061
    %v4072 = vld [vmem:[%s37] sm:$0x1]
    %v4074 = vperm.slane %v4072, 0
    %4076 = vmatpush.bf16.msra.mxu0 %v4071
    %4077 = vmatpush.bf16.msra.mxu0 %v4070
    %4078 = vmatpush.bf16.msra.mxu0 %v4069
    %4079 = vmatpush.bf16.msra.mxu0 %v4068
    %4080 = vmatpush.bf16.msra.mxu0 %v4067
    %4081 = vmatpush.bf16.msra.mxu0 %v4066
    %4082 = vmatpush.bf16.msra.mxu0 %v4065
    %4083 = vmatpush.bf16.msra.mxu0 %v4064
    %4084 = vmatmul.bf16.gmra.mxu0 %v4063
    %v4085 = vpop.f32.mrf.mxu0
    %v4086 = vadd.f32 %v4074, %v4085
    %v4087 = vpop.f32.mrf.mxu0
    %4088 = vdwg.mxu0
    %v4089 = vmax.f32 %v4086, 0.0
    %v4090 = vadd.f32 %v3960, %v4089
    %v4091 = vld [vmem:[%s39] sm:$0xff]
    %v4092 = vld [vmem:[%s39 + $0x8] sm:$0xff]
    %v4093 = vpack.c.bf16 %v4092, %v4091
    %v4095 = vsel %vm4030, %v4093, 0
    %4097 = vmatpush.bf16.msra.mxu0 0
    %4098 = vmatpush.bf16.msra.mxu0 0
    %4099 = vmatpush.bf16.msra.mxu0 0
    %4100 = vmatpush.bf16.msra.mxu0 0
    %4101 = vmatpush.bf16.msra.mxu0 0
    %4102 = vmatpush.bf16.msra.mxu0 0
    %4103 = vmatpush.bf16.msra.mxu0 0
    %4104 = vmatpush.bf16.msra.mxu0 %v4029
    %4105 = vmatmul.bf16.gmra.mxu0 %v4095
    %v4106 = vpop.f32.mrf.mxu0
    %v4107 = vadd.f32 0.0, %v4106
    %v4108 = vpop.f32.mrf.mxu0
    %v4109 = vadd.f32 0.0, %v4108
    %4110 = vdwg.mxu0
    %v4111 = vld [vmem:[%s45] sm:$0xff]
    %v4112 = vld [vmem:[%s45 + $0x8] sm:$0xff]
    %v4113 = vld [vmem:[%s45 + $0x10] sm:$0xff]
    %v4114 = vld [vmem:[%s45 + $0x18] sm:$0xff]
    %v4115 = vld [vmem:[%s45 + $0x20] sm:$0xff]
    %v4116 = vld [vmem:[%s45 + $0x28] sm:$0xff]
    %v4117 = vld [vmem:[%s45 + $0x30] sm:$0xff]
    %v4118 = vld [vmem:[%s45 + $0x38] sm:$0xff]
    %v4119 = vld [vmem:[%s45 + $0x40] sm:$0xff]
    %v4120 = vld [vmem:[%s45 + $0x48] sm:$0xff]
    %v4121 = vld [vmem:[%s45 + $0x50] sm:$0xff]
    %v4122 = vld [vmem:[%s45 + $0x58] sm:$0xff]
    %v4123 = vld [vmem:[%s45 + $0x60] sm:$0xff]
    %v4124 = vld [vmem:[%s45 + $0x68] sm:$0xff]
    %v4125 = vld [vmem:[%s45 + $0x70] sm:$0xff]
    %v4126 = vld [vmem:[%s45 + $0x78] sm:$0xff]
    %v4127 = vpack.c.bf16 %v4109, %v4107
    %v4128 = vpack.c.bf16 %v4112, %v4111
    %v4129 = vpack.c.bf16 %v4114, %v4113
    %v4130 = vpack.c.bf16 %v4116, %v4115
    %v4131 = vpack.c.bf16 %v4118, %v4117
    %v4132 = vpack.c.bf16 %v4120, %v4119
    %v4133 = vpack.c.bf16 %v4122, %v4121
    %v4134 = vpack.c.bf16 %v4124, %v4123
    %v4135 = vpack.c.bf16 %v4126, %v4125
    %v4136 = vld [vmem:[%s41] sm:$0xff]
    %v4137 = vld [vmem:[%s41 + $0x8] sm:$0xff]
    %v4138 = vpack.c.bf16 %v4137, %v4136
    %v4140 = vsel %vm4030, %v4138, 0
    %4142 = vmatpush.bf16.msra.mxu0 0
    %4143 = vmatpush.bf16.msra.mxu0 0
    %4144 = vmatpush.bf16.msra.mxu0 0
    %4145 = vmatpush.bf16.msra.mxu0 0
    %4146 = vmatpush.bf16.msra.mxu0 0
    %4147 = vmatpush.bf16.msra.mxu0 0
    %4148 = vmatpush.bf16.msra.mxu0 0
    %4149 = vmatpush.bf16.msra.mxu0 %v4029
    %4150 = vmatmul.bf16.gmra.mxu0 %v4140
    %v4151 = vpop.f32.mrf.mxu0
    %v4152 = vadd.f32 0.0, %v4151
    %v4153 = vpop.f32.mrf.mxu0
    %v4154 = vadd.f32 0.0, %v4153
    %4155 = vdwg.mxu0
    %v4156 = vld [vmem:[%s47] sm:$0xff]
    %v4157 = vld [vmem:[%s47 + $0x8] sm:$0xff]
    %v4158 = vld [vmem:[%s47 + $0x10] sm:$0xff]
    %v4159 = vld [vmem:[%s47 + $0x18] sm:$0xff]
    %v4160 = vld [vmem:[%s47 + $0x20] sm:$0xff]
    %v4161 = vld [vmem:[%s47 + $0x28] sm:$0xff]
    %v4162 = vld [vmem:[%s47 + $0x30] sm:$0xff]
    %v4163 = vld [vmem:[%s47 + $0x38] sm:$0xff]
    %v4164 = vld [vmem:[%s47 + $0x40] sm:$0xff]
    %v4165 = vld [vmem:[%s47 + $0x48] sm:$0xff]
    %v4166 = vld [vmem:[%s47 + $0x50] sm:$0xff]
    %v4167 = vld [vmem:[%s47 + $0x58] sm:$0xff]
    %v4168 = vld [vmem:[%s47 + $0x60] sm:$0xff]
    %v4169 = vld [vmem:[%s47 + $0x68] sm:$0xff]
    %v4170 = vld [vmem:[%s47 + $0x70] sm:$0xff]
    %v4171 = vld [vmem:[%s47 + $0x78] sm:$0xff]
    %v4172 = vpack.c.bf16 %v4154, %v4152
    %v4173 = vpack.c.bf16 %v4157, %v4156
    %v4174 = vpack.c.bf16 %v4159, %v4158
    %v4175 = vpack.c.bf16 %v4161, %v4160
    %v4176 = vpack.c.bf16 %v4163, %v4162
    %v4177 = vpack.c.bf16 %v4165, %v4164
    %v4178 = vpack.c.bf16 %v4167, %v4166
    %v4179 = vpack.c.bf16 %v4169, %v4168
    %v4180 = vpack.c.bf16 %v4171, %v4170
    %4181 = vmatpush.bf16.msra.mxu0 %v4180
    %4182 = vmatpush.bf16.msra.mxu0 %v4179
    %4183 = vmatpush.bf16.msra.mxu0 %v4178
    %4184 = vmatpush.bf16.msra.mxu0 %v4177
    %4185 = vmatpush.bf16.msra.mxu0 %v4176
    %4186 = vmatpush.bf16.msra.mxu0 %v4175
    %4187 = vmatpush.bf16.msra.mxu0 %v4174
    %4188 = vmatpush.bf16.msra.mxu0 %v4173
    %4189 = vmatmul.bf16.gmra.mxu0 %v4172
    %v4190 = vpop.f32.mrf.mxu0
    %v4191 = vadd.f32 0.0, %v4190
    %v4192 = vpop.f32.mrf.mxu0
    %v4193 = vadd.f32 0.0, %v4192
    %4194 = vdwg.mxu0
    %4195 = vmatpush.bf16.msra.mxu0 %v4135
    %4196 = vmatpush.bf16.msra.mxu0 %v4134
    %4197 = vmatpush.bf16.msra.mxu0 %v4133
    %4198 = vmatpush.bf16.msra.mxu0 %v4132
    %4199 = vmatpush.bf16.msra.mxu0 %v4131
    %4200 = vmatpush.bf16.msra.mxu0 %v4130
    %4201 = vmatpush.bf16.msra.mxu0 %v4129
    %4202 = vmatpush.bf16.msra.mxu0 %v4128
    %4203 = vmatmul.bf16.gmra.mxu0 %v4127
    %v4204 = vpop.f32.mrf.mxu0
    %v4205 = vadd.f32 %v4191, %v4204
    %v4206 = vpop.f32.mrf.mxu0
    %v4207 = vadd.f32 %v4193, %v4206
    %4208 = vdwg.mxu0
    %v4209 = vld [vmem:[%s43] sm:$0xff]
    %v4210 = vld [vmem:[%s43 + $0x8] sm:$0xff]
    %v4211 = vpack.c.bf16 %v4210, %v4209
    %v4212 = vpack.c.bf16 %v4090, %v4090
    %v4214 = vsel %vm3967, %v4211, 0
    %v4217 = vsel %vm3971, %v4212, 0
    %4219 = vmatpush.bf16.msra.mxu0 0
    %4220 = vmatpush.bf16.msra.mxu0 0
    %4221 = vmatpush.bf16.msra.mxu0 0
    %4222 = vmatpush.bf16.msra.mxu0 0
    %4223 = vmatpush.bf16.msra.mxu0 0
    %4224 = vmatpush.bf16.msra.mxu0 0
    %4225 = vmatpush.bf16.msra.mxu0 0
    %4226 = vmatpush.bf16.msra.mxu0 %v4217
    %4227 = vmatmul.bf16.gmra.mxu0 %v4214
    %v4228 = vpop.f32.mrf.mxu0
    %v4229 = vadd.f32 0.0, %v4228
    %v4230 = vpop.f32.mrf.mxu0
    %v4231 = vadd.f32 0.0, %v4230
    %4232 = vdwg.mxu0
    %v4233 = vld [vmem:[%s49] sm:$0xff]
    %v4234 = vld [vmem:[%s49 + $0x8] sm:$0xff]
    %v4235 = vld [vmem:[%s49 + $0x10] sm:$0xff]
    %v4236 = vld [vmem:[%s49 + $0x18] sm:$0xff]
    %v4237 = vld [vmem:[%s49 + $0x20] sm:$0xff]
    %v4238 = vld [vmem:[%s49 + $0x28] sm:$0xff]
    %v4239 = vld [vmem:[%s49 + $0x30] sm:$0xff]
    %v4240 = vld [vmem:[%s49 + $0x38] sm:$0xff]
    %v4241 = vpack.c.bf16 %v4231, %v4229
    %v4242 = vpack.c.bf16 %v4234, %v4233
    %v4243 = vpack.c.bf16 %v4236, %v4235
    %v4244 = vpack.c.bf16 %v4238, %v4237
    %v4245 = vpack.c.bf16 %v4240, %v4239
    %v4247 = vsel %vm491, %v4241, 0
    %4249 = vmatpush.bf16.msra.mxu0 0
    %4250 = vmatpush.bf16.msra.mxu0 0
    %4251 = vmatpush.bf16.msra.mxu0 0
    %4252 = vmatpush.bf16.msra.mxu0 0
    %4253 = vmatpush.bf16.msra.mxu0 %v4245
    %4254 = vmatpush.bf16.msra.mxu0 %v4244
    %4255 = vmatpush.bf16.msra.mxu0 %v4243
    %4256 = vmatpush.bf16.msra.mxu0 %v4242
    %4257 = vmatmul.bf16.gmra.mxu0 %v4247
    %v4258 = vpop.f32.mrf.mxu0
    %v4259 = vadd.f32 0.0, %v4258
    %v4260 = vpop.f32.mrf.mxu0
    %v4261 = vadd.f32 0.0, %v4260
    %4262 = vdwg.mxu0
    %v4263 = vadd.f32 %v4205, %v4259
    %v4264 = vadd.f32 %v4207, %v4261
    %v4265 = vld [vmem:[%s51] sm:$0x1]
    %v4267 = vperm.slane %v4265, 0
    %v4269 = vadd.f32 %v4263, %v4267
    %v4270 = vadd.f32 %v4264, %v4267
    %v4271 = vmax.f32 %v4025, 0.0
    %v4272 = vmax.f32 %v4026, 0.0
    %v4273 = vld [vmem:[%s53] sm:$0xff]
    %v4274 = vld [vmem:[%s53 + $0x8] sm:$0xff]
    %v4275 = vld [vmem:[%s53 + $0x10] sm:$0xff]
    %v4276 = vld [vmem:[%s53 + $0x18] sm:$0xff]
    %v4277 = vld [vmem:[%s53 + $0x20] sm:$0xff]
    %v4278 = vld [vmem:[%s53 + $0x28] sm:$0xff]
    %v4279 = vld [vmem:[%s53 + $0x30] sm:$0xff]
    %v4280 = vld [vmem:[%s53 + $0x38] sm:$0xff]
    %v4281 = vld [vmem:[%s53 + $0x40] sm:$0xff]
    %v4282 = vld [vmem:[%s53 + $0x48] sm:$0xff]
    %v4283 = vld [vmem:[%s53 + $0x50] sm:$0xff]
    %v4284 = vld [vmem:[%s53 + $0x58] sm:$0xff]
    %v4285 = vld [vmem:[%s53 + $0x60] sm:$0xff]
    %v4286 = vld [vmem:[%s53 + $0x68] sm:$0xff]
    %v4287 = vld [vmem:[%s53 + $0x70] sm:$0xff]
    %v4288 = vld [vmem:[%s53 + $0x78] sm:$0xff]
    %v4289 = vpack.c.bf16 %v4272, %v4271
    %v4290 = vpack.c.bf16 %v4274, %v4273
    %v4291 = vpack.c.bf16 %v4276, %v4275
    %v4292 = vpack.c.bf16 %v4278, %v4277
    %v4293 = vpack.c.bf16 %v4280, %v4279
    %v4294 = vpack.c.bf16 %v4282, %v4281
    %v4295 = vpack.c.bf16 %v4284, %v4283
    %v4296 = vpack.c.bf16 %v4286, %v4285
    %v4297 = vpack.c.bf16 %v4288, %v4287
    %v4298 = vld [vmem:[%s55] sm:$0x1]
    %v4300 = vperm.slane %v4298, 0
    %4302 = vmatpush.bf16.msra.mxu0 %v4297
    %4303 = vmatpush.bf16.msra.mxu0 %v4296
    %4304 = vmatpush.bf16.msra.mxu0 %v4295
    %4305 = vmatpush.bf16.msra.mxu0 %v4294
    %4306 = vmatpush.bf16.msra.mxu0 %v4293
    %4307 = vmatpush.bf16.msra.mxu0 %v4292
    %4308 = vmatpush.bf16.msra.mxu0 %v4291
    %4309 = vmatpush.bf16.msra.mxu0 %v4290
    %4310 = vmatmul.bf16.gmra.mxu0 %v4289
    %v4311 = vpop.f32.mrf.mxu0
    %v4312 = vadd.f32 %v4300, %v4311
    %v4313 = vpop.f32.mrf.mxu0
    %v4314 = vadd.f32 %v4300, %v4313
    %4315 = vdwg.mxu0
    %4316 = vmax.xlane.f32.xlu0 %v4312
    %v4317 = vpop.xlane.xlu0 %4316
    %4318 = vmax.xlane.f32.xlu0 %v4314
    %v4319 = vpop.xlane.xlu0 %4318
    %v4320 = vsub.f32 %v4312, %v4317
    %v4321 = vsub.f32 %v4314, %v4319
    %v4322 = vmul.f32 %v4320, 1.442695
    %v4323 = vpow.pop %v4322
    %v4324 = vmul.f32 %v4321, 1.442695
    %v4325 = vpow.pop %v4324
    %4326 = vadd.xlane.f32.xlu0 %v4323
    %v4327 = vpop.xlane.xlu0 %4326
    %4328 = vadd.xlane.f32.xlu0 %v4325
    %v4329 = vpop.xlane.xlu0 %4328
    %v4330 = vrcp.pop %v4327
    %v4331 = vrcp.pop %v4329
    %v4332 = vmul.f32 %v4323, %v4330
    %v4333 = vmul.f32 %v4325, %v4331
    %4334 = vst [vmem:[#allocation2] sm:$0xff] %v4332
    %4335 = vst [vmem:[#allocation2 + $0x8] sm:$0xff] %v4333
    %v4336 = vmax.f32 %v4269, 0.0
    %v4337 = vmax.f32 %v4270, 0.0
    %v4338 = vld [vmem:[%s61] sm:$0xff]
    %v4339 = vld [vmem:[%s61 + $0x8] sm:$0xff]
    %v4340 = vld [vmem:[%s61 + $0x10] sm:$0xff]
    %v4341 = vld [vmem:[%s61 + $0x18] sm:$0xff]
    %v4342 = vld [vmem:[%s61 + $0x20] sm:$0xff]
    %v4343 = vld [vmem:[%s61 + $0x28] sm:$0xff]
    %v4344 = vld [vmem:[%s61 + $0x30] sm:$0xff]
    %v4345 = vld [vmem:[%s61 + $0x38] sm:$0xff]
    %v4346 = vld [vmem:[%s61 + $0x40] sm:$0xff]
    %v4347 = vld [vmem:[%s61 + $0x48] sm:$0xff]
    %v4348 = vld [vmem:[%s61 + $0x50] sm:$0xff]
    %v4349 = vld [vmem:[%s61 + $0x58] sm:$0xff]
    %v4350 = vld [vmem:[%s61 + $0x60] sm:$0xff]
    %v4351 = vld [vmem:[%s61 + $0x68] sm:$0xff]
    %v4352 = vld [vmem:[%s61 + $0x70] sm:$0xff]
    %v4353 = vld [vmem:[%s61 + $0x78] sm:$0xff]
    %v4354 = vpack.c.bf16 %v4337, %v4336
    %v4355 = vpack.c.bf16 %v4339, %v4338
    %v4356 = vpack.c.bf16 %v4341, %v4340
    %v4357 = vpack.c.bf16 %v4343, %v4342
    %v4358 = vpack.c.bf16 %v4345, %v4344
    %v4359 = vpack.c.bf16 %v4347, %v4346
    %v4360 = vpack.c.bf16 %v4349, %v4348
    %v4361 = vpack.c.bf16 %v4351, %v4350
    %v4362 = vpack.c.bf16 %v4353, %v4352
    %v4363 = vld [vmem:[%s63] sm:$0x1]
    %v4365 = vperm.slane %v4363, 0
    %4367 = vmatpush.bf16.msra.mxu0 %v4362
    %4368 = vmatpush.bf16.msra.mxu0 %v4361
    %4369 = vmatpush.bf16.msra.mxu0 %v4360
    %4370 = vmatpush.bf16.msra.mxu0 %v4359
    %4371 = vmatpush.bf16.msra.mxu0 %v4358
    %4372 = vmatpush.bf16.msra.mxu0 %v4357
    %4373 = vmatpush.bf16.msra.mxu0 %v4356
    %4374 = vmatpush.bf16.msra.mxu0 %v4355
    %4375 = vmatmul.bf16.gmra.mxu0 %v4354
    %v4376 = vpop.f32.mrf.mxu0
    %v4377 = vadd.f32 %v4365, %v4376
    %v4378 = vpop.f32.mrf.mxu0
    %v4379 = vadd.f32 %v4365, %v4378
    %4380 = vdwg.mxu0
    %4381 = vmax.xlane.f32.xlu0 %v4377
    %v4382 = vpop.xlane.xlu0 %4381
    %4383 = vmax.xlane.f32.xlu0 %v4379
    %v4384 = vpop.xlane.xlu0 %4383
    %v4385 = vsub.f32 %v4377, %v4382
    %v4386 = vsub.f32 %v4379, %v4384
    %v4387 = vmul.f32 %v4385, 1.442695
    %v4388 = vpow.pop %v4387
    %v4389 = vmul.f32 %v4386, 1.442695
    %v4390 = vpow.pop %v4389
    %4391 = vadd.xlane.f32.xlu0 %v4388
    %v4392 = vpop.xlane.xlu0 %4391
    %4393 = vadd.xlane.f32.xlu0 %v4390
    %v4394 = vpop.xlane.xlu0 %4393
    %v4395 = vrcp.pop %v4392
    %v4396 = vrcp.pop %v4394
    %v4397 = vmul.f32 %v4388, %v4395
    %v4398 = vmul.f32 %v4390, %v4396
    %4399 = vst [vmem:[%s69] sm:$0xff] %v4397
    %4400 = vst [vmem:[%s69 + $0x8] sm:$0xff] %v4398
    // Predicated region
    $region130: #{factorizable_network_forward_eval.1} parent=1 // pred_check
      _
    $region131: #{factorizable_network_forward_eval.1} parent=1 // pred_check_branch
      %4402 = sbr.rel (0) target = $region133
    $region132: #{factorizable_network_forward_eval.1} parent=1 // pred_region
      %4404 = vsyncadd [#allocation3], 0
      %s4405 = sshll.u32 [#allocation2], 4
      %s4406 = int_to_ptr.vmem [resolvable:$true] %s4405
      %s4407 = sshll.u32 %s65, 4
      %s4408 = int_to_ptr.hbm [resolvable:$true] %s4407
      %4413 = dma.vmem_to_hbm [thread:$0]  %s4406, 256, %s4408, [#allocation3], 128, 128, 8
    $region133: #{factorizable_network_forward_eval.1} parent=1 // pred_fallthru
      _
    // Predicated region
    $region134: #{factorizable_network_forward_eval.1} parent=1 // pred_check
      _
    $region135: #{factorizable_network_forward_eval.1} parent=1 // pred_check_branch
      %4415 = sbr.rel (0) target = $region137
    $region136: #{factorizable_network_forward_eval.1} parent=1 // pred_region
      %4417 = vsyncadd [#allocation5], 0
      %s4418 = sshll.u32 [#allocation4], 4
      %s4419 = int_to_ptr.vmem [resolvable:$true] %s4418
      %s4420 = sshll.u32 %s67, 4
      %s4421 = int_to_ptr.hbm [resolvable:$true] %s4420
      %4426 = dma.vmem_to_hbm [thread:$0]  %s4419, 256, %s4421, [#allocation5], 128, 128, 8
    $region137: #{factorizable_network_forward_eval.1} parent=1 // pred_fallthru
      _
    // Predicated region
    $region138: #{factorizable_network_forward_eval.1} parent=1 // pred_check
      _
    $region139: #{factorizable_network_forward_eval.1} parent=1 // pred_check_branch
      %4428 = sbr.rel (0) target = $region141
    $region140: #{factorizable_network_forward_eval.1} parent=1 // pred_region
      _
    $region141: #{factorizable_network_forward_eval.1} parent=1 // pred_fallthru
      _
    // Predicated region
    $region142: #{factorizable_network_forward_eval.1} parent=1 // pred_check
      _
    $region143: #{factorizable_network_forward_eval.1} parent=1 // pred_check_branch
      %4430 = sbr.rel (0) target = $region145
    $region144: #{factorizable_network_forward_eval.1} parent=1 // pred_region
      %4432 = dma.done [#allocation3], 256
    $region145: #{factorizable_network_forward_eval.1} parent=1 // pred_fallthru
      _
    // Predicated region
    $region146: #{factorizable_network_forward_eval.1} parent=1 // pred_check
      _
    $region147: #{factorizable_network_forward_eval.1} parent=1 // pred_check_branch
      %4434 = sbr.rel (0) target = $region149
    $region148: #{factorizable_network_forward_eval.1} parent=1 // pred_region
      %4436 = dma.done [#allocation5], 256
    $region149: #{factorizable_network_forward_eval.1} parent=1 // pred_fallthru
      _
    // Predicated region
    $region150: #{factorizable_network_forward_eval.1} parent=1 // pred_check
      _
    $region151: #{factorizable_network_forward_eval.1} parent=1 // pred_check_branch
      %4438 = sbr.rel (0) target = $region153
    $region152: #{factorizable_network_forward_eval.1} parent=1 // pred_region
      _
    $region153: #{factorizable_network_forward_eval.1} parent=1 // pred_fallthru
      _
    %4439 = vsyncpa [#allocation3], 1
    %4440 = vsyncpa [#allocation5], 1

</llo_original>
